<compile_context>
chip_gen: v7x
topology: tpu7x:2x2x1
jax: 0.10.0
libtpu: 0.0.40
codegen_flags: <defaults>
</compile_context>

<pallas_src>
import functools
import math

import jax
import jax.numpy as jnp
from jax.experimental import pallas as pl
from jax.experimental.pallas import tpu as pltpu

D_MODEL = 128
NHEAD = 4
HEAD_DIM = D_MODEL // NHEAD
DIM_FF = 2048            # PyTorch TransformerEncoderLayer default
NUM_LAYERS = 2
INPUT_DIM = 3
NUM_CLASSES = 2
LN_EPS = 1e-5
CLS_PAD = 128            # lane-dense padded width for the classifier output


def _layernorm(x, g, b):
    mu = jnp.mean(x, axis=-1, keepdims=True)
    xc = x - mu
    var = jnp.mean(xc * xc, axis=-1, keepdims=True)
    return xc * jax.lax.rsqrt(var + LN_EPS) * g + b


# --------------------------------------------------------------- fused kernel
def _fused_kernel(x_ref, emb_w_ref, emb_b_ref,
                  in_proj_w_ref, in_proj_b_ref,
                  out_proj_w_ref, out_proj_b_ref,
                  lin1_w_ref, lin1_b_ref,
                  lin2_w_ref, lin2_b_ref,
                  ln1_g_ref, ln1_b_ref, ln2_g_ref, ln2_b_ref,
                  cls_w_ref, cls_b_ref,
                  out_ref, h_scratch, *, S, B):
    li = pl.program_id(0)
    f32 = jnp.float32
    bf16 = jnp.bfloat16

    # ---- first grid step only: embedding (M, in) @ (in, E) + b ----
    @pl.when(li == 0)
    def _():
        h_scratch[...] = jnp.dot(x_ref[...], emb_w_ref[...],
                                 preferred_element_type=f32) + emb_b_ref[...]

    h = h_scratch[...]                                          # (M, E) f32

    # -------------------- multi-head self-attention (post-norm) -------------
    # q columns of in_proj were pre-scaled by 1/sqrt(HEAD_DIM) at init time.
    qkv = jnp.dot(h.astype(bf16), in_proj_w_ref[...],
                  preferred_element_type=f32) + in_proj_b_ref[...]
    q = qkv[:, 0 * D_MODEL:1 * D_MODEL]
    k = qkv[:, 1 * D_MODEL:2 * D_MODEL]
    v = qkv[:, 2 * D_MODEL:3 * D_MODEL]

    out_proj_w = out_proj_w_ref[...]                            # (E, E) bf16

    # batch-major rows (r = b*S + s): attention is block-diagonal over
    # contiguous S-row blocks, so no (M, M) mask is needed.
    attn_blocks = []
    for b in range(B):
        rs = slice(b * S, (b + 1) * S)
        ab = jnp.zeros((S, D_MODEL), f32)
        for hh in range(NHEAD):                 # static lane slices, no transpose
            cs = slice(hh * HEAD_DIM, (hh + 1) * HEAD_DIM)
            qb = q[rs, cs].astype(bf16)         # (S, Dh)
            kb = k[rs, cs].astype(bf16)
            vb = v[rs, cs].astype(bf16)
            # scores: contract last dims (no materialized transpose)
            s = jax.lax.dot_general(qb, kb, (((1,), (1,)), ((), ())),
                                    preferred_element_type=f32)   # (S, S)
            m = jnp.max(s, axis=-1, keepdims=True)
            p = jnp.exp(s - m)
            denom = jnp.sum(p, axis=-1, keepdims=True)
            p = p * pl.reciprocal(denom, approx=True)              # EUP slot
            hb = jnp.dot(p.astype(bf16), vb,
                         preferred_element_type=f32)               # (S, Dh)
            # out_proj fused into the head loop: (S, Dh) @ (Dh, E) accumulate
            ab = ab + jnp.dot(hb.astype(bf16), out_proj_w[cs, :],
                              preferred_element_type=f32)
        attn_blocks.append(ab)
    a = jnp.concatenate(attn_blocks, axis=0) + out_proj_b_ref[...]  # (M, E)

    h = _layernorm(h + a, ln1_g_ref[...], ln1_b_ref[...])          # norm1(x+attn)

    # ------------------------------- feed-forward ---------------------------
    f = jnp.dot(h.astype(bf16), lin1_w_ref[...],
                preferred_element_type=f32) + lin1_b_ref[...]       # (M, FF)
    f = jnp.maximum(f, 0.0)
    f = jnp.dot(f.astype(bf16), lin2_w_ref[...],
                preferred_element_type=f32) + lin2_b_ref[...]       # (M, E)
    h = _layernorm(h + f, ln2_g_ref[...], ln2_b_ref[...])           # norm2(x+ff)

    h_scratch[...] = h

    # ---- last grid step: mean over dim=1 (batch) + classifier head ----
    @pl.when(li == NUM_LAYERS - 1)
    def _():
        # rows are batch-major, so the batch-mean is a sum of S-row blocks.
        mh = h[0:S, :]
        for b in range(1, B):
            mh = mh + h[b * S:(b + 1) * S, :]
        mh = mh * f32(1.0 / B)                                      # (S, E)
        out_ref[...] = jnp.dot(mh, cls_w_ref[...],
                               preferred_element_type=f32) + cls_b_ref[...]


# ------------------------------------------------------------------ parameters
def init_params(key):
    def dense(k, fan_in, fan_out):
        kw, kb = jax.random.split(k)
        bound = 1.0 / math.sqrt(fan_in)
        w = jax.random.uniform(kw, (fan_in, fan_out), jnp.float32, -bound, bound)
        b = jax.random.uniform(kb, (fan_out,), jnp.float32, -bound, bound)
        return w, b

    keys = jax.random.split(key, 2 + NUM_LAYERS)
    emb_w, emb_b = dense(keys[0], INPUT_DIM, D_MODEL)
    cls_w, cls_b = dense(keys[1], D_MODEL, NUM_CLASSES)

    # lane-dense padding for the classifier output (sliced back in the wrapper)
    cls_w_pad = jnp.zeros((D_MODEL, CLS_PAD), jnp.float32).at[:, :NUM_CLASSES].set(cls_w)
    cls_b_pad = jnp.zeros((CLS_PAD,), jnp.float32).at[:NUM_CLASSES].set(cls_b)

    scale = 1.0 / math.sqrt(HEAD_DIM)

    in_proj_w, in_proj_b = [], []
    out_proj_w, out_proj_b = [], []
    lin1_w, lin1_b = [], []
    lin2_w, lin2_b = [], []
    for li in range(NUM_LAYERS):
        lk = jax.random.split(keys[2 + li], 4)
        w, b = dense(lk[0], D_MODEL, 3 * D_MODEL)
        # fold the 1/sqrt(head_dim) attention scale into the q columns
        w = w.at[:, :D_MODEL].multiply(scale)
        b = b.at[:D_MODEL].multiply(scale)
        in_proj_w.append(w); in_proj_b.append(b)
        w, b = dense(lk[1], D_MODEL, D_MODEL);     out_proj_w.append(w); out_proj_b.append(b)
        w, b = dense(lk[2], D_MODEL, DIM_FF);      lin1_w.append(w);     lin1_b.append(b)
        w, b = dense(lk[3], DIM_FF, D_MODEL);      lin2_w.append(w);     lin2_b.append(b)

    L, E = NUM_LAYERS, D_MODEL
    return dict(
        emb_w=emb_w,                              # (in, E) f32
        emb_b=emb_b.reshape(1, E),
        cls_w=cls_w_pad,                          # (E, CLS_PAD) f32
        cls_b=cls_b_pad.reshape(1, CLS_PAD),
        # big matmul weights stored bf16 (halves HBM/VMEM traffic; f32 accum)
        in_proj_w=jnp.stack(in_proj_w).astype(jnp.bfloat16),   # (L, E, 3E)
        in_proj_b=jnp.stack(in_proj_b).reshape(L, 1, 3 * E),
        out_proj_w=jnp.stack(out_proj_w).astype(jnp.bfloat16), # (L, E, E)
        out_proj_b=jnp.stack(out_proj_b).reshape(L, 1, E),
        lin1_w=jnp.stack(lin1_w).astype(jnp.bfloat16),         # (L, E, FF)
        lin1_b=jnp.stack(lin1_b).reshape(L, 1, DIM_FF),
        lin2_w=jnp.stack(lin2_w).astype(jnp.bfloat16),         # (L, FF, E)
        lin2_b=jnp.stack(lin2_b).reshape(L, 1, E),
        ln1_g=jnp.ones((L, 1, E), jnp.float32),
        ln1_b=jnp.zeros((L, 1, E), jnp.float32),
        ln2_g=jnp.ones((L, 1, E), jnp.float32),
        ln2_b=jnp.zeros((L, 1, E), jnp.float32),
    )


# --------------------------------------------------------------------- forward
def transformer_classifier(x, params):
    S, B, _ = x.shape
    M = S * B
    # batch-major flattening (r = b*S + s) -> block-diagonal attention
    x2d = jnp.transpose(x, (1, 0, 2)).reshape(M, INPUT_DIM)

    def full_spec(a):
        # layer-invariant: whole array resident, same block every grid step
        return pl.BlockSpec(a.shape, lambda li, n=a.ndim: (0,) * n)

    def layer_spec(a):
        # stacked (L, ...) weights: one layer's slab per grid step
        return pl.BlockSpec((None,) + a.shape[1:],
                            lambda li, n=a.ndim - 1: (li,) + (0,) * n)

    grid_spec = pltpu.PrefetchScalarGridSpec(
        num_scalar_prefetch=0,
        grid=(NUM_LAYERS,),
        in_specs=[
            full_spec(x2d),
            full_spec(params["emb_w"]), full_spec(params["emb_b"]),
            layer_spec(params["in_proj_w"]), layer_spec(params["in_proj_b"]),
            layer_spec(params["out_proj_w"]), layer_spec(params["out_proj_b"]),
            layer_spec(params["lin1_w"]), layer_spec(params["lin1_b"]),
            layer_spec(params["lin2_w"]), layer_spec(params["lin2_b"]),
            layer_spec(params["ln1_g"]), layer_spec(params["ln1_b"]),
            layer_spec(params["ln2_g"]), layer_spec(params["ln2_b"]),
            full_spec(params["cls_w"]), full_spec(params["cls_b"]),
        ],
        out_specs=pl.BlockSpec((S, CLS_PAD), lambda li: (0, 0)),
        scratch_shapes=[pltpu.VMEM((M, D_MODEL), jnp.float32)],   # h carry
    )

    out = pl.pallas_call(
        functools.partial(_fused_kernel, S=S, B=B),
        out_shape=jax.ShapeDtypeStruct((S, CLS_PAD), jnp.float32),
        grid_spec=grid_spec,
        compiler_params=pltpu.CompilerParams(
            dimension_semantics=("arbitrary",),
            vmem_limit_bytes=32 * 1024 * 1024),
    )(x2d,
      params["emb_w"], params["emb_b"],
      params["in_proj_w"], params["in_proj_b"],
      params["out_proj_w"], params["out_proj_b"],
      params["lin1_w"], params["lin1_b"],
      params["lin2_w"], params["lin2_b"],
      params["ln1_g"], params["ln1_b"],
      params["ln2_g"], params["ln2_b"],
      params["cls_w"], params["cls_b"])
    # slice the lane-dense padded slab back to num_classes
    return out[:, :NUM_CLASSES]                                   # (S, C)


if __name__ == "__main__":
    key = jax.random.PRNGKey(0)
    k_param, k_x = jax.random.split(key)

    S, B = 8, 2                        # (seq, batch, input_dim) — seq-first layout
    x = jax.random.normal(k_x, (S, B, INPUT_DIM), jnp.float32)
    params = init_params(k_param)

    out = jax.jit(transformer_classifier)(x, params)
    out = jax.block_until_ready(out)
    assert out.shape == (S, NUM_CLASSES), out.shape
    assert bool(jnp.all(jnp.isfinite(out)))
    print("KERNEL_OK")
</pallas_src>

<mosaic_0001>
module attributes {stable_mosaic.version = 11 : i64} {
  func.func @_fused_kernel(%arg0: i32, %arg1: memref<16x3xf32, #tpu.memory_space<vmem>>, %arg2: memref<3x128xf32, #tpu.memory_space<vmem>>, %arg3: memref<1x128xf32, #tpu.memory_space<vmem>>, %arg4: memref<1x128x384xbf16, #tpu.memory_space<vmem>>, %arg5: memref<1x1x384xf32, #tpu.memory_space<vmem>>, %arg6: memref<1x128x128xbf16, #tpu.memory_space<vmem>>, %arg7: memref<1x1x128xf32, #tpu.memory_space<vmem>>, %arg8: memref<1x128x2048xbf16, #tpu.memory_space<vmem>>, %arg9: memref<1x1x2048xf32, #tpu.memory_space<vmem>>, %arg10: memref<1x2048x128xbf16, #tpu.memory_space<vmem>>, %arg11: memref<1x1x128xf32, #tpu.memory_space<vmem>>, %arg12: memref<1x1x128xf32, #tpu.memory_space<vmem>>, %arg13: memref<1x1x128xf32, #tpu.memory_space<vmem>>, %arg14: memref<1x1x128xf32, #tpu.memory_space<vmem>>, %arg15: memref<1x1x128xf32, #tpu.memory_space<vmem>>, %arg16: memref<128x128xf32, #tpu.memory_space<vmem>>, %arg17: memref<1x128xf32, #tpu.memory_space<vmem>>, %arg18: memref<8x128xf32, #tpu.memory_space<vmem>>, %arg19: memref<16x128xf32, #tpu.memory_space<vmem>>) attributes {dimension_semantics = [#tpu.dimension_semantics<arbitrary>], iteration_bounds = array<i64: 2>, scalar_prefetch = 0 : i64, scratch_operands = 1 : i64, tpu.core_type = #tpu.core_type<tc>, window_params = [{pipeline_mode = #tpu.pipeline_mode<synchronous>, transform_indices = @transform_0, window_bounds = array<i64: 16, 3>}, {pipeline_mode = #tpu.pipeline_mode<synchronous>, transform_indices = @transform_1, window_bounds = array<i64: 3, 128>}, {pipeline_mode = #tpu.pipeline_mode<synchronous>, transform_indices = @transform_2, window_bounds = array<i64: 1, 128>}, {transform_indices = @transform_3, window_bounds = array<i64: 1, 128, 384>}, {transform_indices = @transform_4, window_bounds = array<i64: 1, 1, 384>}, {transform_indices = @transform_5, window_bounds = array<i64: 1, 128, 128>}, {transform_indices = @transform_6, window_bounds = array<i64: 1, 1, 128>}, {transform_indices = @transform_7, window_bounds = array<i64: 1, 128, 2048>}, {transform_indices = @transform_8, window_bounds = array<i64: 1, 1, 2048>}, {transform_indices = @transform_9, window_bounds = array<i64: 1, 2048, 128>}, {transform_indices = @transform_10, window_bounds = array<i64: 1, 1, 128>}, {transform_indices = @transform_11, window_bounds = array<i64: 1, 1, 128>}, {transform_indices = @transform_12, window_bounds = array<i64: 1, 1, 128>}, {transform_indices = @transform_13, window_bounds = array<i64: 1, 1, 128>}, {transform_indices = @transform_14, window_bounds = array<i64: 1, 1, 128>}, {pipeline_mode = #tpu.pipeline_mode<synchronous>, transform_indices = @transform_15, window_bounds = array<i64: 128, 128>}, {pipeline_mode = #tpu.pipeline_mode<synchronous>, transform_indices = @transform_16, window_bounds = array<i64: 1, 128>}, {pipeline_mode = #tpu.pipeline_mode<synchronous>, transform_indices = @transform_17, window_bounds = array<i64: 8, 128>}]} {
    %c0_i32 = arith.constant 0 : i32
    %0 = arith.cmpi eq, %arg0, %c0_i32 : i32
    %1 = arith.extui %0 : i1 to i32
    %c0_i32_0 = arith.constant 0 : i32
    %2 = arith.cmpi ne, %1, %c0_i32_0 : i32
    scf.if %2 {
      %c0_96 = arith.constant 0 : index
      %c0_97 = arith.constant 0 : index
      %280 = vector.load %arg1[%c0_96, %c0_97] : memref<16x3xf32, #tpu.memory_space<vmem>>, vector<16x3xf32>
      %c0_98 = arith.constant 0 : index
      %c0_99 = arith.constant 0 : index
      %281 = vector.load %arg2[%c0_98, %c0_99] : memref<3x128xf32, #tpu.memory_space<vmem>>, vector<3x128xf32>
      %cst_100 = arith.constant dense<0.000000e+00> : vector<16x128xf32>
      %282 = tpu.matmul %280, %281, %cst_100 {dimension_numbers = #tpu.dot_dimension_numbers<[1], [0], [0], [1], [0, 0, 1, 1], [], []>} : vector<16x3xf32>, vector<3x128xf32>, vector<16x128xf32> -> vector<16x128xf32>
      %c0_101 = arith.constant 0 : index
      %c0_102 = arith.constant 0 : index
      %283 = vector.load %arg3[%c0_101, %c0_102] : memref<1x128xf32, #tpu.memory_space<vmem>>, vector<1x128xf32>
      %284 = vector.broadcast %283 : vector<1x128xf32> to vector<16x128xf32>
      %285 = arith.addf %282, %284 : vector<16x128xf32>
      %c0_103 = arith.constant 0 : index
      %c0_104 = arith.constant 0 : index
      %286 = vector.load %arg19[%c0_103, %c0_104] : memref<16x128xf32, #tpu.memory_space<vmem>>, vector<16x128xf32>
      tpu.vector_store %arg19[%c0_103, %c0_104], %285 {strides = array<i32>} : memref<16x128xf32, #tpu.memory_space<vmem>>, vector<16x128xf32>,
    } else {
    }
    %c0 = arith.constant 0 : index
    %c0_1 = arith.constant 0 : index
    %3 = vector.load %arg19[%c0, %c0_1] : memref<16x128xf32, #tpu.memory_space<vmem>>, vector<16x128xf32>
    %4 = arith.truncf %3 : vector<16x128xf32> to vector<16x128xbf16>
    %c0_2 = arith.constant 0 : index
    %c0_3 = arith.constant 0 : index
    %c0_4 = arith.constant 0 : index
    %5 = vector.load %arg4[%c0_2, %c0_3, %c0_4] : memref<1x128x384xbf16, #tpu.memory_space<vmem>>, vector<1x128x384xbf16>
    %6 = vector.shape_cast %5 : vector<1x128x384xbf16> to vector<128x384xbf16>
    %cst = arith.constant dense<0.000000e+00> : vector<16x384xf32>
    %7 = tpu.matmul %4, %6, %cst {dimension_numbers = #tpu.dot_dimension_numbers<[1], [0], [0], [1], [0, 0, 1, 1], [], []>} : vector<16x128xbf16>, vector<128x384xbf16>, vector<16x384xf32> -> vector<16x384xf32>
    %c0_5 = arith.constant 0 : index
    %c0_6 = arith.constant 0 : index
    %c0_7 = arith.constant 0 : index
    %8 = vector.load %arg5[%c0_5, %c0_6, %c0_7] : memref<1x1x384xf32, #tpu.memory_space<vmem>>, vector<1x1x384xf32>
    %9 = vector.shape_cast %8 : vector<1x1x384xf32> to vector<1x384xf32>
    %10 = vector.broadcast %9 : vector<1x384xf32> to vector<16x384xf32>
    %11 = arith.addf %7, %10 : vector<16x384xf32>
    %12 = vector.extract_strided_slice %11 {offsets = [0, 0], sizes = [16, 128], strides = [1, 1]} : vector<16x384xf32> to vector<16x128xf32>
    %13 = vector.extract_strided_slice %11 {offsets = [0, 128], sizes = [16, 128], strides = [1, 1]} : vector<16x384xf32> to vector<16x128xf32>
    %14 = vector.extract_strided_slice %11 {offsets = [0, 256], sizes = [16, 128], strides = [1, 1]} : vector<16x384xf32> to vector<16x128xf32>
    %c0_8 = arith.constant 0 : index
    %c0_9 = arith.constant 0 : index
    %c0_10 = arith.constant 0 : index
    %15 = vector.load %arg6[%c0_8, %c0_9, %c0_10] : memref<1x128x128xbf16, #tpu.memory_space<vmem>>, vector<1x128x128xbf16>
    %16 = vector.shape_cast %15 : vector<1x128x128xbf16> to vector<128x128xbf16>
    %cst_11 = arith.constant 0.000000e+00 : f32
    %17 = vector.broadcast %cst_11 : f32 to vector<8x128xf32>
    %18 = vector.extract_strided_slice %12 {offsets = [0, 0], sizes = [8, 32], strides = [1, 1]} : vector<16x128xf32> to vector<8x32xf32>
    %19 = arith.truncf %18 : vector<8x32xf32> to vector<8x32xbf16>
    %20 = vector.extract_strided_slice %13 {offsets = [0, 0], sizes = [8, 32], strides = [1, 1]} : vector<16x128xf32> to vector<8x32xf32>
    %21 = arith.truncf %20 : vector<8x32xf32> to vector<8x32xbf16>
    %22 = vector.extract_strided_slice %14 {offsets = [0, 0], sizes = [8, 32], strides = [1, 1]} : vector<16x128xf32> to vector<8x32xf32>
    %23 = arith.truncf %22 : vector<8x32xf32> to vector<8x32xbf16>
    %cst_12 = arith.constant dense<0.000000e+00> : vector<8x8xf32>
    %24 = tpu.matmul %19, %21, %cst_12 {dimension_numbers = #tpu.dot_dimension_numbers<[1], [1], [0], [0], [0, 0, 1, 0], [], []>} : vector<8x32xbf16>, vector<8x32xbf16>, vector<8x8xf32> -> vector<8x8xf32>
    %cst_13 = arith.constant dense<0xFF800000> : vector<8xf32>
    %25 = vector.multi_reduction <maximumf>, %24, %cst_13 [1] : vector<8x8xf32> to vector<8xf32>
    %26 = vector.shape_cast %25 : vector<8xf32> to vector<8x1xf32>
    %27 = vector.broadcast %26 : vector<8x1xf32> to vector<8x8xf32>
    %28 = arith.subf %24, %27 : vector<8x8xf32>
    %29 = math.exp %28 : vector<8x8xf32>
    %cst_14 = arith.constant dense<0.000000e+00> : vector<8xf32>
    %30 = vector.multi_reduction <add>, %29, %cst_14 [1] : vector<8x8xf32> to vector<8xf32>
    %31 = vector.shape_cast %30 : vector<8xf32> to vector<8x1xf32>
    %32 = tpu.reciprocal %31 {approx = true} : vector<8x1xf32> -> vector<8x1xf32>
    %33 = vector.broadcast %32 : vector<8x1xf32> to vector<8x8xf32>
    %34 = arith.mulf %29, %33 : vector<8x8xf32>
    %35 = arith.truncf %34 : vector<8x8xf32> to vector<8x8xbf16>
    %cst_15 = arith.constant dense<0.000000e+00> : vector<8x32xf32>
    %36 = tpu.matmul %35, %23, %cst_15 {dimension_numbers = #tpu.dot_dimension_numbers<[1], [0], [0], [1], [0, 0, 1, 1], [], []>} : vector<8x8xbf16>, vector<8x32xbf16>, vector<8x32xf32> -> vector<8x32xf32>
    %37 = arith.truncf %36 : vector<8x32xf32> to vector<8x32xbf16>
    %38 = vector.extract_strided_slice %16 {offsets = [0, 0], sizes = [32, 128], strides = [1, 1]} : vector<128x128xbf16> to vector<32x128xbf16>
    %cst_16 = arith.constant dense<0.000000e+00> : vector<8x128xf32>
    %39 = tpu.matmul %37, %38, %cst_16 {dimension_numbers = #tpu.dot_dimension_numbers<[1], [0], [0], [1], [0, 0, 1, 1], [], []>} : vector<8x32xbf16>, vector<32x128xbf16>, vector<8x128xf32> -> vector<8x128xf32>
    %40 = arith.addf %17, %39 : vector<8x128xf32>
    %41 = vector.extract_strided_slice %12 {offsets = [0, 32], sizes = [8, 32], strides = [1, 1]} : vector<16x128xf32> to vector<8x32xf32>
    %42 = arith.truncf %41 : vector<8x32xf32> to vector<8x32xbf16>
    %43 = vector.extract_strided_slice %13 {offsets = [0, 32], sizes = [8, 32], strides = [1, 1]} : vector<16x128xf32> to vector<8x32xf32>
    %44 = arith.truncf %43 : vector<8x32xf32> to vector<8x32xbf16>
    %45 = vector.extract_strided_slice %14 {offsets = [0, 32], sizes = [8, 32], strides = [1, 1]} : vector<16x128xf32> to vector<8x32xf32>
    %46 = arith.truncf %45 : vector<8x32xf32> to vector<8x32xbf16>
    %cst_17 = arith.constant dense<0.000000e+00> : vector<8x8xf32>
    %47 = tpu.matmul %42, %44, %cst_17 {dimension_numbers = #tpu.dot_dimension_numbers<[1], [1], [0], [0], [0, 0, 1, 0], [], []>} : vector<8x32xbf16>, vector<8x32xbf16>, vector<8x8xf32> -> vector<8x8xf32>
    %cst_18 = arith.constant dense<0xFF800000> : vector<8xf32>
    %48 = vector.multi_reduction <maximumf>, %47, %cst_18 [1] : vector<8x8xf32> to vector<8xf32>
    %49 = vector.shape_cast %48 : vector<8xf32> to vector<8x1xf32>
    %50 = vector.broadcast %49 : vector<8x1xf32> to vector<8x8xf32>
    %51 = arith.subf %47, %50 : vector<8x8xf32>
    %52 = math.exp %51 : vector<8x8xf32>
    %cst_19 = arith.constant dense<0.000000e+00> : vector<8xf32>
    %53 = vector.multi_reduction <add>, %52, %cst_19 [1] : vector<8x8xf32> to vector<8xf32>
    %54 = vector.shape_cast %53 : vector<8xf32> to vector<8x1xf32>
    %55 = tpu.reciprocal %54 {approx = true} : vector<8x1xf32> -> vector<8x1xf32>
    %56 = vector.broadcast %55 : vector<8x1xf32> to vector<8x8xf32>
    %57 = arith.mulf %52, %56 : vector<8x8xf32>
    %58 = arith.truncf %57 : vector<8x8xf32> to vector<8x8xbf16>
    %cst_20 = arith.constant dense<0.000000e+00> : vector<8x32xf32>
    %59 = tpu.matmul %58, %46, %cst_20 {dimension_numbers = #tpu.dot_dimension_numbers<[1], [0], [0], [1], [0, 0, 1, 1], [], []>} : vector<8x8xbf16>, vector<8x32xbf16>, vector<8x32xf32> -> vector<8x32xf32>
    %60 = arith.truncf %59 : vector<8x32xf32> to vector<8x32xbf16>
    %61 = vector.extract_strided_slice %16 {offsets = [32, 0], sizes = [32, 128], strides = [1, 1]} : vector<128x128xbf16> to vector<32x128xbf16>
    %cst_21 = arith.constant dense<0.000000e+00> : vector<8x128xf32>
    %62 = tpu.matmul %60, %61, %cst_21 {dimension_numbers = #tpu.dot_dimension_numbers<[1], [0], [0], [1], [0, 0, 1, 1], [], []>} : vector<8x32xbf16>, vector<32x128xbf16>, vector<8x128xf32> -> vector<8x128xf32>
    %63 = arith.addf %40, %62 : vector<8x128xf32>
    %64 = vector.extract_strided_slice %12 {offsets = [0, 64], sizes = [8, 32], strides = [1, 1]} : vector<16x128xf32> to vector<8x32xf32>
    %65 = arith.truncf %64 : vector<8x32xf32> to vector<8x32xbf16>
    %66 = vector.extract_strided_slice %13 {offsets = [0, 64], sizes = [8, 32], strides = [1, 1]} : vector<16x128xf32> to vector<8x32xf32>
    %67 = arith.truncf %66 : vector<8x32xf32> to vector<8x32xbf16>
    %68 = vector.extract_strided_slice %14 {offsets = [0, 64], sizes = [8, 32], strides = [1, 1]} : vector<16x128xf32> to vector<8x32xf32>
    %69 = arith.truncf %68 : vector<8x32xf32> to vector<8x32xbf16>
    %cst_22 = arith.constant dense<0.000000e+00> : vector<8x8xf32>
    %70 = tpu.matmul %65, %67, %cst_22 {dimension_numbers = #tpu.dot_dimension_numbers<[1], [1], [0], [0], [0, 0, 1, 0], [], []>} : vector<8x32xbf16>, vector<8x32xbf16>, vector<8x8xf32> -> vector<8x8xf32>
    %cst_23 = arith.constant dense<0xFF800000> : vector<8xf32>
    %71 = vector.multi_reduction <maximumf>, %70, %cst_23 [1] : vector<8x8xf32> to vector<8xf32>
    %72 = vector.shape_cast %71 : vector<8xf32> to vector<8x1xf32>
    %73 = vector.broadcast %72 : vector<8x1xf32> to vector<8x8xf32>
    %74 = arith.subf %70, %73 : vector<8x8xf32>
    %75 = math.exp %74 : vector<8x8xf32>
    %cst_24 = arith.constant dense<0.000000e+00> : vector<8xf32>
    %76 = vector.multi_reduction <add>, %75, %cst_24 [1] : vector<8x8xf32> to vector<8xf32>
    %77 = vector.shape_cast %76 : vector<8xf32> to vector<8x1xf32>
    %78 = tpu.reciprocal %77 {approx = true} : vector<8x1xf32> -> vector<8x1xf32>
    %79 = vector.broadcast %78 : vector<8x1xf32> to vector<8x8xf32>
    %80 = arith.mulf %75, %79 : vector<8x8xf32>
    %81 = arith.truncf %80 : vector<8x8xf32> to vector<8x8xbf16>
    %cst_25 = arith.constant dense<0.000000e+00> : vector<8x32xf32>
    %82 = tpu.matmul %81, %69, %cst_25 {dimension_numbers = #tpu.dot_dimension_numbers<[1], [0], [0], [1], [0, 0, 1, 1], [], []>} : vector<8x8xbf16>, vector<8x32xbf16>, vector<8x32xf32> -> vector<8x32xf32>
    %83 = arith.truncf %82 : vector<8x32xf32> to vector<8x32xbf16>
    %84 = vector.extract_strided_slice %16 {offsets = [64, 0], sizes = [32, 128], strides = [1, 1]} : vector<128x128xbf16> to vector<32x128xbf16>
    %cst_26 = arith.constant dense<0.000000e+00> : vector<8x128xf32>
    %85 = tpu.matmul %83, %84, %cst_26 {dimension_numbers = #tpu.dot_dimension_numbers<[1], [0], [0], [1], [0, 0, 1, 1], [], []>} : vector<8x32xbf16>, vector<32x128xbf16>, vector<8x128xf32> -> vector<8x128xf32>
    %86 = arith.addf %63, %85 : vector<8x128xf32>
    %87 = vector.extract_strided_slice %12 {offsets = [0, 96], sizes = [8, 32], strides = [1, 1]} : vector<16x128xf32> to vector<8x32xf32>
    %88 = arith.truncf %87 : vector<8x32xf32> to vector<8x32xbf16>
    %89 = vector.extract_strided_slice %13 {offsets = [0, 96], sizes = [8, 32], strides = [1, 1]} : vector<16x128xf32> to vector<8x32xf32>
    %90 = arith.truncf %89 : vector<8x32xf32> to vector<8x32xbf16>
    %91 = vector.extract_strided_slice %14 {offsets = [0, 96], sizes = [8, 32], strides = [1, 1]} : vector<16x128xf32> to vector<8x32xf32>
    %92 = arith.truncf %91 : vector<8x32xf32> to vector<8x32xbf16>
    %cst_27 = arith.constant dense<0.000000e+00> : vector<8x8xf32>
    %93 = tpu.matmul %88, %90, %cst_27 {dimension_numbers = #tpu.dot_dimension_numbers<[1], [1], [0], [0], [0, 0, 1, 0], [], []>} : vector<8x32xbf16>, vector<8x32xbf16>, vector<8x8xf32> -> vector<8x8xf32>
    %cst_28 = arith.constant dense<0xFF800000> : vector<8xf32>
    %94 = vector.multi_reduction <maximumf>, %93, %cst_28 [1] : vector<8x8xf32> to vector<8xf32>
    %95 = vector.shape_cast %94 : vector<8xf32> to vector<8x1xf32>
    %96 = vector.broadcast %95 : vector<8x1xf32> to vector<8x8xf32>
    %97 = arith.subf %93, %96 : vector<8x8xf32>
    %98 = math.exp %97 : vector<8x8xf32>
    %cst_29 = arith.constant dense<0.000000e+00> : vector<8xf32>
    %99 = vector.multi_reduction <add>, %98, %cst_29 [1] : vector<8x8xf32> to vector<8xf32>
    %100 = vector.shape_cast %99 : vector<8xf32> to vector<8x1xf32>
    %101 = tpu.reciprocal %100 {approx = true} : vector<8x1xf32> -> vector<8x1xf32>
    %102 = vector.broadcast %101 : vector<8x1xf32> to vector<8x8xf32>
    %103 = arith.mulf %98, %102 : vector<8x8xf32>
    %104 = arith.truncf %103 : vector<8x8xf32> to vector<8x8xbf16>
    %cst_30 = arith.constant dense<0.000000e+00> : vector<8x32xf32>
    %105 = tpu.matmul %104, %92, %cst_30 {dimension_numbers = #tpu.dot_dimension_numbers<[1], [0], [0], [1], [0, 0, 1, 1], [], []>} : vector<8x8xbf16>, vector<8x32xbf16>, vector<8x32xf32> -> vector<8x32xf32>
    %106 = arith.truncf %105 : vector<8x32xf32> to vector<8x32xbf16>
    %107 = vector.extract_strided_slice %16 {offsets = [96, 0], sizes = [32, 128], strides = [1, 1]} : vector<128x128xbf16> to vector<32x128xbf16>
    %cst_31 = arith.constant dense<0.000000e+00> : vector<8x128xf32>
    %108 = tpu.matmul %106, %107, %cst_31 {dimension_numbers = #tpu.dot_dimension_numbers<[1], [0], [0], [1], [0, 0, 1, 1], [], []>} : vector<8x32xbf16>, vector<32x128xbf16>, vector<8x128xf32> -> vector<8x128xf32>
    %109 = arith.addf %86, %108 : vector<8x128xf32>
    %cst_32 = arith.constant 0.000000e+00 : f32
    %110 = vector.broadcast %cst_32 : f32 to vector<8x128xf32>
    %111 = vector.extract_strided_slice %12 {offsets = [8, 0], sizes = [8, 32], strides = [1, 1]} : vector<16x128xf32> to vector<8x32xf32>
    %112 = arith.truncf %111 : vector<8x32xf32> to vector<8x32xbf16>
    %113 = vector.extract_strided_slice %13 {offsets = [8, 0], sizes = [8, 32], strides = [1, 1]} : vector<16x128xf32> to vector<8x32xf32>
    %114 = arith.truncf %113 : vector<8x32xf32> to vector<8x32xbf16>
    %115 = vector.extract_strided_slice %14 {offsets = [8, 0], sizes = [8, 32], strides = [1, 1]} : vector<16x128xf32> to vector<8x32xf32>
    %116 = arith.truncf %115 : vector<8x32xf32> to vector<8x32xbf16>
    %cst_33 = arith.constant dense<0.000000e+00> : vector<8x8xf32>
    %117 = tpu.matmul %112, %114, %cst_33 {dimension_numbers = #tpu.dot_dimension_numbers<[1], [1], [0], [0], [0, 0, 1, 0], [], []>} : vector<8x32xbf16>, vector<8x32xbf16>, vector<8x8xf32> -> vector<8x8xf32>
    %cst_34 = arith.constant dense<0xFF800000> : vector<8xf32>
    %118 = vector.multi_reduction <maximumf>, %117, %cst_34 [1] : vector<8x8xf32> to vector<8xf32>
    %119 = vector.shape_cast %118 : vector<8xf32> to vector<8x1xf32>
    %120 = vector.broadcast %119 : vector<8x1xf32> to vector<8x8xf32>
    %121 = arith.subf %117, %120 : vector<8x8xf32>
    %122 = math.exp %121 : vector<8x8xf32>
    %cst_35 = arith.constant dense<0.000000e+00> : vector<8xf32>
    %123 = vector.multi_reduction <add>, %122, %cst_35 [1] : vector<8x8xf32> to vector<8xf32>
    %124 = vector.shape_cast %123 : vector<8xf32> to vector<8x1xf32>
    %125 = tpu.reciprocal %124 {approx = true} : vector<8x1xf32> -> vector<8x1xf32>
    %126 = vector.broadcast %125 : vector<8x1xf32> to vector<8x8xf32>
    %127 = arith.mulf %122, %126 : vector<8x8xf32>
    %128 = arith.truncf %127 : vector<8x8xf32> to vector<8x8xbf16>
    %cst_36 = arith.constant dense<0.000000e+00> : vector<8x32xf32>
    %129 = tpu.matmul %128, %116, %cst_36 {dimension_numbers = #tpu.dot_dimension_numbers<[1], [0], [0], [1], [0, 0, 1, 1], [], []>} : vector<8x8xbf16>, vector<8x32xbf16>, vector<8x32xf32> -> vector<8x32xf32>
    %130 = arith.truncf %129 : vector<8x32xf32> to vector<8x32xbf16>
    %131 = vector.extract_strided_slice %16 {offsets = [0, 0], sizes = [32, 128], strides = [1, 1]} : vector<128x128xbf16> to vector<32x128xbf16>
    %cst_37 = arith.constant dense<0.000000e+00> : vector<8x128xf32>
    %132 = tpu.matmul %130, %131, %cst_37 {dimension_numbers = #tpu.dot_dimension_numbers<[1], [0], [0], [1], [0, 0, 1, 1], [], []>} : vector<8x32xbf16>, vector<32x128xbf16>, vector<8x128xf32> -> vector<8x128xf32>
    %133 = arith.addf %110, %132 : vector<8x128xf32>
    %134 = vector.extract_strided_slice %12 {offsets = [8, 32], sizes = [8, 32], strides = [1, 1]} : vector<16x128xf32> to vector<8x32xf32>
    %135 = arith.truncf %134 : vector<8x32xf32> to vector<8x32xbf16>
    %136 = vector.extract_strided_slice %13 {offsets = [8, 32], sizes = [8, 32], strides = [1, 1]} : vector<16x128xf32> to vector<8x32xf32>
    %137 = arith.truncf %136 : vector<8x32xf32> to vector<8x32xbf16>
    %138 = vector.extract_strided_slice %14 {offsets = [8, 32], sizes = [8, 32], strides = [1, 1]} : vector<16x128xf32> to vector<8x32xf32>
    %139 = arith.truncf %138 : vector<8x32xf32> to vector<8x32xbf16>
    %cst_38 = arith.constant dense<0.000000e+00> : vector<8x8xf32>
    %140 = tpu.matmul %135, %137, %cst_38 {dimension_numbers = #tpu.dot_dimension_numbers<[1], [1], [0], [0], [0, 0, 1, 0], [], []>} : vector<8x32xbf16>, vector<8x32xbf16>, vector<8x8xf32> -> vector<8x8xf32>
    %cst_39 = arith.constant dense<0xFF800000> : vector<8xf32>
    %141 = vector.multi_reduction <maximumf>, %140, %cst_39 [1] : vector<8x8xf32> to vector<8xf32>
    %142 = vector.shape_cast %141 : vector<8xf32> to vector<8x1xf32>
    %143 = vector.broadcast %142 : vector<8x1xf32> to vector<8x8xf32>
    %144 = arith.subf %140, %143 : vector<8x8xf32>
    %145 = math.exp %144 : vector<8x8xf32>
    %cst_40 = arith.constant dense<0.000000e+00> : vector<8xf32>
    %146 = vector.multi_reduction <add>, %145, %cst_40 [1] : vector<8x8xf32> to vector<8xf32>
    %147 = vector.shape_cast %146 : vector<8xf32> to vector<8x1xf32>
    %148 = tpu.reciprocal %147 {approx = true} : vector<8x1xf32> -> vector<8x1xf32>
    %149 = vector.broadcast %148 : vector<8x1xf32> to vector<8x8xf32>
    %150 = arith.mulf %145, %149 : vector<8x8xf32>
    %151 = arith.truncf %150 : vector<8x8xf32> to vector<8x8xbf16>
    %cst_41 = arith.constant dense<0.000000e+00> : vector<8x32xf32>
    %152 = tpu.matmul %151, %139, %cst_41 {dimension_numbers = #tpu.dot_dimension_numbers<[1], [0], [0], [1], [0, 0, 1, 1], [], []>} : vector<8x8xbf16>, vector<8x32xbf16>, vector<8x32xf32> -> vector<8x32xf32>
    %153 = arith.truncf %152 : vector<8x32xf32> to vector<8x32xbf16>
    %154 = vector.extract_strided_slice %16 {offsets = [32, 0], sizes = [32, 128], strides = [1, 1]} : vector<128x128xbf16> to vector<32x128xbf16>
    %cst_42 = arith.constant dense<0.000000e+00> : vector<8x128xf32>
    %155 = tpu.matmul %153, %154, %cst_42 {dimension_numbers = #tpu.dot_dimension_numbers<[1], [0], [0], [1], [0, 0, 1, 1], [], []>} : vector<8x32xbf16>, vector<32x128xbf16>, vector<8x128xf32> -> vector<8x128xf32>
    %156 = arith.addf %133, %155 : vector<8x128xf32>
    %157 = vector.extract_strided_slice %12 {offsets = [8, 64], sizes = [8, 32], strides = [1, 1]} : vector<16x128xf32> to vector<8x32xf32>
    %158 = arith.truncf %157 : vector<8x32xf32> to vector<8x32xbf16>
    %159 = vector.extract_strided_slice %13 {offsets = [8, 64], sizes = [8, 32], strides = [1, 1]} : vector<16x128xf32> to vector<8x32xf32>
    %160 = arith.truncf %159 : vector<8x32xf32> to vector<8x32xbf16>
    %161 = vector.extract_strided_slice %14 {offsets = [8, 64], sizes = [8, 32], strides = [1, 1]} : vector<16x128xf32> to vector<8x32xf32>
    %162 = arith.truncf %161 : vector<8x32xf32> to vector<8x32xbf16>
    %cst_43 = arith.constant dense<0.000000e+00> : vector<8x8xf32>
    %163 = tpu.matmul %158, %160, %cst_43 {dimension_numbers = #tpu.dot_dimension_numbers<[1], [1], [0], [0], [0, 0, 1, 0], [], []>} : vector<8x32xbf16>, vector<8x32xbf16>, vector<8x8xf32> -> vector<8x8xf32>
    %cst_44 = arith.constant dense<0xFF800000> : vector<8xf32>
    %164 = vector.multi_reduction <maximumf>, %163, %cst_44 [1] : vector<8x8xf32> to vector<8xf32>
    %165 = vector.shape_cast %164 : vector<8xf32> to vector<8x1xf32>
    %166 = vector.broadcast %165 : vector<8x1xf32> to vector<8x8xf32>
    %167 = arith.subf %163, %166 : vector<8x8xf32>
    %168 = math.exp %167 : vector<8x8xf32>
    %cst_45 = arith.constant dense<0.000000e+00> : vector<8xf32>
    %169 = vector.multi_reduction <add>, %168, %cst_45 [1] : vector<8x8xf32> to vector<8xf32>
    %170 = vector.shape_cast %169 : vector<8xf32> to vector<8x1xf32>
    %171 = tpu.reciprocal %170 {approx = true} : vector<8x1xf32> -> vector<8x1xf32>
    %172 = vector.broadcast %171 : vector<8x1xf32> to vector<8x8xf32>
    %173 = arith.mulf %168, %172 : vector<8x8xf32>
    %174 = arith.truncf %173 : vector<8x8xf32> to vector<8x8xbf16>
    %cst_46 = arith.constant dense<0.000000e+00> : vector<8x32xf32>
    %175 = tpu.matmul %174, %162, %cst_46 {dimension_numbers = #tpu.dot_dimension_numbers<[1], [0], [0], [1], [0, 0, 1, 1], [], []>} : vector<8x8xbf16>, vector<8x32xbf16>, vector<8x32xf32> -> vector<8x32xf32>
    %176 = arith.truncf %175 : vector<8x32xf32> to vector<8x32xbf16>
    %177 = vector.extract_strided_slice %16 {offsets = [64, 0], sizes = [32, 128], strides = [1, 1]} : vector<128x128xbf16> to vector<32x128xbf16>
    %cst_47 = arith.constant dense<0.000000e+00> : vector<8x128xf32>
    %178 = tpu.matmul %176, %177, %cst_47 {dimension_numbers = #tpu.dot_dimension_numbers<[1], [0], [0], [1], [0, 0, 1, 1], [], []>} : vector<8x32xbf16>, vector<32x128xbf16>, vector<8x128xf32> -> vector<8x128xf32>
    %179 = arith.addf %156, %178 : vector<8x128xf32>
    %180 = vector.extract_strided_slice %12 {offsets = [8, 96], sizes = [8, 32], strides = [1, 1]} : vector<16x128xf32> to vector<8x32xf32>
    %181 = arith.truncf %180 : vector<8x32xf32> to vector<8x32xbf16>
    %182 = vector.extract_strided_slice %13 {offsets = [8, 96], sizes = [8, 32], strides = [1, 1]} : vector<16x128xf32> to vector<8x32xf32>
    %183 = arith.truncf %182 : vector<8x32xf32> to vector<8x32xbf16>
    %184 = vector.extract_strided_slice %14 {offsets = [8, 96], sizes = [8, 32], strides = [1, 1]} : vector<16x128xf32> to vector<8x32xf32>
    %185 = arith.truncf %184 : vector<8x32xf32> to vector<8x32xbf16>
    %cst_48 = arith.constant dense<0.000000e+00> : vector<8x8xf32>
    %186 = tpu.matmul %181, %183, %cst_48 {dimension_numbers = #tpu.dot_dimension_numbers<[1], [1], [0], [0], [0, 0, 1, 0], [], []>} : vector<8x32xbf16>, vector<8x32xbf16>, vector<8x8xf32> -> vector<8x8xf32>
    %cst_49 = arith.constant dense<0xFF800000> : vector<8xf32>
    %187 = vector.multi_reduction <maximumf>, %186, %cst_49 [1] : vector<8x8xf32> to vector<8xf32>
    %188 = vector.shape_cast %187 : vector<8xf32> to vector<8x1xf32>
    %189 = vector.broadcast %188 : vector<8x1xf32> to vector<8x8xf32>
    %190 = arith.subf %186, %189 : vector<8x8xf32>
    %191 = math.exp %190 : vector<8x8xf32>
    %cst_50 = arith.constant dense<0.000000e+00> : vector<8xf32>
    %192 = vector.multi_reduction <add>, %191, %cst_50 [1] : vector<8x8xf32> to vector<8xf32>
    %193 = vector.shape_cast %192 : vector<8xf32> to vector<8x1xf32>
    %194 = tpu.reciprocal %193 {approx = true} : vector<8x1xf32> -> vector<8x1xf32>
    %195 = vector.broadcast %194 : vector<8x1xf32> to vector<8x8xf32>
    %196 = arith.mulf %191, %195 : vector<8x8xf32>
    %197 = arith.truncf %196 : vector<8x8xf32> to vector<8x8xbf16>
    %cst_51 = arith.constant dense<0.000000e+00> : vector<8x32xf32>
    %198 = tpu.matmul %197, %185, %cst_51 {dimension_numbers = #tpu.dot_dimension_numbers<[1], [0], [0], [1], [0, 0, 1, 1], [], []>} : vector<8x8xbf16>, vector<8x32xbf16>, vector<8x32xf32> -> vector<8x32xf32>
    %199 = arith.truncf %198 : vector<8x32xf32> to vector<8x32xbf16>
    %200 = vector.extract_strided_slice %16 {offsets = [96, 0], sizes = [32, 128], strides = [1, 1]} : vector<128x128xbf16> to vector<32x128xbf16>
    %cst_52 = arith.constant dense<0.000000e+00> : vector<8x128xf32>
    %201 = tpu.matmul %199, %200, %cst_52 {dimension_numbers = #tpu.dot_dimension_numbers<[1], [0], [0], [1], [0, 0, 1, 1], [], []>} : vector<8x32xbf16>, vector<32x128xbf16>, vector<8x128xf32> -> vector<8x128xf32>
    %202 = arith.addf %179, %201 : vector<8x128xf32>
    %203 = tpu.concatenate %109, %202 in 0 : vector<8x128xf32>, vector<8x128xf32> -> vector<16x128xf32>
    %c0_53 = arith.constant 0 : index
    %c0_54 = arith.constant 0 : index
    %c0_55 = arith.constant 0 : index
    %204 = vector.load %arg7[%c0_53, %c0_54, %c0_55] : memref<1x1x128xf32, #tpu.memory_space<vmem>>, vector<1x1x128xf32>
    %205 = vector.shape_cast %204 : vector<1x1x128xf32> to vector<1x128xf32>
    %206 = vector.broadcast %205 : vector<1x128xf32> to vector<16x128xf32>
    %207 = arith.addf %203, %206 : vector<16x128xf32>
    %208 = arith.addf %3, %207 : vector<16x128xf32>
    %c0_56 = arith.constant 0 : index
    %c0_57 = arith.constant 0 : index
    %c0_58 = arith.constant 0 : index
    %209 = vector.load %arg12[%c0_56, %c0_57, %c0_58] : memref<1x1x128xf32, #tpu.memory_space<vmem>>, vector<1x1x128xf32>
    %210 = vector.shape_cast %209 : vector<1x1x128xf32> to vector<1x128xf32>
    %c0_59 = arith.constant 0 : index
    %c0_60 = arith.constant 0 : index
    %c0_61 = arith.constant 0 : index
    %211 = vector.load %arg13[%c0_59, %c0_60, %c0_61] : memref<1x1x128xf32, #tpu.memory_space<vmem>>, vector<1x1x128xf32>
    %212 = vector.shape_cast %211 : vector<1x1x128xf32> to vector<1x128xf32>
    %cst_62 = arith.constant dense<0.000000e+00> : vector<16xf32>
    %213 = vector.multi_reduction <add>, %208, %cst_62 [1] : vector<16x128xf32> to vector<16xf32>
    %214 = vector.shape_cast %213 : vector<16xf32> to vector<16x1xf32>
    %cst_63 = arith.constant 1.280000e+02 : f32
    %215 = vector.broadcast %cst_63 : f32 to vector<16x1xf32>
    %216 = arith.divf %214, %215 : vector<16x1xf32>
    %217 = vector.broadcast %216 : vector<16x1xf32> to vector<16x128xf32>
    %218 = arith.subf %208, %217 : vector<16x128xf32>
    %219 = arith.mulf %218, %218 : vector<16x128xf32>
    %cst_64 = arith.constant dense<0.000000e+00> : vector<16xf32>
    %220 = vector.multi_reduction <add>, %219, %cst_64 [1] : vector<16x128xf32> to vector<16xf32>
    %221 = vector.shape_cast %220 : vector<16xf32> to vector<16x1xf32>
    %cst_65 = arith.constant 1.280000e+02 : f32
    %222 = vector.broadcast %cst_65 : f32 to vector<16x1xf32>
    %223 = arith.divf %221, %222 : vector<16x1xf32>
    %cst_66 = arith.constant 9.99999974E-6 : f32
    %224 = vector.broadcast %cst_66 : f32 to vector<16x1xf32>
    %225 = arith.addf %223, %224 : vector<16x1xf32>
    %226 = math.rsqrt %225 : vector<16x1xf32>
    %227 = vector.broadcast %226 : vector<16x1xf32> to vector<16x128xf32>
    %228 = arith.mulf %218, %227 : vector<16x128xf32>
    %229 = vector.broadcast %210 : vector<1x128xf32> to vector<16x128xf32>
    %230 = arith.mulf %228, %229 : vector<16x128xf32>
    %231 = vector.broadcast %212 : vector<1x128xf32> to vector<16x128xf32>
    %232 = arith.addf %230, %231 : vector<16x128xf32>
    %233 = arith.truncf %232 : vector<16x128xf32> to vector<16x128xbf16>
    %c0_67 = arith.constant 0 : index
    %c0_68 = arith.constant 0 : index
    %c0_69 = arith.constant 0 : index
    %234 = vector.load %arg8[%c0_67, %c0_68, %c0_69] : memref<1x128x2048xbf16, #tpu.memory_space<vmem>>, vector<1x128x2048xbf16>
    %235 = vector.shape_cast %234 : vector<1x128x2048xbf16> to vector<128x2048xbf16>
    %cst_70 = arith.constant dense<0.000000e+00> : vector<16x2048xf32>
    %236 = tpu.matmul %233, %235, %cst_70 {dimension_numbers = #tpu.dot_dimension_numbers<[1], [0], [0], [1], [0, 0, 1, 1], [], []>} : vector<16x128xbf16>, vector<128x2048xbf16>, vector<16x2048xf32> -> vector<16x2048xf32>
    %c0_71 = arith.constant 0 : index
    %c0_72 = arith.constant 0 : index
    %c0_73 = arith.constant 0 : index
    %237 = vector.load %arg9[%c0_71, %c0_72, %c0_73] : memref<1x1x2048xf32, #tpu.memory_space<vmem>>, vector<1x1x2048xf32>
    %238 = vector.shape_cast %237 : vector<1x1x2048xf32> to vector<1x2048xf32>
    %239 = vector.broadcast %238 : vector<1x2048xf32> to vector<16x2048xf32>
    %240 = arith.addf %236, %239 : vector<16x2048xf32>
    %cst_74 = arith.constant 0.000000e+00 : f32
    %241 = vector.broadcast %cst_74 : f32 to vector<16x2048xf32>
    %242 = arith.maximumf %240, %241 : vector<16x2048xf32>
    %243 = arith.truncf %242 : vector<16x2048xf32> to vector<16x2048xbf16>
    %c0_75 = arith.constant 0 : index
    %c0_76 = arith.constant 0 : index
    %c0_77 = arith.constant 0 : index
    %244 = vector.load %arg10[%c0_75, %c0_76, %c0_77] : memref<1x2048x128xbf16, #tpu.memory_space<vmem>>, vector<1x2048x128xbf16>
    %245 = vector.shape_cast %244 : vector<1x2048x128xbf16> to vector<2048x128xbf16>
    %cst_78 = arith.constant dense<0.000000e+00> : vector<16x128xf32>
    %246 = tpu.matmul %243, %245, %cst_78 {dimension_numbers = #tpu.dot_dimension_numbers<[1], [0], [0], [1], [0, 0, 1, 1], [], []>} : vector<16x2048xbf16>, vector<2048x128xbf16>, vector<16x128xf32> -> vector<16x128xf32>
    %c0_79 = arith.constant 0 : index
    %c0_80 = arith.constant 0 : index
    %c0_81 = arith.constant 0 : index
    %247 = vector.load %arg11[%c0_79, %c0_80, %c0_81] : memref<1x1x128xf32, #tpu.memory_space<vmem>>, vector<1x1x128xf32>
    %248 = vector.shape_cast %247 : vector<1x1x128xf32> to vector<1x128xf32>
    %249 = vector.broadcast %248 : vector<1x128xf32> to vector<16x128xf32>
    %250 = arith.addf %246, %249 : vector<16x128xf32>
    %251 = arith.addf %232, %250 : vector<16x128xf32>
    %c0_82 = arith.constant 0 : index
    %c0_83 = arith.constant 0 : index
    %c0_84 = arith.constant 0 : index
    %252 = vector.load %arg14[%c0_82, %c0_83, %c0_84] : memref<1x1x128xf32, #tpu.memory_space<vmem>>, vector<1x1x128xf32>
    %253 = vector.shape_cast %252 : vector<1x1x128xf32> to vector<1x128xf32>
    %c0_85 = arith.constant 0 : index
    %c0_86 = arith.constant 0 : index
    %c0_87 = arith.constant 0 : index
    %254 = vector.load %arg15[%c0_85, %c0_86, %c0_87] : memref<1x1x128xf32, #tpu.memory_space<vmem>>, vector<1x1x128xf32>
    %255 = vector.shape_cast %254 : vector<1x1x128xf32> to vector<1x128xf32>
    %cst_88 = arith.constant dense<0.000000e+00> : vector<16xf32>
    %256 = vector.multi_reduction <add>, %251, %cst_88 [1] : vector<16x128xf32> to vector<16xf32>
    %257 = vector.shape_cast %256 : vector<16xf32> to vector<16x1xf32>
    %cst_89 = arith.constant 1.280000e+02 : f32
    %258 = vector.broadcast %cst_89 : f32 to vector<16x1xf32>
    %259 = arith.divf %257, %258 : vector<16x1xf32>
    %260 = vector.broadcast %259 : vector<16x1xf32> to vector<16x128xf32>
    %261 = arith.subf %251, %260 : vector<16x128xf32>
    %262 = arith.mulf %261, %261 : vector<16x128xf32>
    %cst_90 = arith.constant dense<0.000000e+00> : vector<16xf32>
    %263 = vector.multi_reduction <add>, %262, %cst_90 [1] : vector<16x128xf32> to vector<16xf32>
    %264 = vector.shape_cast %263 : vector<16xf32> to vector<16x1xf32>
    %cst_91 = arith.constant 1.280000e+02 : f32
    %265 = vector.broadcast %cst_91 : f32 to vector<16x1xf32>
    %266 = arith.divf %264, %265 : vector<16x1xf32>
    %cst_92 = arith.constant 9.99999974E-6 : f32
    %267 = vector.broadcast %cst_92 : f32 to vector<16x1xf32>
    %268 = arith.addf %266, %267 : vector<16x1xf32>
    %269 = math.rsqrt %268 : vector<16x1xf32>
    %270 = vector.broadcast %269 : vector<16x1xf32> to vector<16x128xf32>
    %271 = arith.mulf %261, %270 : vector<16x128xf32>
    %272 = vector.broadcast %253 : vector<1x128xf32> to vector<16x128xf32>
    %273 = arith.mulf %271, %272 : vector<16x128xf32>
    %274 = vector.broadcast %255 : vector<1x128xf32> to vector<16x128xf32>
    %275 = arith.addf %273, %274 : vector<16x128xf32>
    %c0_93 = arith.constant 0 : index
    %c0_94 = arith.constant 0 : index
    %276 = vector.load %arg19[%c0_93, %c0_94] : memref<16x128xf32, #tpu.memory_space<vmem>>, vector<16x128xf32>
    tpu.vector_store %arg19[%c0_93, %c0_94], %275 {strides = array<i32>} : memref<16x128xf32, #tpu.memory_space<vmem>>, vector<16x128xf32>,
    %c1_i32 = arith.constant 1 : i32
    %277 = arith.cmpi eq, %arg0, %c1_i32 : i32
    %278 = arith.extui %277 : i1 to i32
    %c0_i32_95 = arith.constant 0 : i32
    %279 = arith.cmpi ne, %278, %c0_i32_95 : i32
    scf.if %279 {
      %280 = vector.extract_strided_slice %275 {offsets = [0, 0], sizes = [8, 128], strides = [1, 1]} : vector<16x128xf32> to vector<8x128xf32>
      %281 = vector.extract_strided_slice %275 {offsets = [8, 0], sizes = [8, 128], strides = [1, 1]} : vector<16x128xf32> to vector<8x128xf32>
      %282 = arith.addf %280, %281 : vector<8x128xf32>
      %cst_96 = arith.constant 5.000000e-01 : f32
      %283 = vector.broadcast %cst_96 : f32 to vector<8x128xf32>
      %284 = arith.mulf %282, %283 : vector<8x128xf32>
      %c0_97 = arith.constant 0 : index
      %c0_98 = arith.constant 0 : index
      %285 = vector.load %arg16[%c0_97, %c0_98] : memref<128x128xf32, #tpu.memory_space<vmem>>, vector<128x128xf32>
      %cst_99 = arith.constant dense<0.000000e+00> : vector<8x128xf32>
      %286 = tpu.matmul %284, %285, %cst_99 {dimension_numbers = #tpu.dot_dimension_numbers<[1], [0], [0], [1], [0, 0, 1, 1], [], []>} : vector<8x128xf32>, vector<128x128xf32>, vector<8x128xf32> -> vector<8x128xf32>
      %c0_100 = arith.constant 0 : index
      %c0_101 = arith.constant 0 : index
      %287 = vector.load %arg17[%c0_100, %c0_101] : memref<1x128xf32, #tpu.memory_space<vmem>>, vector<1x128xf32>
      %288 = vector.broadcast %287 : vector<1x128xf32> to vector<8x128xf32>
      %289 = arith.addf %286, %288 : vector<8x128xf32>
      %c0_102 = arith.constant 0 : index
      %c0_103 = arith.constant 0 : index
      %290 = vector.load %arg18[%c0_102, %c0_103] : memref<8x128xf32, #tpu.memory_space<vmem>>, vector<8x128xf32>
      tpu.vector_store %arg18[%c0_102, %c0_103], %289 {strides = array<i32>} : memref<8x128xf32, #tpu.memory_space<vmem>>, vector<8x128xf32>,
    } else {
    }
    return
  }
  func.func @transform_0(%arg0: i32) -> (i32, i32) {
    %c0_i32 = arith.constant 0 : i32
    %c0_i32_0 = arith.constant 0 : i32
    %c0_i32_1 = arith.constant 0 : i32
    return %c0_i32, %c0_i32_0 : i32, i32
  }
  func.func @transform_1(%arg0: i32) -> (i32, i32) {
    %c0_i32 = arith.constant 0 : i32
    %c0_i32_0 = arith.constant 0 : i32
    %c0_i32_1 = arith.constant 0 : i32
    return %c0_i32, %c0_i32_0 : i32, i32
  }
  func.func @transform_2(%arg0: i32) -> (i32, i32) {
    %c0_i32 = arith.constant 0 : i32
    %c0_i32_0 = arith.constant 0 : i32
    %c0_i32_1 = arith.constant 0 : i32
    return %c0_i32, %c0_i32_0 : i32, i32
  }
  func.func @transform_3(%arg0: i32) -> (i32, i32, i32) {
    %c0_i32 = arith.constant 0 : i32
    %c0_i32_0 = arith.constant 0 : i32
    %c0_i32_1 = arith.constant 0 : i32
    return %arg0, %c0_i32, %c0_i32_0 : i32, i32, i32
  }
  func.func @transform_4(%arg0: i32) -> (i32, i32, i32) {
    %c0_i32 = arith.constant 0 : i32
    %c0_i32_0 = arith.constant 0 : i32
    %c0_i32_1 = arith.constant 0 : i32
    return %arg0, %c0_i32, %c0_i32_0 : i32, i32, i32
  }
  func.func @transform_5(%arg0: i32) -> (i32, i32, i32) {
    %c0_i32 = arith.constant 0 : i32
    %c0_i32_0 = arith.constant 0 : i32
    %c0_i32_1 = arith.constant 0 : i32
    return %arg0, %c0_i32, %c0_i32_0 : i32, i32, i32
  }
  func.func @transform_6(%arg0: i32) -> (i32, i32, i32) {
    %c0_i32 = arith.constant 0 : i32
    %c0_i32_0 = arith.constant 0 : i32
    %c0_i32_1 = arith.constant 0 : i32
    return %arg0, %c0_i32, %c0_i32_0 : i32, i32, i32
  }
  func.func @transform_7(%arg0: i32) -> (i32, i32, i32) {
    %c0_i32 = arith.constant 0 : i32
    %c0_i32_0 = arith.constant 0 : i32
    %c0_i32_1 = arith.constant 0 : i32
    return %arg0, %c0_i32, %c0_i32_0 : i32, i32, i32
  }
  func.func @transform_8(%arg0: i32) -> (i32, i32, i32) {
    %c0_i32 = arith.constant 0 : i32
    %c0_i32_0 = arith.constant 0 : i32
    %c0_i32_1 = arith.constant 0 : i32
    return %arg0, %c0_i32, %c0_i32_0 : i32, i32, i32
  }
  func.func @transform_9(%arg0: i32) -> (i32, i32, i32) {
    %c0_i32 = arith.constant 0 : i32
    %c0_i32_0 = arith.constant 0 : i32
    %c0_i32_1 = arith.constant 0 : i32
    return %arg0, %c0_i32, %c0_i32_0 : i32, i32, i32
  }
  func.func @transform_10(%arg0: i32) -> (i32, i32, i32) {
    %c0_i32 = arith.constant 0 : i32
    %c0_i32_0 = arith.constant 0 : i32
    %c0_i32_1 = arith.constant 0 : i32
    return %arg0, %c0_i32, %c0_i32_0 : i32, i32, i32
  }
  func.func @transform_11(%arg0: i32) -> (i32, i32, i32) {
    %c0_i32 = arith.constant 0 : i32
    %c0_i32_0 = arith.constant 0 : i32
    %c0_i32_1 = arith.constant 0 : i32
    return %arg0, %c0_i32, %c0_i32_0 : i32, i32, i32
  }
  func.func @transform_12(%arg0: i32) -> (i32, i32, i32) {
    %c0_i32 = arith.constant 0 : i32
    %c0_i32_0 = arith.constant 0 : i32
    %c0_i32_1 = arith.constant 0 : i32
    return %arg0, %c0_i32, %c0_i32_0 : i32, i32, i32
  }
  func.func @transform_13(%arg0: i32) -> (i32, i32, i32) {
    %c0_i32 = arith.constant 0 : i32
    %c0_i32_0 = arith.constant 0 : i32
    %c0_i32_1 = arith.constant 0 : i32
    return %arg0, %c0_i32, %c0_i32_0 : i32, i32, i32
  }
  func.func @transform_14(%arg0: i32) -> (i32, i32, i32) {
    %c0_i32 = arith.constant 0 : i32
    %c0_i32_0 = arith.constant 0 : i32
    %c0_i32_1 = arith.constant 0 : i32
    return %arg0, %c0_i32, %c0_i32_0 : i32, i32, i32
  }
  func.func @transform_15(%arg0: i32) -> (i32, i32) {
    %c0_i32 = arith.constant 0 : i32
    %c0_i32_0 = arith.constant 0 : i32
    %c0_i32_1 = arith.constant 0 : i32
    return %c0_i32, %c0_i32_0 : i32, i32
  }
  func.func @transform_16(%arg0: i32) -> (i32, i32) {
    %c0_i32 = arith.constant 0 : i32
    %c0_i32_0 = arith.constant 0 : i32
    %c0_i32_1 = arith.constant 0 : i32
    return %c0_i32, %c0_i32_0 : i32, i32
  }
  func.func @transform_17(%arg0: i32) -> (i32, i32) {
    %c0_i32 = arith.constant 0 : i32
    %c0_i32_0 = arith.constant 0 : i32
    %c0_i32_1 = arith.constant 0 : i32
    return %c0_i32, %c0_i32_0 : i32, i32
  }
}

</mosaic_0001>

<llo_original>
// kernel: transformer_classifier.1
$region0: #{transformer_classifier.1}
  #allocation0 [shape = 'u32[]', space=smem, size = 0x4, offset = 0x4, fixed_abs, tag = 'smem constant byte address 0x4 - core index']
  #allocation1 [shape = 'u32[144,128]{1,0:T(1,128)}', space=vmem, size = 0x12000, scoped, tag = 'internal scratch']
  #allocation2 [shape = 'f32[16,128]{1,0:T(8,128)}', space=vmem, size = 0x2000, scoped, tag = 'scratch operand']
  %s0 = inlined_call_operand.vmem [shape: f32[16,3], index: 0, kind: input, shape index: {}]
  %s1 = inlined_call_operand.vmem [shape: f32[3,128], index: 1, kind: input, shape index: {}]
  %s2 = inlined_call_operand.vmem [shape: f32[1,128], index: 2, kind: input, shape index: {}]
  %s3 = inlined_call_operand.hbm [shape: bf16[2,128,384], index: 3, kind: input, shape index: {}]
  %s4 = inlined_call_operand.vmem [shape: f32[2,1,384], index: 4, kind: input, shape index: {}]
  %s5 = inlined_call_operand.hbm [shape: bf16[2,128,128], index: 5, kind: input, shape index: {}]
  %s6 = inlined_call_operand.vmem [shape: f32[2,1,128], index: 6, kind: input, shape index: {}]
  %s7 = inlined_call_operand.hbm [shape: bf16[2,128,2048], index: 7, kind: input, shape index: {}]
  %s8 = inlined_call_operand.vmem [shape: f32[2,1,2048], index: 8, kind: input, shape index: {}]
  %s9 = inlined_call_operand.hbm [shape: bf16[2,2048,128], index: 9, kind: input, shape index: {}]
  %s10 = inlined_call_operand.vmem [shape: f32[2,1,128], index: 10, kind: input, shape index: {}]
  %s11 = inlined_call_operand.vmem [shape: f32[2,1,128], index: 11, kind: input, shape index: {}]
  %s12 = inlined_call_operand.vmem [shape: f32[2,1,128], index: 12, kind: input, shape index: {}]
  %s13 = inlined_call_operand.vmem [shape: f32[2,1,128], index: 13, kind: input, shape index: {}]
  %s14 = inlined_call_operand.vmem [shape: f32[2,1,128], index: 14, kind: input, shape index: {}]
  %s15 = inlined_call_operand.hbm [shape: f32[128,128], index: 15, kind: input, shape index: {}]
  %s16 = inlined_call_operand.vmem [shape: f32[1,128], index: 16, kind: input, shape index: {}]
  %s17 = inlined_call_operand.vmem [shape: f32[8,128], index: 17, kind: output, shape index: {}]
  %s18 = sld [smem:[#allocation0]]
  $region129: #{transformer_classifier.1} parent=0
    _
  %s20 = ssub.s32 1, %s18
  %s21 = scalar_select 0, %s20, %s18
  $region1: #{transformer_classifier.1} parent=0
    #allocation3 [shape = 'u8[196608]{0}', space=vmem, size = 0x30000, scoped, tag = 'input window, operand 3']
    #allocation4 [shape = 's32[2]{0}', space=sflag, size = 0x8, scoped, tag = 'scoped memory for transformer_classifier.1']
    #allocation5 [shape = 'u8[65536]{0}', space=vmem, size = 0x10000, scoped, tag = 'input window, operand 5']
    #allocation6 [shape = 's32[2]{0}', space=sflag, size = 0x8, scoped, tag = 'scoped memory for transformer_classifier.1']
    #allocation7 [shape = 'u8[1048576]{0}', space=vmem, size = 0x100000, scoped, tag = 'input window, operand 7']
    #allocation8 [shape = 'u8[1048576]{0}', space=vmem, size = 0x100000, scoped, tag = 'input window, operand 9']
    #allocation9 [shape = 's32[2]{0}', space=sflag, size = 0x8, scoped, tag = 'scoped memory for transformer_classifier.1']
    #allocation10 [shape = 'u8[65536]{0}', space=vmem, size = 0x10000, scoped, tag = 'input window, operand 15, single buffered']
    %22 = vsyncpa [#allocation4], 0
    %s23 = scalar_lea.sflag [#allocation4], 1
    %24 = vsyncpa %s23, 0
    %25 = vsyncpa [#allocation6], 0
    %s26 = scalar_lea.sflag [#allocation6], 1
    %27 = vsyncpa %s26, 0
    %28 = vsyncpa [#allocation9], 0
    %s29 = scalar_lea.sflag [#allocation9], 1
    %30 = vsyncpa %s29, 0
    loop: start=0, step=1, limit=4
    $region2: #{transformer_classifier.1} parent=1 // loop_pre_header
      _
    $region3: #{transformer_classifier.1} parent=1 // loop_header
      %s32 = sphi 0, %s36
      %p33 = scmp.ge.s32.totalorder %s32, 4
      %s40 = sphi 0, %s40
      %s42 = sphi 0, %s40
      %s43 = sphi 0, %s42
      %s57 = sphi 0, %s43
      %s61 = sphi 0, %s61
      %s63 = sphi 0, %s61
      %s64 = sphi 0, %s63
      %s78 = sphi 0, %s64
      %s82 = sphi 0, %s82
      %s84 = sphi 0, %s82
      %s85 = sphi 0, %s84
      %s99 = sphi 0, %s85
      %s105 = sphi 0, %s107
      %s108 = sphi 0, %s105
      %s109 = sphi 0, %s108
      %s125 = sphi 0, %s109
      %s131 = sphi 0, %s133
      %s134 = sphi 0, %s131
      %s135 = sphi 0, %s134
      %s151 = sphi 0, %s135
      %s157 = sphi 0, %s159
      %s160 = sphi 0, %s157
      %s161 = sphi 0, %s160
      %s177 = sphi 0, %s161
      %s183 = sphi 0, %s185
      %s186 = sphi 0, %s183
      %s187 = sphi 0, %s186
      %s203 = sphi 0, %s187
      %s209 = sphi 0, %s211
      %s212 = sphi 0, %s209
      %s213 = sphi 0, %s212
      %s229 = sphi 0, %s213
      %s235 = sphi 0, %s237
      %s238 = sphi 0, %s235
      %s239 = sphi 0, %s238
      %s255 = sphi 0, %s239
      %s261 = sphi 0, %s263
      %s264 = sphi 0, %s261
      %s265 = sphi 0, %s264
      %s281 = sphi 0, %s265
      %s287 = sphi 0, %s289
      %s290 = sphi 0, %s287
      %s291 = sphi 0, %s290
      %s307 = sphi 0, %s291
      %s313 = sphi 0, %s315
      %s316 = sphi 0, %s313
      %s317 = sphi 0, %s316
      %s333 = sphi 0, %s317
      %s339 = sphi 0, %s341
      %s342 = sphi 0, %s339
      %s343 = sphi 0, %s342
      %s359 = sphi 0, %s343
      %s365 = sphi 0, %s367
      %s368 = sphi 0, %s365
      %s369 = sphi 0, %s368
      %s385 = sphi 0, %s369
      %s391 = sphi 0, %s393
      %s394 = sphi 0, %s391
      %s395 = sphi 0, %s394
      %s411 = sphi 0, %s395
      %s415 = sphi 0, %s415
      %s417 = sphi 0, %s415
      %s418 = sphi 0, %s417
      %s432 = sphi 0, %s418
      %s436 = sphi 0, %s436
      %s438 = sphi 0, %s436
      %s439 = sphi 0, %s438
      %s453 = sphi 0, %s439
      %s457 = sphi 0, %s457
      %s459 = sphi 0, %s457
      %s460 = sphi 0, %s459
      %s474 = sphi 0, %s460
    $region4: #{transformer_classifier.1} parent=1 // loop_header_branch
      %35 = sbr.rel (%p33) target = $region8
    $region5: #{transformer_classifier.1} parent=1 // loop_body
      %s37 = ssub.s32 %s32, 1
      %s38 = ssub.s32 %s32, 2
      %s39 = sadd.s32 %s32, 1
      %s41 = sadd.s32 %s40, 1
      %p44 = scmp.eq.s32.totalorder %s32, 1
      %p45 = scmp.ne.s32.totalorder %s40, %s42
      %p46 = scmp.eq.s32.totalorder %s32, 0
      %p47 = por %p45, %p46
      %p48 = scmp.ne.s32.totalorder %s40, %s42
      %p49 = scmp.eq.s32.totalorder %s37, 1
      %p50 = por %p48, %p49
      %p51 = scmp.ne.s32.totalorder %s42, %s43
      %p52 = scmp.eq.s32.totalorder %s37, 0
      %p53 = por %p51, %p52
      %p54 = scmp.ne.s32.totalorder %s42, %s43
      %p55 = scmp.eq.s32.totalorder %s38, 1
      %p56 = por %p54, %p55
      %p58 = scmp.ne.s32.totalorder %s43, %s57
      %p59 = scmp.eq.s32.totalorder %s38, 0
      %p60 = por %p58, %p59
      %s62 = sadd.s32 %s61, 1
      %p65 = scmp.eq.s32.totalorder %s32, 1
      %p66 = scmp.ne.s32.totalorder %s61, %s63
      %p67 = scmp.eq.s32.totalorder %s32, 0
      %p68 = por %p66, %p67
      %p69 = scmp.ne.s32.totalorder %s61, %s63
      %p70 = scmp.eq.s32.totalorder %s37, 1
      %p71 = por %p69, %p70
      %p72 = scmp.ne.s32.totalorder %s63, %s64
      %p73 = scmp.eq.s32.totalorder %s37, 0
      %p74 = por %p72, %p73
      %p75 = scmp.ne.s32.totalorder %s63, %s64
      %p76 = scmp.eq.s32.totalorder %s38, 1
      %p77 = por %p75, %p76
      %p79 = scmp.ne.s32.totalorder %s64, %s78
      %p80 = scmp.eq.s32.totalorder %s38, 0
      %p81 = por %p79, %p80
      %s83 = sadd.s32 %s82, 1
      %p86 = scmp.eq.s32.totalorder %s32, 1
      %p87 = scmp.ne.s32.totalorder %s82, %s84
      %p88 = scmp.eq.s32.totalorder %s32, 0
      %p89 = por %p87, %p88
      %p90 = scmp.ne.s32.totalorder %s82, %s84
      %p91 = scmp.eq.s32.totalorder %s37, 1
      %p92 = por %p90, %p91
      %p93 = scmp.ne.s32.totalorder %s84, %s85
      %p94 = scmp.eq.s32.totalorder %s37, 0
      %p95 = por %p93, %p94
      %p96 = scmp.ne.s32.totalorder %s84, %s85
      %p97 = scmp.eq.s32.totalorder %s38, 1
      %p98 = por %p96, %p97
      %p100 = scmp.ne.s32.totalorder %s85, %s99
      %p101 = scmp.eq.s32.totalorder %s38, 0
      %p102 = por %p100, %p101
      %s103 = ssub.s32 %s32, %s39
      %p104 = scmp.eq.s32.totalorder %s103, 0
      %s106 = sadd.s32 %s105, 1
      %s107 = scalar_select %p104, %s105, %s106
      %p110 = pneg %p104
      %p111 = scmp.eq.s32.totalorder %s32, 1
      %p112 = por %p110, %p111
      %p113 = scmp.ne.s32.totalorder %s105, %s108
      %p114 = scmp.eq.s32.totalorder %s32, 0
      %p115 = por %p113, %p114
      %p116 = scmp.ne.s32.totalorder %s105, %s108
      %p117 = scmp.eq.s32.totalorder %s37, 1
      %p118 = por %p116, %p117
      %p119 = scmp.ne.s32.totalorder %s108, %s109
      %p120 = scmp.eq.s32.totalorder %s37, 0
      %p121 = por %p119, %p120
      %p122 = scmp.ne.s32.totalorder %s108, %s109
      %p123 = scmp.eq.s32.totalorder %s38, 1
      %p124 = por %p122, %p123
      %p126 = scmp.ne.s32.totalorder %s109, %s125
      %p127 = scmp.eq.s32.totalorder %s38, 0
      %p128 = por %p126, %p127
      %s129 = ssub.s32 %s32, %s39
      %p130 = scmp.eq.s32.totalorder %s129, 0
      %s132 = sadd.s32 %s131, 1
      %s133 = scalar_select %p130, %s131, %s132
      %p136 = pneg %p130
      %p137 = scmp.eq.s32.totalorder %s32, 1
      %p138 = por %p136, %p137
      %p139 = scmp.ne.s32.totalorder %s131, %s134
      %p140 = scmp.eq.s32.totalorder %s32, 0
      %p141 = por %p139, %p140
      %p142 = scmp.ne.s32.totalorder %s131, %s134
      %p143 = scmp.eq.s32.totalorder %s37, 1
      %p144 = por %p142, %p143
      %p145 = scmp.ne.s32.totalorder %s134, %s135
      %p146 = scmp.eq.s32.totalorder %s37, 0
      %p147 = por %p145, %p146
      %p148 = scmp.ne.s32.totalorder %s134, %s135
      %p149 = scmp.eq.s32.totalorder %s38, 1
      %p150 = por %p148, %p149
      %p152 = scmp.ne.s32.totalorder %s135, %s151
      %p153 = scmp.eq.s32.totalorder %s38, 0
      %p154 = por %p152, %p153
      %s155 = ssub.s32 %s32, %s39
      %p156 = scmp.eq.s32.totalorder %s155, 0
      %s158 = sadd.s32 %s157, 1
      %s159 = scalar_select %p156, %s157, %s158
      %p162 = pneg %p156
      %p163 = scmp.eq.s32.totalorder %s32, 1
      %p164 = por %p162, %p163
      %p165 = scmp.ne.s32.totalorder %s157, %s160
      %p166 = scmp.eq.s32.totalorder %s32, 0
      %p167 = por %p165, %p166
      %p168 = scmp.ne.s32.totalorder %s157, %s160
      %p169 = scmp.eq.s32.totalorder %s37, 1
      %p170 = por %p168, %p169
      %p171 = scmp.ne.s32.totalorder %s160, %s161
      %p172 = scmp.eq.s32.totalorder %s37, 0
      %p173 = por %p171, %p172
      %p174 = scmp.ne.s32.totalorder %s160, %s161
      %p175 = scmp.eq.s32.totalorder %s38, 1
      %p176 = por %p174, %p175
      %p178 = scmp.ne.s32.totalorder %s161, %s177
      %p179 = scmp.eq.s32.totalorder %s38, 0
      %p180 = por %p178, %p179
      %s181 = ssub.s32 %s32, %s39
      %p182 = scmp.eq.s32.totalorder %s181, 0
      %s184 = sadd.s32 %s183, 1
      %s185 = scalar_select %p182, %s183, %s184
      %p188 = pneg %p182
      %p189 = scmp.eq.s32.totalorder %s32, 1
      %p190 = por %p188, %p189
      %p191 = scmp.ne.s32.totalorder %s183, %s186
      %p192 = scmp.eq.s32.totalorder %s32, 0
      %p193 = por %p191, %p192
      %p194 = scmp.ne.s32.totalorder %s183, %s186
      %p195 = scmp.eq.s32.totalorder %s37, 1
      %p196 = por %p194, %p195
      %p197 = scmp.ne.s32.totalorder %s186, %s187
      %p198 = scmp.eq.s32.totalorder %s37, 0
      %p199 = por %p197, %p198
      %p200 = scmp.ne.s32.totalorder %s186, %s187
      %p201 = scmp.eq.s32.totalorder %s38, 1
      %p202 = por %p200, %p201
      %p204 = scmp.ne.s32.totalorder %s187, %s203
      %p205 = scmp.eq.s32.totalorder %s38, 0
      %p206 = por %p204, %p205
      %s207 = ssub.s32 %s32, %s39
      %p208 = scmp.eq.s32.totalorder %s207, 0
      %s210 = sadd.s32 %s209, 1
      %s211 = scalar_select %p208, %s209, %s210
      %p214 = pneg %p208
      %p215 = scmp.eq.s32.totalorder %s32, 1
      %p216 = por %p214, %p215
      %p217 = scmp.ne.s32.totalorder %s209, %s212
      %p218 = scmp.eq.s32.totalorder %s32, 0
      %p219 = por %p217, %p218
      %p220 = scmp.ne.s32.totalorder %s209, %s212
      %p221 = scmp.eq.s32.totalorder %s37, 1
      %p222 = por %p220, %p221
      %p223 = scmp.ne.s32.totalorder %s212, %s213
      %p224 = scmp.eq.s32.totalorder %s37, 0
      %p225 = por %p223, %p224
      %p226 = scmp.ne.s32.totalorder %s212, %s213
      %p227 = scmp.eq.s32.totalorder %s38, 1
      %p228 = por %p226, %p227
      %p230 = scmp.ne.s32.totalorder %s213, %s229
      %p231 = scmp.eq.s32.totalorder %s38, 0
      %p232 = por %p230, %p231
      %s233 = ssub.s32 %s32, %s39
      %p234 = scmp.eq.s32.totalorder %s233, 0
      %s236 = sadd.s32 %s235, 1
      %s237 = scalar_select %p234, %s235, %s236
      %p240 = pneg %p234
      %p241 = scmp.eq.s32.totalorder %s32, 1
      %p242 = por %p240, %p241
      %p243 = scmp.ne.s32.totalorder %s235, %s238
      %p244 = scmp.eq.s32.totalorder %s32, 0
      %p245 = por %p243, %p244
      %p246 = scmp.ne.s32.totalorder %s235, %s238
      %p247 = scmp.eq.s32.totalorder %s37, 1
      %p248 = por %p246, %p247
      %p249 = scmp.ne.s32.totalorder %s238, %s239
      %p250 = scmp.eq.s32.totalorder %s37, 0
      %p251 = por %p249, %p250
      %p252 = scmp.ne.s32.totalorder %s238, %s239
      %p253 = scmp.eq.s32.totalorder %s38, 1
      %p254 = por %p252, %p253
      %p256 = scmp.ne.s32.totalorder %s239, %s255
      %p257 = scmp.eq.s32.totalorder %s38, 0
      %p258 = por %p256, %p257
      %s259 = ssub.s32 %s32, %s39
      %p260 = scmp.eq.s32.totalorder %s259, 0
      %s262 = sadd.s32 %s261, 1
      %s263 = scalar_select %p260, %s261, %s262
      %p266 = pneg %p260
      %p267 = scmp.eq.s32.totalorder %s32, 1
      %p268 = por %p266, %p267
      %p269 = scmp.ne.s32.totalorder %s261, %s264
      %p270 = scmp.eq.s32.totalorder %s32, 0
      %p271 = por %p269, %p270
      %p272 = scmp.ne.s32.totalorder %s261, %s264
      %p273 = scmp.eq.s32.totalorder %s37, 1
      %p274 = por %p272, %p273
      %p275 = scmp.ne.s32.totalorder %s264, %s265
      %p276 = scmp.eq.s32.totalorder %s37, 0
      %p277 = por %p275, %p276
      %p278 = scmp.ne.s32.totalorder %s264, %s265
      %p279 = scmp.eq.s32.totalorder %s38, 1
      %p280 = por %p278, %p279
      %p282 = scmp.ne.s32.totalorder %s265, %s281
      %p283 = scmp.eq.s32.totalorder %s38, 0
      %p284 = por %p282, %p283
      %s285 = ssub.s32 %s32, %s39
      %p286 = scmp.eq.s32.totalorder %s285, 0
      %s288 = sadd.s32 %s287, 1
      %s289 = scalar_select %p286, %s287, %s288
      %p292 = pneg %p286
      %p293 = scmp.eq.s32.totalorder %s32, 1
      %p294 = por %p292, %p293
      %p295 = scmp.ne.s32.totalorder %s287, %s290
      %p296 = scmp.eq.s32.totalorder %s32, 0
      %p297 = por %p295, %p296
      %p298 = scmp.ne.s32.totalorder %s287, %s290
      %p299 = scmp.eq.s32.totalorder %s37, 1
      %p300 = por %p298, %p299
      %p301 = scmp.ne.s32.totalorder %s290, %s291
      %p302 = scmp.eq.s32.totalorder %s37, 0
      %p303 = por %p301, %p302
      %p304 = scmp.ne.s32.totalorder %s290, %s291
      %p305 = scmp.eq.s32.totalorder %s38, 1
      %p306 = por %p304, %p305
      %p308 = scmp.ne.s32.totalorder %s291, %s307
      %p309 = scmp.eq.s32.totalorder %s38, 0
      %p310 = por %p308, %p309
      %s311 = ssub.s32 %s32, %s39
      %p312 = scmp.eq.s32.totalorder %s311, 0
      %s314 = sadd.s32 %s313, 1
      %s315 = scalar_select %p312, %s313, %s314
      %p318 = pneg %p312
      %p319 = scmp.eq.s32.totalorder %s32, 1
      %p320 = por %p318, %p319
      %p321 = scmp.ne.s32.totalorder %s313, %s316
      %p322 = scmp.eq.s32.totalorder %s32, 0
      %p323 = por %p321, %p322
      %p324 = scmp.ne.s32.totalorder %s313, %s316
      %p325 = scmp.eq.s32.totalorder %s37, 1
      %p326 = por %p324, %p325
      %p327 = scmp.ne.s32.totalorder %s316, %s317
      %p328 = scmp.eq.s32.totalorder %s37, 0
      %p329 = por %p327, %p328
      %p330 = scmp.ne.s32.totalorder %s316, %s317
      %p331 = scmp.eq.s32.totalorder %s38, 1
      %p332 = por %p330, %p331
      %p334 = scmp.ne.s32.totalorder %s317, %s333
      %p335 = scmp.eq.s32.totalorder %s38, 0
      %p336 = por %p334, %p335
      %s337 = ssub.s32 %s32, %s39
      %p338 = scmp.eq.s32.totalorder %s337, 0
      %s340 = sadd.s32 %s339, 1
      %s341 = scalar_select %p338, %s339, %s340
      %p344 = pneg %p338
      %p345 = scmp.eq.s32.totalorder %s32, 1
      %p346 = por %p344, %p345
      %p347 = scmp.ne.s32.totalorder %s339, %s342
      %p348 = scmp.eq.s32.totalorder %s32, 0
      %p349 = por %p347, %p348
      %p350 = scmp.ne.s32.totalorder %s339, %s342
      %p351 = scmp.eq.s32.totalorder %s37, 1
      %p352 = por %p350, %p351
      %p353 = scmp.ne.s32.totalorder %s342, %s343
      %p354 = scmp.eq.s32.totalorder %s37, 0
      %p355 = por %p353, %p354
      %p356 = scmp.ne.s32.totalorder %s342, %s343
      %p357 = scmp.eq.s32.totalorder %s38, 1
      %p358 = por %p356, %p357
      %p360 = scmp.ne.s32.totalorder %s343, %s359
      %p361 = scmp.eq.s32.totalorder %s38, 0
      %p362 = por %p360, %p361
      %s363 = ssub.s32 %s32, %s39
      %p364 = scmp.eq.s32.totalorder %s363, 0
      %s366 = sadd.s32 %s365, 1
      %s367 = scalar_select %p364, %s365, %s366
      %p370 = pneg %p364
      %p371 = scmp.eq.s32.totalorder %s32, 1
      %p372 = por %p370, %p371
      %p373 = scmp.ne.s32.totalorder %s365, %s368
      %p374 = scmp.eq.s32.totalorder %s32, 0
      %p375 = por %p373, %p374
      %p376 = scmp.ne.s32.totalorder %s365, %s368
      %p377 = scmp.eq.s32.totalorder %s37, 1
      %p378 = por %p376, %p377
      %p379 = scmp.ne.s32.totalorder %s368, %s369
      %p380 = scmp.eq.s32.totalorder %s37, 0
      %p381 = por %p379, %p380
      %p382 = scmp.ne.s32.totalorder %s368, %s369
      %p383 = scmp.eq.s32.totalorder %s38, 1
      %p384 = por %p382, %p383
      %p386 = scmp.ne.s32.totalorder %s369, %s385
      %p387 = scmp.eq.s32.totalorder %s38, 0
      %p388 = por %p386, %p387
      %s389 = ssub.s32 %s32, %s39
      %p390 = scmp.eq.s32.totalorder %s389, 0
      %s392 = sadd.s32 %s391, 1
      %s393 = scalar_select %p390, %s391, %s392
      %p396 = pneg %p390
      %p397 = scmp.eq.s32.totalorder %s32, 1
      %p398 = por %p396, %p397
      %p399 = scmp.ne.s32.totalorder %s391, %s394
      %p400 = scmp.eq.s32.totalorder %s32, 0
      %p401 = por %p399, %p400
      %p402 = scmp.ne.s32.totalorder %s391, %s394
      %p403 = scmp.eq.s32.totalorder %s37, 1
      %p404 = por %p402, %p403
      %p405 = scmp.ne.s32.totalorder %s394, %s395
      %p406 = scmp.eq.s32.totalorder %s37, 0
      %p407 = por %p405, %p406
      %p408 = scmp.ne.s32.totalorder %s394, %s395
      %p409 = scmp.eq.s32.totalorder %s38, 1
      %p410 = por %p408, %p409
      %p412 = scmp.ne.s32.totalorder %s395, %s411
      %p413 = scmp.eq.s32.totalorder %s38, 0
      %p414 = por %p412, %p413
      %s416 = sadd.s32 %s415, 1
      %p419 = scmp.eq.s32.totalorder %s32, 1
      %p420 = scmp.ne.s32.totalorder %s415, %s417
      %p421 = scmp.eq.s32.totalorder %s32, 0
      %p422 = por %p420, %p421
      %p423 = scmp.ne.s32.totalorder %s415, %s417
      %p424 = scmp.eq.s32.totalorder %s37, 1
      %p425 = por %p423, %p424
      %p426 = scmp.ne.s32.totalorder %s417, %s418
      %p427 = scmp.eq.s32.totalorder %s37, 0
      %p428 = por %p426, %p427
      %p429 = scmp.ne.s32.totalorder %s417, %s418
      %p430 = scmp.eq.s32.totalorder %s38, 1
      %p431 = por %p429, %p430
      %p433 = scmp.ne.s32.totalorder %s418, %s432
      %p434 = scmp.eq.s32.totalorder %s38, 0
      %p435 = por %p433, %p434
      %s437 = sadd.s32 %s436, 1
      %p440 = scmp.eq.s32.totalorder %s32, 1
      %p441 = scmp.ne.s32.totalorder %s436, %s438
      %p442 = scmp.eq.s32.totalorder %s32, 0
      %p443 = por %p441, %p442
      %p444 = scmp.ne.s32.totalorder %s436, %s438
      %p445 = scmp.eq.s32.totalorder %s37, 1
      %p446 = por %p444, %p445
      %p447 = scmp.ne.s32.totalorder %s438, %s439
      %p448 = scmp.eq.s32.totalorder %s37, 0
      %p449 = por %p447, %p448
      %p450 = scmp.ne.s32.totalorder %s438, %s439
      %p451 = scmp.eq.s32.totalorder %s38, 1
      %p452 = por %p450, %p451
      %p454 = scmp.ne.s32.totalorder %s439, %s453
      %p455 = scmp.eq.s32.totalorder %s38, 0
      %p456 = por %p454, %p455
      %s458 = sadd.s32 %s457, 1
      %p461 = scmp.eq.s32.totalorder %s32, 1
      %p462 = scmp.ne.s32.totalorder %s457, %s459
      %p463 = scmp.eq.s32.totalorder %s32, 0
      %p464 = por %p462, %p463
      %p465 = scmp.ne.s32.totalorder %s457, %s459
      %p466 = scmp.eq.s32.totalorder %s37, 1
      %p467 = por %p465, %p466
      %p468 = scmp.ne.s32.totalorder %s459, %s460
      %p469 = scmp.eq.s32.totalorder %s37, 0
      %p470 = por %p468, %p469
      %p471 = scmp.ne.s32.totalorder %s459, %s460
      %p472 = scmp.eq.s32.totalorder %s38, 1
      %p473 = por %p471, %p472
      %p475 = scmp.ne.s32.totalorder %s460, %s474
      %p476 = scmp.eq.s32.totalorder %s38, 0
      %p477 = por %p475, %p476
      %p478 = scmp.le.s32.totalorder 1, %s32
      %p479 = scmp.lt.s32.totalorder %s32, 3
      %p480 = pnand %p478, %p479
      %p481 = pneg %p480
      // Predicated region
      $region9: #{transformer_classifier.1} parent=5 // pred_check
        _
      $region10: #{transformer_classifier.1} parent=5 // pred_check_branch
        %483 = sbr.rel (%p480) target = $region12
      $region11: #{transformer_classifier.1} parent=5 // pred_region
        %s484 = ssub.s32 %s32, 1
        // Predicated region
        $region13: #{transformer_classifier.1} parent=11 // pred_check
          %p485 = pneg %p53
        $region14: #{transformer_classifier.1} parent=11 // pred_check_branch
          %487 = sbr.rel (%p485) target = $region16
        $region15: #{transformer_classifier.1} parent=11 // pred_region
          _
        $region16: #{transformer_classifier.1} parent=11 // pred_fallthru
          _
        // Predicated region
        $region17: #{transformer_classifier.1} parent=11 // pred_check
          %p488 = pneg %p74
        $region18: #{transformer_classifier.1} parent=11 // pred_check_branch
          %490 = sbr.rel (%p488) target = $region20
        $region19: #{transformer_classifier.1} parent=11 // pred_region
          _
        $region20: #{transformer_classifier.1} parent=11 // pred_fallthru
          _
        // Predicated region
        $region21: #{transformer_classifier.1} parent=11 // pred_check
          %p491 = pneg %p95
        $region22: #{transformer_classifier.1} parent=11 // pred_check_branch
          %493 = sbr.rel (%p491) target = $region24
        $region23: #{transformer_classifier.1} parent=11 // pred_region
          _
        $region24: #{transformer_classifier.1} parent=11 // pred_fallthru
          _
        // Predicated region
        $region25: #{transformer_classifier.1} parent=11 // pred_check
          %p494 = pneg %p428
        $region26: #{transformer_classifier.1} parent=11 // pred_check_branch
          %496 = sbr.rel (%p494) target = $region28
        $region27: #{transformer_classifier.1} parent=11 // pred_region
          %s498 = ssub.s32 2048, 2048
          %499 = vsyncadd [#allocation9], %s498
          %s500 = sshll.u32 [#allocation10], 4
          %s501 = int_to_ptr.vmem [resolvable:$true] %s500
          %506 = dma.hbm_to_vmem [thread:$0]  %s15, 2048, %s501, [#allocation9], 128, 128, 8
        $region28: #{transformer_classifier.1} parent=11 // pred_fallthru
          _
        // Predicated region
        $region29: #{transformer_classifier.1} parent=11 // pred_check
          %p507 = pneg %p449
        $region30: #{transformer_classifier.1} parent=11 // pred_check_branch
          %509 = sbr.rel (%p507) target = $region32
        $region31: #{transformer_classifier.1} parent=11 // pred_region
          _
        $region32: #{transformer_classifier.1} parent=11 // pred_fallthru
          _
      $region12: #{transformer_classifier.1} parent=5 // pred_fallthru
        _
      %p510 = scmp.lt.s32.totalorder %s32, 2
      // Predicated region
      $region33: #{transformer_classifier.1} parent=5 // pred_check
        %p511 = pneg %p510
      $region34: #{transformer_classifier.1} parent=5 // pred_check_branch
        %513 = sbr.rel (%p511) target = $region36
      $region35: #{transformer_classifier.1} parent=5 // pred_region
        // Predicated region
        $region37: #{transformer_classifier.1} parent=35 // pred_check
          %p514 = pneg %p115
        $region38: #{transformer_classifier.1} parent=35 // pred_check_branch
          %516 = sbr.rel (%p514) target = $region40
        $region39: #{transformer_classifier.1} parent=35 // pred_region
          %s517 = sand.u32 %s105, 1
          %s518 = scalar_lea.sflag [#allocation4], %s517
          %s519 = sand.u32 %s105, 1
          %s520 = smul.addr %s519, 192
          %s521 = scalar_lea.vmem [#allocation3], %s520
          %s523 = ssub.s32 3072, 3072
          %524 = vsyncadd %s518, %s523
          %s525 = smul.addr %s32, 48
          %s526 = smul.addr %s525, 64
          %s527 = scalar_lea.hbm %s3, %s526
          %s528 = sshll.u32 %s521, 4
          %s529 = int_to_ptr.vmem [resolvable:$true] %s528
          %534 = dma.hbm_to_vmem [thread:$0]  %s527, 3072, %s529, %s518, 192, 192, 12
        $region40: #{transformer_classifier.1} parent=35 // pred_fallthru
          _
        // Predicated region
        $region41: #{transformer_classifier.1} parent=35 // pred_check
          %p535 = pneg %p141
        $region42: #{transformer_classifier.1} parent=35 // pred_check_branch
          %537 = sbr.rel (%p535) target = $region44
        $region43: #{transformer_classifier.1} parent=35 // pred_region
          %p538 = scmp.lt.s32.totalorder %s32, 1
          %s539 = scalar_select %p538, %s32, 1
          %s540 = smul.addr %s539, 3
          %s541 = scalar_lea.vmem %s4, %s540
        $region44: #{transformer_classifier.1} parent=35 // pred_fallthru
          _
        // Predicated region
        $region45: #{transformer_classifier.1} parent=35 // pred_check
          %p542 = pneg %p167
        $region46: #{transformer_classifier.1} parent=35 // pred_check_branch
          %544 = sbr.rel (%p542) target = $region48
        $region47: #{transformer_classifier.1} parent=35 // pred_region
          %s545 = sand.u32 %s32, 1
          %s546 = scalar_lea.sflag [#allocation6], %s545
          %s547 = sand.u32 %s157, 1
          %s548 = smul.addr %s547, 64
          %s549 = scalar_lea.vmem [#allocation5], %s548
          %s551 = ssub.s32 1024, 1024
          %552 = vsyncadd %s546, %s551
          %s553 = smul.addr %s32, 16
          %s554 = smul.addr %s553, 64
          %s555 = scalar_lea.hbm %s5, %s554
          %s556 = sshll.u32 %s549, 4
          %s557 = int_to_ptr.vmem [resolvable:$true] %s556
          %562 = dma.hbm_to_vmem [thread:$0]  %s555, 1024, %s557, %s546, 64, 64, 4
        $region48: #{transformer_classifier.1} parent=35 // pred_fallthru
          _
        // Predicated region
        $region49: #{transformer_classifier.1} parent=35 // pred_check
          %p563 = pneg %p193
        $region50: #{transformer_classifier.1} parent=35 // pred_check_branch
          %565 = sbr.rel (%p563) target = $region52
        $region51: #{transformer_classifier.1} parent=35 // pred_region
          %p566 = scmp.lt.s32.totalorder %s32, 1
          %s567 = scalar_select %p566, %s32, 1
          %s568 = scalar_lea.vmem %s6, %s567
        $region52: #{transformer_classifier.1} parent=35 // pred_fallthru
          _
        // Predicated region
        $region53: #{transformer_classifier.1} parent=35 // pred_check
          %p569 = pneg %p219
        $region54: #{transformer_classifier.1} parent=35 // pred_check_branch
          %571 = sbr.rel (%p569) target = $region56
        $region55: #{transformer_classifier.1} parent=35 // pred_region
          %s572 = sand.u32 %s32, 1
          %s573 = scalar_lea.sflag [#allocation6], %s572
          %s574 = sand.u32 %s209, 1
          %s575 = smul.addr %s574, 1024
          %s576 = scalar_lea.vmem [#allocation7], %s575
          %s578 = ssub.s32 16384, 16384
          %579 = vsyncadd %s573, %s578
          %s580 = smul.addr %s32, 256
          %s581 = smul.addr %s580, 64
          %s582 = scalar_lea.hbm %s7, %s581
          %s583 = sshll.u32 %s576, 4
          %s584 = int_to_ptr.vmem [resolvable:$true] %s583
          %589 = dma.hbm_to_vmem [thread:$0]  %s582, 16384, %s584, %s573, 1024, 1024, 64
        $region56: #{transformer_classifier.1} parent=35 // pred_fallthru
          _
        // Predicated region
        $region57: #{transformer_classifier.1} parent=35 // pred_check
          %p590 = pneg %p245
        $region58: #{transformer_classifier.1} parent=35 // pred_check_branch
          %592 = sbr.rel (%p590) target = $region60
        $region59: #{transformer_classifier.1} parent=35 // pred_region
          %p593 = scmp.lt.s32.totalorder %s32, 1
          %s594 = scalar_select %p593, %s32, 1
          %s595 = smul.addr %s594, 16
          %s596 = scalar_lea.vmem %s8, %s595
        $region60: #{transformer_classifier.1} parent=35 // pred_fallthru
          _
        // Predicated region
        $region61: #{transformer_classifier.1} parent=35 // pred_check
          %p597 = pneg %p271
        $region62: #{transformer_classifier.1} parent=35 // pred_check_branch
          %599 = sbr.rel (%p597) target = $region64
        $region63: #{transformer_classifier.1} parent=35 // pred_region
          %s600 = sand.u32 %s32, 1
          %s601 = scalar_lea.sflag [#allocation9], %s600
          %s602 = sand.u32 %s261, 1
          %s603 = smul.addr %s602, 1024
          %s604 = scalar_lea.vmem [#allocation8], %s603
          %s606 = ssub.s32 16384, 16384
          %607 = vsyncadd %s601, %s606
          %s608 = smul.addr %s32, 256
          %s609 = smul.addr %s608, 64
          %s610 = scalar_lea.hbm %s9, %s609
          %s611 = sshll.u32 %s604, 4
          %s612 = int_to_ptr.vmem [resolvable:$true] %s611
          %617 = dma.hbm_to_vmem [thread:$0]  %s610, 16384, %s612, %s601, 64, 64, 4
        $region64: #{transformer_classifier.1} parent=35 // pred_fallthru
          _
        // Predicated region
        $region65: #{transformer_classifier.1} parent=35 // pred_check
          %p618 = pneg %p297
        $region66: #{transformer_classifier.1} parent=35 // pred_check_branch
          %620 = sbr.rel (%p618) target = $region68
        $region67: #{transformer_classifier.1} parent=35 // pred_region
          %p621 = scmp.lt.s32.totalorder %s32, 1
          %s622 = scalar_select %p621, %s32, 1
          %s623 = scalar_lea.vmem %s10, %s622
        $region68: #{transformer_classifier.1} parent=35 // pred_fallthru
          _
        // Predicated region
        $region69: #{transformer_classifier.1} parent=35 // pred_check
          %p624 = pneg %p323
        $region70: #{transformer_classifier.1} parent=35 // pred_check_branch
          %626 = sbr.rel (%p624) target = $region72
        $region71: #{transformer_classifier.1} parent=35 // pred_region
          %p627 = scmp.lt.s32.totalorder %s32, 1
          %s628 = scalar_select %p627, %s32, 1
          %s629 = scalar_lea.vmem %s11, %s628
        $region72: #{transformer_classifier.1} parent=35 // pred_fallthru
          _
        // Predicated region
        $region73: #{transformer_classifier.1} parent=35 // pred_check
          %p630 = pneg %p349
        $region74: #{transformer_classifier.1} parent=35 // pred_check_branch
          %632 = sbr.rel (%p630) target = $region76
        $region75: #{transformer_classifier.1} parent=35 // pred_region
          %p633 = scmp.lt.s32.totalorder %s32, 1
          %s634 = scalar_select %p633, %s32, 1
          %s635 = scalar_lea.vmem %s12, %s634
        $region76: #{transformer_classifier.1} parent=35 // pred_fallthru
          _
        // Predicated region
        $region77: #{transformer_classifier.1} parent=35 // pred_check
          %p636 = pneg %p375
        $region78: #{transformer_classifier.1} parent=35 // pred_check_branch
          %638 = sbr.rel (%p636) target = $region80
        $region79: #{transformer_classifier.1} parent=35 // pred_region
          %p639 = scmp.lt.s32.totalorder %s32, 1
          %s640 = scalar_select %p639, %s32, 1
          %s641 = scalar_lea.vmem %s13, %s640
        $region80: #{transformer_classifier.1} parent=35 // pred_fallthru
          _
        // Predicated region
        $region81: #{transformer_classifier.1} parent=35 // pred_check
          %p642 = pneg %p401
        $region82: #{transformer_classifier.1} parent=35 // pred_check_branch
          %644 = sbr.rel (%p642) target = $region84
        $region83: #{transformer_classifier.1} parent=35 // pred_region
          %p645 = scmp.lt.s32.totalorder %s32, 1
          %s646 = scalar_select %p645, %s32, 1
          %s647 = scalar_lea.vmem %s14, %s646
        $region84: #{transformer_classifier.1} parent=35 // pred_fallthru
          _
      $region36: #{transformer_classifier.1} parent=5 // pred_fallthru
        _
      %p648 = scmp.le.s32.totalorder 1, %s32
      %p649 = scmp.lt.s32.totalorder %s32, 3
      %p650 = pnand %p648, %p649
      %p651 = pneg %p650
      // Predicated region
      $region85: #{transformer_classifier.1} parent=5 // pred_check
        _
      $region86: #{transformer_classifier.1} parent=5 // pred_check_branch
        %653 = sbr.rel (%p650) target = $region88
      $region87: #{transformer_classifier.1} parent=5 // pred_region
        %s654 = ssub.s32 %s32, 1
        %s655 = sand.u32 %s108, 1
        %s656 = scalar_lea.sflag [#allocation4], %s655
        %s657 = sand.u32 %s108, 1
        %s658 = smul.addr %s657, 192
        %s659 = scalar_lea.vmem [#allocation3], %s658
        // Predicated region
        $region89: #{transformer_classifier.1} parent=87 // pred_check
          %p660 = pneg %p121
        $region90: #{transformer_classifier.1} parent=87 // pred_check_branch
          %662 = sbr.rel (%p660) target = $region92
        $region91: #{transformer_classifier.1} parent=87 // pred_region
          %663 = dma.done %s656, 3072
        $region92: #{transformer_classifier.1} parent=87 // pred_fallthru
          _
        %s664 = sand.u32 %s37, 1
        %s665 = scalar_lea.sflag [#allocation6], %s664
        %s666 = sand.u32 %s160, 1
        %s667 = smul.addr %s666, 64
        %s668 = scalar_lea.vmem [#allocation5], %s667
        // Predicated region
        $region93: #{transformer_classifier.1} parent=87 // pred_check
          %p669 = pneg %p173
        $region94: #{transformer_classifier.1} parent=87 // pred_check_branch
          %671 = sbr.rel (%p669) target = $region96
        $region95: #{transformer_classifier.1} parent=87 // pred_region
          %672 = dma.done %s665, 1024
        $region96: #{transformer_classifier.1} parent=87 // pred_fallthru
          _
        %s673 = sand.u32 %s37, 1
        %s674 = scalar_lea.sflag [#allocation6], %s673
        %s675 = sand.u32 %s212, 1
        %s676 = smul.addr %s675, 1024
        %s677 = scalar_lea.vmem [#allocation7], %s676
        // Predicated region
        $region97: #{transformer_classifier.1} parent=87 // pred_check
          %p678 = pneg %p225
        $region98: #{transformer_classifier.1} parent=87 // pred_check_branch
          %680 = sbr.rel (%p678) target = $region100
        $region99: #{transformer_classifier.1} parent=87 // pred_region
          %681 = dma.done %s674, 16384
        $region100: #{transformer_classifier.1} parent=87 // pred_fallthru
          _
        %s682 = sand.u32 %s37, 1
        %s683 = scalar_lea.sflag [#allocation9], %s682
        %s684 = sand.u32 %s264, 1
        %s685 = smul.addr %s684, 1024
        %s686 = scalar_lea.vmem [#allocation8], %s685
        // Predicated region
        $region101: #{transformer_classifier.1} parent=87 // pred_check
          %p687 = pneg %p277
        $region102: #{transformer_classifier.1} parent=87 // pred_check_branch
          %689 = sbr.rel (%p687) target = $region104
        $region103: #{transformer_classifier.1} parent=87 // pred_region
          %690 = dma.done %s683, 16384
        $region104: #{transformer_classifier.1} parent=87 // pred_fallthru
          _
        // Predicated region
        $region105: #{transformer_classifier.1} parent=87 // pred_check
          %p691 = pneg %p428
        $region106: #{transformer_classifier.1} parent=87 // pred_check_branch
          %693 = sbr.rel (%p691) target = $region108
        $region107: #{transformer_classifier.1} parent=87 // pred_region
          %694 = dma.done [#allocation9], 2048
        $region108: #{transformer_classifier.1} parent=87 // pred_fallthru
          _
        %p695 = pneg %p53
        %p696 = pneg %p50
        %p697 = pneg %p74
        %p698 = pneg %p71
        %p699 = pneg %p95
        %p700 = pneg %p92
        %s701 = sand.u32 %s108, 1
        %s702 = scalar_lea.sflag [#allocation4], %s701
        %s703 = sand.u32 %s108, 1
        %s704 = smul.addr %s703, 192
        %s705 = scalar_lea.vmem [#allocation3], %s704
        %p706 = pneg %p121
        %p707 = pneg %p118
        %p708 = scmp.lt.s32.totalorder %s37, 1
        %s709 = scalar_select %p708, %s37, 1
        %s710 = smul.addr %s709, 3
        %s711 = scalar_lea.vmem %s4, %s710
        %p712 = pneg %p147
        %p713 = pneg %p144
        %s714 = sand.u32 %s37, 1
        %s715 = scalar_lea.sflag [#allocation6], %s714
        %s716 = sand.u32 %s160, 1
        %s717 = smul.addr %s716, 64
        %s718 = scalar_lea.vmem [#allocation5], %s717
        %p719 = pneg %p173
        %p720 = pneg %p170
        %p721 = scmp.lt.s32.totalorder %s37, 1
        %s722 = scalar_select %p721, %s37, 1
        %s723 = scalar_lea.vmem %s6, %s722
        %p724 = pneg %p199
        %p725 = pneg %p196
        %s726 = sand.u32 %s37, 1
        %s727 = scalar_lea.sflag [#allocation6], %s726
        %s728 = sand.u32 %s212, 1
        %s729 = smul.addr %s728, 1024
        %s730 = scalar_lea.vmem [#allocation7], %s729
        %p731 = pneg %p225
        %p732 = pneg %p222
        %p733 = scmp.lt.s32.totalorder %s37, 1
        %s734 = scalar_select %p733, %s37, 1
        %s735 = smul.addr %s734, 16
        %s736 = scalar_lea.vmem %s8, %s735
        %p737 = pneg %p251
        %p738 = pneg %p248
        %s739 = sand.u32 %s37, 1
        %s740 = scalar_lea.sflag [#allocation9], %s739
        %s741 = sand.u32 %s264, 1
        %s742 = smul.addr %s741, 1024
        %s743 = scalar_lea.vmem [#allocation8], %s742
        %p744 = pneg %p277
        %p745 = pneg %p274
        %p746 = scmp.lt.s32.totalorder %s37, 1
        %s747 = scalar_select %p746, %s37, 1
        %s748 = scalar_lea.vmem %s10, %s747
        %p749 = pneg %p303
        %p750 = pneg %p300
        %p751 = scmp.lt.s32.totalorder %s37, 1
        %s752 = scalar_select %p751, %s37, 1
        %s753 = scalar_lea.vmem %s11, %s752
        %p754 = pneg %p329
        %p755 = pneg %p326
        %p756 = scmp.lt.s32.totalorder %s37, 1
        %s757 = scalar_select %p756, %s37, 1
        %s758 = scalar_lea.vmem %s12, %s757
        %p759 = pneg %p355
        %p760 = pneg %p352
        %p761 = scmp.lt.s32.totalorder %s37, 1
        %s762 = scalar_select %p761, %s37, 1
        %s763 = scalar_lea.vmem %s13, %s762
        %p764 = pneg %p381
        %p765 = pneg %p378
        %p766 = scmp.lt.s32.totalorder %s37, 1
        %s767 = scalar_select %p766, %s37, 1
        %s768 = scalar_lea.vmem %s14, %s767
        %p769 = pneg %p407
        %p770 = pneg %p404
        %p771 = pneg %p428
        %p772 = pneg %p425
        %p773 = pneg %p449
        %p774 = pneg %p446
        %p775 = pneg %p470
        %p776 = pneg %p467
        %p777 = scmp.lt.s32.totalorder %s37, 1
        %s778 = scalar_select %p777, %s37, 1
        %s779 = smul.addr %s778, 3
        %s780 = scalar_lea.vmem %s4, %s779
        %p781 = scmp.lt.s32.totalorder %s37, 1
        %s782 = scalar_select %p781, %s37, 1
        %s783 = scalar_lea.vmem %s6, %s782
        %p784 = scmp.lt.s32.totalorder %s37, 1
        %s785 = scalar_select %p784, %s37, 1
        %s786 = smul.addr %s785, 16
        %s787 = scalar_lea.vmem %s8, %s786
        %p788 = scmp.lt.s32.totalorder %s37, 1
        %s789 = scalar_select %p788, %s37, 1
        %s790 = scalar_lea.vmem %s10, %s789
        %p791 = scmp.lt.s32.totalorder %s37, 1
        %s792 = scalar_select %p791, %s37, 1
        %s793 = scalar_lea.vmem %s11, %s792
        %p794 = scmp.lt.s32.totalorder %s37, 1
        %s795 = scalar_select %p794, %s37, 1
        %s796 = scalar_lea.vmem %s12, %s795
        %p797 = scmp.lt.s32.totalorder %s37, 1
        %s798 = scalar_select %p797, %s37, 1
        %s799 = scalar_lea.vmem %s13, %s798
        %p800 = scmp.lt.s32.totalorder %s37, 1
        %s801 = scalar_select %p800, %s37, 1
        %s802 = scalar_lea.vmem %s14, %s801
        %p804 = scmp.eq.s32.totalorder %s37, 0
        // Predicated region
        $region109: #{transformer_classifier.1} parent=87 // pred_check
          %p805 = pneg %p804
        $region110: #{transformer_classifier.1} parent=87 // pred_check_branch
          %807 = sbr.rel (%p805) target = $region112
        $region111: #{transformer_classifier.1} parent=87 // pred_region
          %v808 = vld [vmem:[%s0] sm:$0xff]
          %v809 = vld [vmem:[%s0 + $0x8] sm:$0xff]
          %v810 = vld [vmem:[%s1] sm:$0x7]
          %v811 = vld [vmem:[%s2] sm:$0x1]
          %v813 = vlaneseq
          %v814 = vshrl.u32 %v813, 7
          %v815 = vsub.s32 0, %v814
          %v816 = vrot.slane %v811, %v815
          %vm818 = vcmask 23552
          %v820 = vsel %vm818, %v808, 0
          %v823 = vsel %vm818, %v809, 0
          %vm825 = vcmask 1042432
          %v827 = vsel %vm825, %v810, 0
          %829 = vmatprep.subr.mxu0 0.0
          %830 = vmatpush1.msra.mxu0 %v827
          %831 = vmatprep.subr.mxu0 0.0
          %832 = vmatpush1.msra.mxu0 0.0
          %833 = vmatprep.subr.mxu0 0.0
          %834 = vmatpush1.msra.mxu0 0.0
          %835 = vmatprep.subr.mxu0 0.0
          %836 = vmatpush1.msra.mxu0 0.0
          %837 = vmatprep.subr.mxu0 0.0
          %838 = vmatpush1.msra.mxu0 0.0
          %839 = vmatprep.subr.mxu0 0.0
          %840 = vmatpush1.msra.mxu0 0.0
          %841 = vmatprep.subr.mxu0 0.0
          %842 = vmatpush1.msra.mxu0 0.0
          %843 = vmatprep.subr.mxu0 0.0
          %844 = vmatpush1.msra.mxu0 0.0
          %845 = vmatprep.subr.mxu0 0.0
          %846 = vmatpush1.msra.mxu0 0.0
          %847 = vmatprep.subr.mxu0 0.0
          %848 = vmatpush1.msra.mxu0 0.0
          %849 = vmatprep.subr.mxu0 0.0
          %850 = vmatpush1.msra.mxu0 0.0
          %851 = vmatprep.subr.mxu0 0.0
          %852 = vmatpush1.msra.mxu0 0.0
          %853 = vmatprep.subr.mxu0 0.0
          %854 = vmatpush1.msra.mxu0 0.0
          %855 = vmatprep.subr.mxu0 0.0
          %856 = vmatpush1.msra.mxu0 0.0
          %857 = vmatprep.subr.mxu0 0.0
          %858 = vmatpush1.msra.mxu0 0.0
          %859 = vmatprep.subr.mxu0 0.0
          %860 = vmatpush1.msra.mxu0 0.0
          %861 = vmatprep.subr.mxu0 0.0
          %862 = vmatpush1.msra.mxu0 0.0
          %863 = vmatprep.subr.mxu0 0.0
          %864 = vmatpush1.msra.mxu0 0.0
          %865 = vmatprep.subr.mxu0 0.0
          %866 = vmatpush1.msra.mxu0 0.0
          %867 = vmatprep.subr.mxu0 0.0
          %868 = vmatpush1.msra.mxu0 0.0
          %869 = vmatprep.subr.mxu0 0.0
          %870 = vmatpush1.msra.mxu0 0.0
          %871 = vmatprep.subr.mxu0 0.0
          %872 = vmatpush1.msra.mxu0 0.0
          %873 = vmatprep.subr.mxu0 0.0
          %874 = vmatpush1.msra.mxu0 0.0
          %875 = vmatprep.subr.mxu0 0.0
          %876 = vmatpush1.msra.mxu0 0.0
          %877 = vmatprep.subr.mxu0 0.0
          %878 = vmatpush1.msra.mxu0 0.0
          %879 = vmatprep.subr.mxu0 0.0
          %880 = vmatpush1.msra.mxu0 0.0
          %881 = vmatprep.subr.mxu0 0.0
          %882 = vmatpush1.msra.mxu0 0.0
          %883 = vmatprep.subr.mxu0 0.0
          %884 = vmatpush1.msra.mxu0 0.0
          %885 = vmatprep.subr.mxu0 0.0
          %886 = vmatpush1.msra.mxu0 0.0
          %887 = vmatprep.subr.mxu0 0.0
          %888 = vmatpush1.msra.mxu0 0.0
          %889 = vmatprep.subr.mxu0 0.0
          %890 = vmatpush1.msra.mxu0 0.0
          %891 = vmatprep.subr.mxu0 0.0
          %892 = vmatpush1.msra.mxu0 0.0
          %893 = vmatprep.mubr.f32.mxu0 0.0
          %894 = vmatmul.mubr.f32.gmra.mrb[0].mxu0 %v820
          %v895 = vpop.f32.mrb[0].mxu0
          %v896 = vadd.f32 %v816, %v895
          %v897 = vpop.f32.mrb[0].mxu0
          %898 = vmatprep.mubr.f32.mxu0 0.0
          %899 = vmatmul.mubr.f32.gmra.mrb[0].mxu0 %v823
          %v900 = vpop.f32.mrb[0].mxu0
          %v901 = vadd.f32 %v816, %v900
          %v902 = vpop.f32.mrb[0].mxu0
          %903 = vdwg.mxu0
          %904 = vst [vmem:[#allocation2] sm:$0xff] %v896
          %905 = vst [vmem:[#allocation2 + $0x8] sm:$0xff] %v901
        $region112: #{transformer_classifier.1} parent=87 // pred_fallthru
          _
        %v906 = vld [vmem:[#allocation2] sm:$0xff]
        %v907 = vld [vmem:[#allocation2 + $0x8] sm:$0xff]
        %v908 = vpack.c.bf16 %v907, %v906
        %v909 = vld [vmem:[%s659] sm:$0xff]
        %v910 = vld [vmem:[%s659 + $0x8] sm:$0xf]
        %v911 = vld [vmem:[%s659 + $0xc] sm:$0xff]
        %v912 = vld [vmem:[%s659 + $0x14] sm:$0xf]
        %v913 = vld [vmem:[%s659 + $0x18] sm:$0xff]
        %v914 = vld [vmem:[%s659 + $0x20] sm:$0xf]
        %v915 = vld [vmem:[%s659 + $0x24] sm:$0xff]
        %v916 = vld [vmem:[%s659 + $0x2c] sm:$0xf]
        %v917 = vld [vmem:[%s659 + $0x30] sm:$0xff]
        %v918 = vld [vmem:[%s659 + $0x38] sm:$0xf]
        %v919 = vld [vmem:[%s659 + $0x3c] sm:$0xff]
        %v920 = vld [vmem:[%s659 + $0x44] sm:$0xf]
        %v921 = vld [vmem:[%s659 + $0x48] sm:$0xff]
        %v922 = vld [vmem:[%s659 + $0x50] sm:$0xf]
        %v923 = vld [vmem:[%s659 + $0x54] sm:$0xff]
        %v924 = vld [vmem:[%s659 + $0x5c] sm:$0xf]
        %v925 = vld [vmem:[%s659 + $0x60] sm:$0xff]
        %v926 = vld [vmem:[%s659 + $0x68] sm:$0xf]
        %v927 = vld [vmem:[%s659 + $0x6c] sm:$0xff]
        %v928 = vld [vmem:[%s659 + $0x74] sm:$0xf]
        %v929 = vld [vmem:[%s659 + $0x78] sm:$0xff]
        %v930 = vld [vmem:[%s659 + $0x80] sm:$0xf]
        %v931 = vld [vmem:[%s659 + $0x84] sm:$0xff]
        %v932 = vld [vmem:[%s659 + $0x8c] sm:$0xf]
        %v933 = vld [vmem:[%s659 + $0x90] sm:$0xff]
        %v934 = vld [vmem:[%s659 + $0x98] sm:$0xf]
        %v935 = vld [vmem:[%s659 + $0x9c] sm:$0xff]
        %v936 = vld [vmem:[%s659 + $0xa4] sm:$0xf]
        %v937 = vld [vmem:[%s659 + $0xa8] sm:$0xff]
        %v938 = vld [vmem:[%s659 + $0xb0] sm:$0xf]
        %v939 = vld [vmem:[%s659 + $0xb4] sm:$0xff]
        %v940 = vld [vmem:[%s659 + $0xbc] sm:$0xf]
        %v941 = vld [vmem:[%s780] sm:$0x7]
        %v943 = vlaneseq
        %v944 = vshrl.u32 %v943, 7
        %v945 = vsub.s32 0, %v944
        %v946 = vrot.slane %v941, %v945
        %v947 = vlaneseq
        %v948 = vshrl.u32 %v947, 7
        %v949 = vsub.s32 1, %v948
        %v950 = vrot.slane %v941, %v949
        %v951 = vlaneseq
        %v952 = vshrl.u32 %v951, 7
        %v953 = vsub.s32 2, %v952
        %v954 = vrot.slane %v941, %v953
        %v990 = vunpack.c.l.b16 %v909
        %v991 = vunpack.c.h.b16 %v909
        %v992 = vunpack.c.l.b16 %v910
        %v993 = vunpack.c.l.b16 %v911
        %v994 = vunpack.c.h.b16 %v911
        %v995 = vunpack.c.l.b16 %v912
        %v996 = vunpack.c.l.b16 %v913
        %v997 = vunpack.c.h.b16 %v913
        %v998 = vunpack.c.l.b16 %v914
        %v999 = vunpack.c.l.b16 %v915
        %v1000 = vunpack.c.h.b16 %v915
        %v1001 = vunpack.c.l.b16 %v916
        %v1002 = vunpack.c.l.b16 %v917
        %v1003 = vunpack.c.h.b16 %v917
        %v1004 = vunpack.c.l.b16 %v918
        %v1005 = vunpack.c.l.b16 %v919
        %v1006 = vunpack.c.h.b16 %v919
        %v1007 = vunpack.c.l.b16 %v920
        %v1008 = vunpack.c.l.b16 %v921
        %v1009 = vunpack.c.h.b16 %v921
        %v1010 = vunpack.c.l.b16 %v922
        %v1011 = vunpack.c.l.b16 %v923
        %v1012 = vunpack.c.h.b16 %v923
        %v1013 = vunpack.c.l.b16 %v924
        %v1014 = vunpack.c.l.b16 %v925
        %v1015 = vunpack.c.h.b16 %v925
        %v1016 = vunpack.c.l.b16 %v926
        %v1017 = vunpack.c.l.b16 %v927
        %v1018 = vunpack.c.h.b16 %v927
        %v1019 = vunpack.c.l.b16 %v928
        %v1020 = vunpack.c.l.b16 %v929
        %v1021 = vunpack.c.h.b16 %v929
        %v1022 = vunpack.c.l.b16 %v930
        %v1023 = vunpack.c.l.b16 %v931
        %v1024 = vunpack.c.h.b16 %v931
        %v1025 = vunpack.c.l.b16 %v932
        %v1026 = vunpack.c.l.b16 %v933
        %v1027 = vunpack.c.h.b16 %v933
        %v1028 = vunpack.c.l.b16 %v934
        %v1029 = vunpack.c.l.b16 %v935
        %v1030 = vunpack.c.h.b16 %v935
        %v1031 = vunpack.c.l.b16 %v936
        %v1032 = vunpack.c.l.b16 %v937
        %v1033 = vunpack.c.h.b16 %v937
        %v1034 = vunpack.c.l.b16 %v938
        %v1035 = vunpack.c.l.b16 %v939
        %v1036 = vunpack.c.h.b16 %v939
        %v1037 = vunpack.c.l.b16 %v940
        %v1038 = vpack.c.b16 %v993, %v990
        %v1039 = vpack.c.b16 %v994, %v991
        %v1040 = vpack.c.b16 %v995, %v992
        %v1041 = vpack.c.b16 %v999, %v996
        %v1042 = vpack.c.b16 %v1000, %v997
        %v1043 = vpack.c.b16 %v1001, %v998
        %v1044 = vpack.c.b16 %v1005, %v1002
        %v1045 = vpack.c.b16 %v1006, %v1003
        %v1046 = vpack.c.b16 %v1007, %v1004
        %v1047 = vpack.c.b16 %v1011, %v1008
        %v1048 = vpack.c.b16 %v1012, %v1009
        %v1049 = vpack.c.b16 %v1013, %v1010
        %v1050 = vpack.c.b16 %v1017, %v1014
        %v1051 = vpack.c.b16 %v1018, %v1015
        %v1052 = vpack.c.b16 %v1019, %v1016
        %v1053 = vpack.c.b16 %v1023, %v1020
        %v1054 = vpack.c.b16 %v1024, %v1021
        %v1055 = vpack.c.b16 %v1025, %v1022
        %v1056 = vpack.c.b16 %v1029, %v1026
        %v1057 = vpack.c.b16 %v1030, %v1027
        %v1058 = vpack.c.b16 %v1031, %v1028
        %v1059 = vpack.c.b16 %v1035, %v1032
        %v1060 = vpack.c.b16 %v1036, %v1033
        %v1061 = vpack.c.b16 %v1037, %v1034
        %1086 = vmatprep.subr.bf16.mxu0 %v1039
        %1087 = vmatpush1.bf16.msra.mxu0 %v1038
        %1088 = vmatprep.subr.bf16.mxu0 %v1042
        %1089 = vmatpush1.bf16.msra.mxu0 %v1041
        %1090 = vmatprep.subr.bf16.mxu0 %v1045
        %1091 = vmatpush1.bf16.msra.mxu0 %v1044
        %1092 = vmatprep.subr.bf16.mxu0 %v1048
        %1093 = vmatpush1.bf16.msra.mxu0 %v1047
        %1094 = vmatprep.subr.bf16.mxu0 %v1051
        %1095 = vmatpush1.bf16.msra.mxu0 %v1050
        %1096 = vmatprep.subr.bf16.mxu0 %v1054
        %1097 = vmatpush1.bf16.msra.mxu0 %v1053
        %1098 = vmatprep.subr.bf16.mxu0 %v1057
        %1099 = vmatpush1.bf16.msra.mxu0 %v1056
        %1100 = vmatprep.subr.bf16.mxu0 %v1060
        %1101 = vmatpush1.bf16.msra.mxu0 %v1059
        %1102 = vmatprep.subr.bf16.mxu0 0
        %1103 = vmatpush1.bf16.msra.mxu0 0
        %1104 = vmatprep.subr.bf16.mxu0 0
        %1105 = vmatpush1.bf16.msra.mxu0 0
        %1106 = vmatprep.subr.bf16.mxu0 0
        %1107 = vmatpush1.bf16.msra.mxu0 0
        %1108 = vmatprep.subr.bf16.mxu0 0
        %1109 = vmatpush1.bf16.msra.mxu0 0
        %1110 = vmatprep.subr.bf16.mxu0 0
        %1111 = vmatpush1.bf16.msra.mxu0 0
        %1112 = vmatprep.subr.bf16.mxu0 0
        %1113 = vmatpush1.bf16.msra.mxu0 0
        %1114 = vmatprep.subr.bf16.mxu0 0
        %1115 = vmatpush1.bf16.msra.mxu0 0
        %1116 = vmatprep.subr.bf16.mxu0 0
        %1117 = vmatpush1.bf16.msra.mxu0 0
        %1118 = vmatprep.mubr.bf16.mxu0 0
        %1119 = vmatmul.mubr.bf16.gmra.mrb[0].mxu0 %v908
        %v1120 = vpop.f32.mrb[0].mxu0
        %v1121 = vadd.f32 %v946, %v1120
        %v1122 = vpop.f32.mrb[0].mxu0
        %v1123 = vadd.f32 %v950, %v1122
        %v1124 = vpop.f32.mrb[0].mxu0
        %v1125 = vadd.f32 %v946, %v1124
        %v1126 = vpop.f32.mrb[0].mxu0
        %v1127 = vadd.f32 %v950, %v1126
        %1128 = vdwg.mxu0
        %1129 = vmatprep.subr.bf16.mxu0 0
        %1130 = vmatpush1.bf16.msra.mxu0 %v1040
        %1131 = vmatprep.subr.bf16.mxu0 0
        %1132 = vmatpush1.bf16.msra.mxu0 %v1043
        %1133 = vmatprep.subr.bf16.mxu0 0
        %1134 = vmatpush1.bf16.msra.mxu0 %v1046
        %1135 = vmatprep.subr.bf16.mxu0 0
        %1136 = vmatpush1.bf16.msra.mxu0 %v1049
        %1137 = vmatprep.subr.bf16.mxu0 0
        %1138 = vmatpush1.bf16.msra.mxu0 %v1052
        %1139 = vmatprep.subr.bf16.mxu0 0
        %1140 = vmatpush1.bf16.msra.mxu0 %v1055
        %1141 = vmatprep.subr.bf16.mxu0 0
        %1142 = vmatpush1.bf16.msra.mxu0 %v1058
        %1143 = vmatprep.subr.bf16.mxu0 0
        %1144 = vmatpush1.bf16.msra.mxu0 %v1061
        %1145 = vmatprep.subr.bf16.mxu0 0
        %1146 = vmatpush1.bf16.msra.mxu0 0
        %1147 = vmatprep.subr.bf16.mxu0 0
        %1148 = vmatpush1.bf16.msra.mxu0 0
        %1149 = vmatprep.subr.bf16.mxu0 0
        %1150 = vmatpush1.bf16.msra.mxu0 0
        %1151 = vmatprep.subr.bf16.mxu0 0
        %1152 = vmatpush1.bf16.msra.mxu0 0
        %1153 = vmatprep.subr.bf16.mxu0 0
        %1154 = vmatpush1.bf16.msra.mxu0 0
        %1155 = vmatprep.subr.bf16.mxu0 0
        %1156 = vmatpush1.bf16.msra.mxu0 0
        %1157 = vmatprep.subr.bf16.mxu0 0
        %1158 = vmatpush1.bf16.msra.mxu0 0
        %1159 = vmatprep.subr.bf16.mxu0 0
        %1160 = vmatpush1.bf16.msra.mxu0 0
        %1161 = vmatprep.mubr.bf16.mxu0 0
        %1162 = vmatmul.mubr.bf16.gmra.mrb[0].mxu0 %v908
        %v1163 = vpop.f32.mrb[0].mxu0
        %v1164 = vadd.f32 %v954, %v1163
        %v1165 = vpop.f32.mrb[0].mxu0
        %v1166 = vpop.f32.mrb[0].mxu0
        %v1167 = vadd.f32 %v954, %v1166
        %v1168 = vpop.f32.mrb[0].mxu0
        %1169 = vdwg.mxu0
        %v1170 = vld [vmem:[%s668] sm:$0xf]
        %v1171 = vld [vmem:[%s668 + $0x4] sm:$0xf]
        %v1172 = vld [vmem:[%s668 + $0x8] sm:$0xf]
        %v1173 = vld [vmem:[%s668 + $0xc] sm:$0xf]
        %v1174 = vld [vmem:[%s668 + $0x10] sm:$0xf]
        %v1175 = vld [vmem:[%s668 + $0x14] sm:$0xf]
        %v1176 = vld [vmem:[%s668 + $0x18] sm:$0xf]
        %v1177 = vld [vmem:[%s668 + $0x1c] sm:$0xf]
        %v1178 = vld [vmem:[%s668 + $0x20] sm:$0xf]
        %v1179 = vld [vmem:[%s668 + $0x24] sm:$0xf]
        %v1180 = vld [vmem:[%s668 + $0x28] sm:$0xf]
        %v1181 = vld [vmem:[%s668 + $0x2c] sm:$0xf]
        %v1182 = vld [vmem:[%s668 + $0x30] sm:$0xf]
        %v1183 = vld [vmem:[%s668 + $0x34] sm:$0xf]
        %v1184 = vld [vmem:[%s668 + $0x38] sm:$0xf]
        %v1185 = vld [vmem:[%s668 + $0x3c] sm:$0xf]
        %v1186 = vpack.c.bf16 %v1121, %v1121
        %v1187 = vpack.c.bf16 %v1123, %v1123
        %v1188 = vpack.c.bf16 %v1164, %v1164
        %vm1189 = vcmask 261120
        %v1191 = vsel %vm1189, %v1186, 0
        %v1194 = vsel %vm1189, %v1187, 0
        %1196 = vmatprep.subr.bf16.mxu0 0
        %1197 = vmatpush1.bf16.xpose.msra.mxu0 %v1194
        %1198 = vmatprep.subr.bf16.mxu0 0
        %1199 = vmatpush1.bf16.xpose.msra.mxu0 0
        %1200 = vmatprep.subr.bf16.mxu0 0
        %1201 = vmatpush1.bf16.xpose.msra.mxu0 0
        %1202 = vmatprep.subr.bf16.mxu0 0
        %1203 = vmatpush1.bf16.xpose.msra.mxu0 0
        %1204 = vmatprep.subr.bf16.mxu0 0
        %1205 = vmatpush1.bf16.xpose.msra.mxu0 0
        %1206 = vmatprep.subr.bf16.mxu0 0
        %1207 = vmatpush1.bf16.xpose.msra.mxu0 0
        %1208 = vmatprep.subr.bf16.mxu0 0
        %1209 = vmatpush1.bf16.xpose.msra.mxu0 0
        %1210 = vmatprep.subr.bf16.mxu0 0
        %1211 = vmatpush1.bf16.xpose.msra.mxu0 0
        %1212 = vmatprep.subr.bf16.mxu0 0
        %1213 = vmatpush1.bf16.xpose.msra.mxu0 0
        %1214 = vmatprep.subr.bf16.mxu0 0
        %1215 = vmatpush1.bf16.xpose.msra.mxu0 0
        %1216 = vmatprep.subr.bf16.mxu0 0
        %1217 = vmatpush1.bf16.xpose.msra.mxu0 0
        %1218 = vmatprep.subr.bf16.mxu0 0
        %1219 = vmatpush1.bf16.xpose.msra.mxu0 0
        %1220 = vmatprep.subr.bf16.mxu0 0
        %1221 = vmatpush1.bf16.xpose.msra.mxu0 0
        %1222 = vmatprep.subr.bf16.mxu0 0
        %1223 = vmatpush1.bf16.xpose.msra.mxu0 0
        %1224 = vmatprep.subr.bf16.mxu0 0
        %1225 = vmatpush1.bf16.xpose.msra.mxu0 0
        %1226 = vmatprep.subr.bf16.mxu0 0
        %1227 = vmatpush1.bf16.xpose.msra.mxu0 0
        %1228 = vmatprep.mubr.bf16.mxu0 0
        %1229 = vmatmul.mubr.bf16.gmra.mrb[0].mxu0 %v1191
        %v1230 = vpop.f32.mrb[0].mxu0
        %v1231 = vadd.f32 0.0, %v1230
        %v1232 = vpop.f32.mrb[0].mxu0
        %v1233 = vpop.f32.mrb[0].mxu0
        %v1234 = vpop.f32.mrb[0].mxu0
        %1235 = vdwg.mxu0
        %vm1236 = vcmask 64512
        %v1237 = vsel %vm1236, %v1231, -inf
        %1238 = vmax.xlane.f32.xlu0 %v1237
        %v1239 = vpop.xlane.xlu0 %1238
        %v1240 = vsub.f32 %v1231, %v1239
        %v1241 = vmul.f32 %v1240, 1.442695
        %v1242 = vpow.pop %v1241
        %v1243 = vsel %vm1236, %v1242, 0.0
        %1244 = vadd.xlane.f32.xlu0 %v1243
        %v1245 = vpop.xlane.xlu0 %1244
        %v1246 = vrcp.pop %v1245
        %v1247 = vmul.f32 %v1242, %v1246
        %v1248 = vpack.c.bf16 %v1247, %v1247
        %v1250 = vsel %vm1236, %v1248, 0
        %vm1252 = vcmask 1043456
        %v1254 = vsel %vm1252, %v1188, 0
        %1256 = vmatprep.subr.bf16.mxu0 0
        %1257 = vmatpush1.bf16.msra.mxu0 %v1254
        %1258 = vmatprep.subr.bf16.mxu0 0
        %1259 = vmatpush1.bf16.msra.mxu0 0
        %1260 = vmatprep.subr.bf16.mxu0 0
        %1261 = vmatpush1.bf16.msra.mxu0 0
        %1262 = vmatprep.subr.bf16.mxu0 0
        %1263 = vmatpush1.bf16.msra.mxu0 0
        %1264 = vmatprep.subr.bf16.mxu0 0
        %1265 = vmatpush1.bf16.msra.mxu0 0
        %1266 = vmatprep.subr.bf16.mxu0 0
        %1267 = vmatpush1.bf16.msra.mxu0 0
        %1268 = vmatprep.subr.bf16.mxu0 0
        %1269 = vmatpush1.bf16.msra.mxu0 0
        %1270 = vmatprep.subr.bf16.mxu0 0
        %1271 = vmatpush1.bf16.msra.mxu0 0
        %1272 = vmatprep.subr.bf16.mxu0 0
        %1273 = vmatpush1.bf16.msra.mxu0 0
        %1274 = vmatprep.subr.bf16.mxu0 0
        %1275 = vmatpush1.bf16.msra.mxu0 0
        %1276 = vmatprep.subr.bf16.mxu0 0
        %1277 = vmatpush1.bf16.msra.mxu0 0
        %1278 = vmatprep.subr.bf16.mxu0 0
        %1279 = vmatpush1.bf16.msra.mxu0 0
        %1280 = vmatprep.subr.bf16.mxu0 0
        %1281 = vmatpush1.bf16.msra.mxu0 0
        %1282 = vmatprep.subr.bf16.mxu0 0
        %1283 = vmatpush1.bf16.msra.mxu0 0
        %1284 = vmatprep.subr.bf16.mxu0 0
        %1285 = vmatpush1.bf16.msra.mxu0 0
        %1286 = vmatprep.subr.bf16.mxu0 0
        %1287 = vmatpush1.bf16.msra.mxu0 0
        %1288 = vmatprep.mubr.bf16.mxu0 0
        %1289 = vmatmul.mubr.bf16.gmra.mrb[0].mxu0 %v1250
        %v1290 = vpop.f32.mrb[0].mxu0
        %v1291 = vadd.f32 0.0, %v1290
        %v1292 = vpop.f32.mrb[0].mxu0
        %v1293 = vpop.f32.mrb[0].mxu0
        %v1294 = vpop.f32.mrb[0].mxu0
        %1295 = vdwg.mxu0
        %v1296 = vpack.c.bf16 %v1291, %v1291
        %1298 = vrot.lane.b32.xlu0 %v1186, 96
        %v1299 = vpop.permute.xlu0 %1298
        %1301 = vrot.lane.b32.xlu0 %v1187, 96
        %v1302 = vpop.permute.xlu0 %1301
        %v1304 = vsel %vm1189, %v1299, 0
        %v1307 = vsel %vm1189, %v1302, 0
        %1309 = vmatprep.subr.bf16.mxu0 0
        %1310 = vmatpush1.bf16.xpose.msra.mxu0 %v1307
        %1311 = vmatprep.subr.bf16.mxu0 0
        %1312 = vmatpush1.bf16.xpose.msra.mxu0 0
        %1313 = vmatprep.subr.bf16.mxu0 0
        %1314 = vmatpush1.bf16.xpose.msra.mxu0 0
        %1315 = vmatprep.subr.bf16.mxu0 0
        %1316 = vmatpush1.bf16.xpose.msra.mxu0 0
        %1317 = vmatprep.subr.bf16.mxu0 0
        %1318 = vmatpush1.bf16.xpose.msra.mxu0 0
        %1319 = vmatprep.subr.bf16.mxu0 0
        %1320 = vmatpush1.bf16.xpose.msra.mxu0 0
        %1321 = vmatprep.subr.bf16.mxu0 0
        %1322 = vmatpush1.bf16.xpose.msra.mxu0 0
        %1323 = vmatprep.subr.bf16.mxu0 0
        %1324 = vmatpush1.bf16.xpose.msra.mxu0 0
        %1325 = vmatprep.subr.bf16.mxu0 0
        %1326 = vmatpush1.bf16.xpose.msra.mxu0 0
        %1327 = vmatprep.subr.bf16.mxu0 0
        %1328 = vmatpush1.bf16.xpose.msra.mxu0 0
        %1329 = vmatprep.subr.bf16.mxu0 0
        %1330 = vmatpush1.bf16.xpose.msra.mxu0 0
        %1331 = vmatprep.subr.bf16.mxu0 0
        %1332 = vmatpush1.bf16.xpose.msra.mxu0 0
        %1333 = vmatprep.subr.bf16.mxu0 0
        %1334 = vmatpush1.bf16.xpose.msra.mxu0 0
        %1335 = vmatprep.subr.bf16.mxu0 0
        %1336 = vmatpush1.bf16.xpose.msra.mxu0 0
        %1337 = vmatprep.subr.bf16.mxu0 0
        %1338 = vmatpush1.bf16.xpose.msra.mxu0 0
        %1339 = vmatprep.subr.bf16.mxu0 0
        %1340 = vmatpush1.bf16.xpose.msra.mxu0 0
        %1341 = vmatprep.mubr.bf16.mxu0 0
        %1342 = vmatmul.mubr.bf16.gmra.mrb[0].mxu0 %v1304
        %v1343 = vpop.f32.mrb[0].mxu0
        %v1344 = vadd.f32 0.0, %v1343
        %v1345 = vpop.f32.mrb[0].mxu0
        %v1346 = vpop.f32.mrb[0].mxu0
        %v1347 = vpop.f32.mrb[0].mxu0
        %1348 = vdwg.mxu0
        %v1349 = vsel %vm1236, %v1344, -inf
        %1350 = vmax.xlane.f32.xlu0 %v1349
        %v1351 = vpop.xlane.xlu0 %1350
        %v1352 = vsub.f32 %v1344, %v1351
        %v1353 = vmul.f32 %v1352, 1.442695
        %v1354 = vpow.pop %v1353
        %v1355 = vsel %vm1236, %v1354, 0.0
        %1356 = vadd.xlane.f32.xlu0 %v1355
        %v1357 = vpop.xlane.xlu0 %1356
        %v1358 = vrcp.pop %v1357
        %v1359 = vmul.f32 %v1354, %v1358
        %v1360 = vpack.c.bf16 %v1359, %v1359
        %1362 = vrot.lane.b32.xlu0 %v1188, 96
        %v1363 = vpop.permute.xlu0 %1362
        %v1365 = vsel %vm1236, %v1360, 0
        %v1368 = vsel %vm1252, %v1363, 0
        %1370 = vmatprep.subr.bf16.mxu0 0
        %1371 = vmatpush1.bf16.msra.mxu0 %v1368
        %1372 = vmatprep.subr.bf16.mxu0 0
        %1373 = vmatpush1.bf16.msra.mxu0 0
        %1374 = vmatprep.subr.bf16.mxu0 0
        %1375 = vmatpush1.bf16.msra.mxu0 0
        %1376 = vmatprep.subr.bf16.mxu0 0
        %1377 = vmatpush1.bf16.msra.mxu0 0
        %1378 = vmatprep.subr.bf16.mxu0 0
        %1379 = vmatpush1.bf16.msra.mxu0 0
        %1380 = vmatprep.subr.bf16.mxu0 0
        %1381 = vmatpush1.bf16.msra.mxu0 0
        %1382 = vmatprep.subr.bf16.mxu0 0
        %1383 = vmatpush1.bf16.msra.mxu0 0
        %1384 = vmatprep.subr.bf16.mxu0 0
        %1385 = vmatpush1.bf16.msra.mxu0 0
        %1386 = vmatprep.subr.bf16.mxu0 0
        %1387 = vmatpush1.bf16.msra.mxu0 0
        %1388 = vmatprep.subr.bf16.mxu0 0
        %1389 = vmatpush1.bf16.msra.mxu0 0
        %1390 = vmatprep.subr.bf16.mxu0 0
        %1391 = vmatpush1.bf16.msra.mxu0 0
        %1392 = vmatprep.subr.bf16.mxu0 0
        %1393 = vmatpush1.bf16.msra.mxu0 0
        %1394 = vmatprep.subr.bf16.mxu0 0
        %1395 = vmatpush1.bf16.msra.mxu0 0
        %1396 = vmatprep.subr.bf16.mxu0 0
        %1397 = vmatpush1.bf16.msra.mxu0 0
        %1398 = vmatprep.subr.bf16.mxu0 0
        %1399 = vmatpush1.bf16.msra.mxu0 0
        %1400 = vmatprep.subr.bf16.mxu0 0
        %1401 = vmatpush1.bf16.msra.mxu0 0
        %1402 = vmatprep.mubr.bf16.mxu0 0
        %1403 = vmatmul.mubr.bf16.gmra.mrb[0].mxu0 %v1365
        %v1404 = vpop.f32.mrb[0].mxu0
        %v1405 = vadd.f32 0.0, %v1404
        %v1406 = vpop.f32.mrb[0].mxu0
        %v1407 = vpop.f32.mrb[0].mxu0
        %v1408 = vpop.f32.mrb[0].mxu0
        %1409 = vdwg.mxu0
        %v1410 = vpack.c.bf16 %v1405, %v1405
        %v1415 = vunpack.c.l.b16 %v1174
        %v1416 = vunpack.c.l.b16 %v1175
        %v1417 = vunpack.c.l.b16 %v1176
        %v1418 = vunpack.c.l.b16 %v1177
        %v1419 = vpack.c.b16 %v1416, %v1415
        %v1420 = vpack.c.b16 %v1418, %v1417
        %v1424 = vsel %vm1189, %v1410, 0
        %1426 = vmatprep.subr.bf16.mxu0 0
        %1427 = vmatpush1.bf16.msra.mxu0 %v1419
        %1428 = vmatprep.subr.bf16.mxu0 0
        %1429 = vmatpush1.bf16.msra.mxu0 %v1420
        %1430 = vmatprep.subr.bf16.mxu0 0
        %1431 = vmatpush1.bf16.msra.mxu0 0
        %1432 = vmatprep.subr.bf16.mxu0 0
        %1433 = vmatpush1.bf16.msra.mxu0 0
        %1434 = vmatprep.subr.bf16.mxu0 0
        %1435 = vmatpush1.bf16.msra.mxu0 0
        %1436 = vmatprep.subr.bf16.mxu0 0
        %1437 = vmatpush1.bf16.msra.mxu0 0
        %1438 = vmatprep.subr.bf16.mxu0 0
        %1439 = vmatpush1.bf16.msra.mxu0 0
        %1440 = vmatprep.subr.bf16.mxu0 0
        %1441 = vmatpush1.bf16.msra.mxu0 0
        %1442 = vmatprep.subr.bf16.mxu0 0
        %1443 = vmatpush1.bf16.msra.mxu0 0
        %1444 = vmatprep.subr.bf16.mxu0 0
        %1445 = vmatpush1.bf16.msra.mxu0 0
        %1446 = vmatprep.subr.bf16.mxu0 0
        %1447 = vmatpush1.bf16.msra.mxu0 0
        %1448 = vmatprep.subr.bf16.mxu0 0
        %1449 = vmatpush1.bf16.msra.mxu0 0
        %1450 = vmatprep.subr.bf16.mxu0 0
        %1451 = vmatpush1.bf16.msra.mxu0 0
        %1452 = vmatprep.subr.bf16.mxu0 0
        %1453 = vmatpush1.bf16.msra.mxu0 0
        %1454 = vmatprep.subr.bf16.mxu0 0
        %1455 = vmatpush1.bf16.msra.mxu0 0
        %1456 = vmatprep.subr.bf16.mxu0 0
        %1457 = vmatpush1.bf16.msra.mxu0 0
        %1458 = vmatprep.mubr.bf16.mxu0 0
        %1459 = vmatmul.mubr.bf16.gmra.mrb[0].mxu0 %v1424
        %v1460 = vpop.f32.mrb[0].mxu0
        %v1461 = vadd.f32 0.0, %v1460
        %v1462 = vpop.f32.mrb[0].mxu0
        %v1463 = vpop.f32.mrb[0].mxu0
        %v1464 = vpop.f32.mrb[0].mxu0
        %1465 = vdwg.mxu0
        %v1470 = vunpack.c.l.b16 %v1170
        %v1471 = vunpack.c.l.b16 %v1171
        %v1472 = vunpack.c.l.b16 %v1172
        %v1473 = vunpack.c.l.b16 %v1173
        %v1474 = vpack.c.b16 %v1471, %v1470
        %v1475 = vpack.c.b16 %v1473, %v1472
        %v1479 = vsel %vm1189, %v1296, 0
        %1481 = vmatprep.subr.bf16.mxu0 0
        %1482 = vmatpush1.bf16.msra.mxu0 %v1474
        %1483 = vmatprep.subr.bf16.mxu0 0
        %1484 = vmatpush1.bf16.msra.mxu0 %v1475
        %1485 = vmatprep.subr.bf16.mxu0 0
        %1486 = vmatpush1.bf16.msra.mxu0 0
        %1487 = vmatprep.subr.bf16.mxu0 0
        %1488 = vmatpush1.bf16.msra.mxu0 0
        %1489 = vmatprep.subr.bf16.mxu0 0
        %1490 = vmatpush1.bf16.msra.mxu0 0
        %1491 = vmatprep.subr.bf16.mxu0 0
        %1492 = vmatpush1.bf16.msra.mxu0 0
        %1493 = vmatprep.subr.bf16.mxu0 0
        %1494 = vmatpush1.bf16.msra.mxu0 0
        %1495 = vmatprep.subr.bf16.mxu0 0
        %1496 = vmatpush1.bf16.msra.mxu0 0
        %1497 = vmatprep.subr.bf16.mxu0 0
        %1498 = vmatpush1.bf16.msra.mxu0 0
        %1499 = vmatprep.subr.bf16.mxu0 0
        %1500 = vmatpush1.bf16.msra.mxu0 0
        %1501 = vmatprep.subr.bf16.mxu0 0
        %1502 = vmatpush1.bf16.msra.mxu0 0
        %1503 = vmatprep.subr.bf16.mxu0 0
        %1504 = vmatpush1.bf16.msra.mxu0 0
        %1505 = vmatprep.subr.bf16.mxu0 0
        %1506 = vmatpush1.bf16.msra.mxu0 0
        %1507 = vmatprep.subr.bf16.mxu0 0
        %1508 = vmatpush1.bf16.msra.mxu0 0
        %1509 = vmatprep.subr.bf16.mxu0 0
        %1510 = vmatpush1.bf16.msra.mxu0 0
        %1511 = vmatprep.subr.bf16.mxu0 0
        %1512 = vmatpush1.bf16.msra.mxu0 0
        %1513 = vmatprep.mubr.bf16.mxu0 0
        %1514 = vmatmul.mubr.bf16.gmra.mrb[0].mxu0 %v1479
        %v1515 = vpop.f32.mrb[0].mxu0
        %v1516 = vadd.f32 %v1461, %v1515
        %v1517 = vpop.f32.mrb[0].mxu0
        %v1518 = vpop.f32.mrb[0].mxu0
        %v1519 = vpop.f32.mrb[0].mxu0
        %1520 = vdwg.mxu0
        %1521 = vrot.lane.b32.xlu0 %v1186, 64
        %v1522 = vpop.permute.xlu0 %1521
        %1523 = vrot.lane.b32.xlu0 %v1187, 64
        %v1524 = vpop.permute.xlu0 %1523
        %v1526 = vsel %vm1189, %v1522, 0
        %v1529 = vsel %vm1189, %v1524, 0
        %1531 = vmatprep.subr.bf16.mxu0 0
        %1532 = vmatpush1.bf16.xpose.msra.mxu0 %v1529
        %1533 = vmatprep.subr.bf16.mxu0 0
        %1534 = vmatpush1.bf16.xpose.msra.mxu0 0
        %1535 = vmatprep.subr.bf16.mxu0 0
        %1536 = vmatpush1.bf16.xpose.msra.mxu0 0
        %1537 = vmatprep.subr.bf16.mxu0 0
        %1538 = vmatpush1.bf16.xpose.msra.mxu0 0
        %1539 = vmatprep.subr.bf16.mxu0 0
        %1540 = vmatpush1.bf16.xpose.msra.mxu0 0
        %1541 = vmatprep.subr.bf16.mxu0 0
        %1542 = vmatpush1.bf16.xpose.msra.mxu0 0
        %1543 = vmatprep.subr.bf16.mxu0 0
        %1544 = vmatpush1.bf16.xpose.msra.mxu0 0
        %1545 = vmatprep.subr.bf16.mxu0 0
        %1546 = vmatpush1.bf16.xpose.msra.mxu0 0
        %1547 = vmatprep.subr.bf16.mxu0 0
        %1548 = vmatpush1.bf16.xpose.msra.mxu0 0
        %1549 = vmatprep.subr.bf16.mxu0 0
        %1550 = vmatpush1.bf16.xpose.msra.mxu0 0
        %1551 = vmatprep.subr.bf16.mxu0 0
        %1552 = vmatpush1.bf16.xpose.msra.mxu0 0
        %1553 = vmatprep.subr.bf16.mxu0 0
        %1554 = vmatpush1.bf16.xpose.msra.mxu0 0
        %1555 = vmatprep.subr.bf16.mxu0 0
        %1556 = vmatpush1.bf16.xpose.msra.mxu0 0
        %1557 = vmatprep.subr.bf16.mxu0 0
        %1558 = vmatpush1.bf16.xpose.msra.mxu0 0
        %1559 = vmatprep.subr.bf16.mxu0 0
        %1560 = vmatpush1.bf16.xpose.msra.mxu0 0
        %1561 = vmatprep.subr.bf16.mxu0 0
        %1562 = vmatpush1.bf16.xpose.msra.mxu0 0
        %1563 = vmatprep.mubr.bf16.mxu0 0
        %1564 = vmatmul.mubr.bf16.gmra.mrb[0].mxu0 %v1526
        %v1565 = vpop.f32.mrb[0].mxu0
        %v1566 = vadd.f32 0.0, %v1565
        %v1567 = vpop.f32.mrb[0].mxu0
        %v1568 = vpop.f32.mrb[0].mxu0
        %v1569 = vpop.f32.mrb[0].mxu0
        %1570 = vdwg.mxu0
        %v1571 = vsel %vm1236, %v1566, -inf
        %1572 = vmax.xlane.f32.xlu0 %v1571
        %v1573 = vpop.xlane.xlu0 %1572
        %v1574 = vsub.f32 %v1566, %v1573
        %v1575 = vmul.f32 %v1574, 1.442695
        %v1576 = vpow.pop %v1575
        %v1577 = vsel %vm1236, %v1576, 0.0
        %1578 = vadd.xlane.f32.xlu0 %v1577
        %v1579 = vpop.xlane.xlu0 %1578
        %v1580 = vrcp.pop %v1579
        %v1581 = vmul.f32 %v1576, %v1580
        %v1582 = vpack.c.bf16 %v1581, %v1581
        %1583 = vrot.lane.b32.xlu0 %v1188, 64
        %v1584 = vpop.permute.xlu0 %1583
        %v1586 = vsel %vm1236, %v1582, 0
        %v1589 = vsel %vm1252, %v1584, 0
        %1591 = vmatprep.subr.bf16.mxu0 0
        %1592 = vmatpush1.bf16.msra.mxu0 %v1589
        %1593 = vmatprep.subr.bf16.mxu0 0
        %1594 = vmatpush1.bf16.msra.mxu0 0
        %1595 = vmatprep.subr.bf16.mxu0 0
        %1596 = vmatpush1.bf16.msra.mxu0 0
        %1597 = vmatprep.subr.bf16.mxu0 0
        %1598 = vmatpush1.bf16.msra.mxu0 0
        %1599 = vmatprep.subr.bf16.mxu0 0
        %1600 = vmatpush1.bf16.msra.mxu0 0
        %1601 = vmatprep.subr.bf16.mxu0 0
        %1602 = vmatpush1.bf16.msra.mxu0 0
        %1603 = vmatprep.subr.bf16.mxu0 0
        %1604 = vmatpush1.bf16.msra.mxu0 0
        %1605 = vmatprep.subr.bf16.mxu0 0
        %1606 = vmatpush1.bf16.msra.mxu0 0
        %1607 = vmatprep.subr.bf16.mxu0 0
        %1608 = vmatpush1.bf16.msra.mxu0 0
        %1609 = vmatprep.subr.bf16.mxu0 0
        %1610 = vmatpush1.bf16.msra.mxu0 0
        %1611 = vmatprep.subr.bf16.mxu0 0
        %1612 = vmatpush1.bf16.msra.mxu0 0
        %1613 = vmatprep.subr.bf16.mxu0 0
        %1614 = vmatpush1.bf16.msra.mxu0 0
        %1615 = vmatprep.subr.bf16.mxu0 0
        %1616 = vmatpush1.bf16.msra.mxu0 0
        %1617 = vmatprep.subr.bf16.mxu0 0
        %1618 = vmatpush1.bf16.msra.mxu0 0
        %1619 = vmatprep.subr.bf16.mxu0 0
        %1620 = vmatpush1.bf16.msra.mxu0 0
        %1621 = vmatprep.subr.bf16.mxu0 0
        %1622 = vmatpush1.bf16.msra.mxu0 0
        %1623 = vmatprep.mubr.bf16.mxu0 0
        %1624 = vmatmul.mubr.bf16.gmra.mrb[0].mxu0 %v1586
        %v1625 = vpop.f32.mrb[0].mxu0
        %v1626 = vadd.f32 0.0, %v1625
        %v1627 = vpop.f32.mrb[0].mxu0
        %v1628 = vpop.f32.mrb[0].mxu0
        %v1629 = vpop.f32.mrb[0].mxu0
        %1630 = vdwg.mxu0
        %v1631 = vpack.c.bf16 %v1626, %v1626
        %v1636 = vunpack.c.l.b16 %v1178
        %v1637 = vunpack.c.l.b16 %v1179
        %v1638 = vunpack.c.l.b16 %v1180
        %v1639 = vunpack.c.l.b16 %v1181
        %v1640 = vpack.c.b16 %v1637, %v1636
        %v1641 = vpack.c.b16 %v1639, %v1638
        %v1645 = vsel %vm1189, %v1631, 0
        %1647 = vmatprep.subr.bf16.mxu0 0
        %1648 = vmatpush1.bf16.msra.mxu0 %v1640
        %1649 = vmatprep.subr.bf16.mxu0 0
        %1650 = vmatpush1.bf16.msra.mxu0 %v1641
        %1651 = vmatprep.subr.bf16.mxu0 0
        %1652 = vmatpush1.bf16.msra.mxu0 0
        %1653 = vmatprep.subr.bf16.mxu0 0
        %1654 = vmatpush1.bf16.msra.mxu0 0
        %1655 = vmatprep.subr.bf16.mxu0 0
        %1656 = vmatpush1.bf16.msra.mxu0 0
        %1657 = vmatprep.subr.bf16.mxu0 0
        %1658 = vmatpush1.bf16.msra.mxu0 0
        %1659 = vmatprep.subr.bf16.mxu0 0
        %1660 = vmatpush1.bf16.msra.mxu0 0
        %1661 = vmatprep.subr.bf16.mxu0 0
        %1662 = vmatpush1.bf16.msra.mxu0 0
        %1663 = vmatprep.subr.bf16.mxu0 0
        %1664 = vmatpush1.bf16.msra.mxu0 0
        %1665 = vmatprep.subr.bf16.mxu0 0
        %1666 = vmatpush1.bf16.msra.mxu0 0
        %1667 = vmatprep.subr.bf16.mxu0 0
        %1668 = vmatpush1.bf16.msra.mxu0 0
        %1669 = vmatprep.subr.bf16.mxu0 0
        %1670 = vmatpush1.bf16.msra.mxu0 0
        %1671 = vmatprep.subr.bf16.mxu0 0
        %1672 = vmatpush1.bf16.msra.mxu0 0
        %1673 = vmatprep.subr.bf16.mxu0 0
        %1674 = vmatpush1.bf16.msra.mxu0 0
        %1675 = vmatprep.subr.bf16.mxu0 0
        %1676 = vmatpush1.bf16.msra.mxu0 0
        %1677 = vmatprep.subr.bf16.mxu0 0
        %1678 = vmatpush1.bf16.msra.mxu0 0
        %1679 = vmatprep.mubr.bf16.mxu0 0
        %1680 = vmatmul.mubr.bf16.gmra.mrb[0].mxu0 %v1645
        %v1681 = vpop.f32.mrb[0].mxu0
        %v1682 = vadd.f32 0.0, %v1681
        %v1683 = vpop.f32.mrb[0].mxu0
        %v1684 = vpop.f32.mrb[0].mxu0
        %v1685 = vpop.f32.mrb[0].mxu0
        %1686 = vdwg.mxu0
        %v1687 = vadd.f32 %v1516, %v1682
        %1688 = vrot.lane.b32.xlu0 %v1186, 32
        %v1689 = vpop.permute.xlu0 %1688
        %1690 = vrot.lane.b32.xlu0 %v1187, 32
        %v1691 = vpop.permute.xlu0 %1690
        %v1693 = vsel %vm1189, %v1689, 0
        %v1696 = vsel %vm1189, %v1691, 0
        %1698 = vmatprep.subr.bf16.mxu0 0
        %1699 = vmatpush1.bf16.xpose.msra.mxu0 %v1696
        %1700 = vmatprep.subr.bf16.mxu0 0
        %1701 = vmatpush1.bf16.xpose.msra.mxu0 0
        %1702 = vmatprep.subr.bf16.mxu0 0
        %1703 = vmatpush1.bf16.xpose.msra.mxu0 0
        %1704 = vmatprep.subr.bf16.mxu0 0
        %1705 = vmatpush1.bf16.xpose.msra.mxu0 0
        %1706 = vmatprep.subr.bf16.mxu0 0
        %1707 = vmatpush1.bf16.xpose.msra.mxu0 0
        %1708 = vmatprep.subr.bf16.mxu0 0
        %1709 = vmatpush1.bf16.xpose.msra.mxu0 0
        %1710 = vmatprep.subr.bf16.mxu0 0
        %1711 = vmatpush1.bf16.xpose.msra.mxu0 0
        %1712 = vmatprep.subr.bf16.mxu0 0
        %1713 = vmatpush1.bf16.xpose.msra.mxu0 0
        %1714 = vmatprep.subr.bf16.mxu0 0
        %1715 = vmatpush1.bf16.xpose.msra.mxu0 0
        %1716 = vmatprep.subr.bf16.mxu0 0
        %1717 = vmatpush1.bf16.xpose.msra.mxu0 0
        %1718 = vmatprep.subr.bf16.mxu0 0
        %1719 = vmatpush1.bf16.xpose.msra.mxu0 0
        %1720 = vmatprep.subr.bf16.mxu0 0
        %1721 = vmatpush1.bf16.xpose.msra.mxu0 0
        %1722 = vmatprep.subr.bf16.mxu0 0
        %1723 = vmatpush1.bf16.xpose.msra.mxu0 0
        %1724 = vmatprep.subr.bf16.mxu0 0
        %1725 = vmatpush1.bf16.xpose.msra.mxu0 0
        %1726 = vmatprep.subr.bf16.mxu0 0
        %1727 = vmatpush1.bf16.xpose.msra.mxu0 0
        %1728 = vmatprep.subr.bf16.mxu0 0
        %1729 = vmatpush1.bf16.xpose.msra.mxu0 0
        %1730 = vmatprep.mubr.bf16.mxu0 0
        %1731 = vmatmul.mubr.bf16.gmra.mrb[0].mxu0 %v1693
        %v1732 = vpop.f32.mrb[0].mxu0
        %v1733 = vadd.f32 0.0, %v1732
        %v1734 = vpop.f32.mrb[0].mxu0
        %v1735 = vpop.f32.mrb[0].mxu0
        %v1736 = vpop.f32.mrb[0].mxu0
        %1737 = vdwg.mxu0
        %v1738 = vsel %vm1236, %v1733, -inf
        %1739 = vmax.xlane.f32.xlu0 %v1738
        %v1740 = vpop.xlane.xlu0 %1739
        %v1741 = vsub.f32 %v1733, %v1740
        %v1742 = vmul.f32 %v1741, 1.442695
        %v1743 = vpow.pop %v1742
        %v1744 = vsel %vm1236, %v1743, 0.0
        %1745 = vadd.xlane.f32.xlu0 %v1744
        %v1746 = vpop.xlane.xlu0 %1745
        %v1747 = vrcp.pop %v1746
        %v1748 = vmul.f32 %v1743, %v1747
        %v1749 = vpack.c.bf16 %v1748, %v1748
        %1750 = vrot.lane.b32.xlu0 %v1188, 32
        %v1751 = vpop.permute.xlu0 %1750
        %v1753 = vsel %vm1236, %v1749, 0
        %v1756 = vsel %vm1252, %v1751, 0
        %1758 = vmatprep.subr.bf16.mxu0 0
        %1759 = vmatpush1.bf16.msra.mxu0 %v1756
        %1760 = vmatprep.subr.bf16.mxu0 0
        %1761 = vmatpush1.bf16.msra.mxu0 0
        %1762 = vmatprep.subr.bf16.mxu0 0
        %1763 = vmatpush1.bf16.msra.mxu0 0
        %1764 = vmatprep.subr.bf16.mxu0 0
        %1765 = vmatpush1.bf16.msra.mxu0 0
        %1766 = vmatprep.subr.bf16.mxu0 0
        %1767 = vmatpush1.bf16.msra.mxu0 0
        %1768 = vmatprep.subr.bf16.mxu0 0
        %1769 = vmatpush1.bf16.msra.mxu0 0
        %1770 = vmatprep.subr.bf16.mxu0 0
        %1771 = vmatpush1.bf16.msra.mxu0 0
        %1772 = vmatprep.subr.bf16.mxu0 0
        %1773 = vmatpush1.bf16.msra.mxu0 0
        %1774 = vmatprep.subr.bf16.mxu0 0
        %1775 = vmatpush1.bf16.msra.mxu0 0
        %1776 = vmatprep.subr.bf16.mxu0 0
        %1777 = vmatpush1.bf16.msra.mxu0 0
        %1778 = vmatprep.subr.bf16.mxu0 0
        %1779 = vmatpush1.bf16.msra.mxu0 0
        %1780 = vmatprep.subr.bf16.mxu0 0
        %1781 = vmatpush1.bf16.msra.mxu0 0
        %1782 = vmatprep.subr.bf16.mxu0 0
        %1783 = vmatpush1.bf16.msra.mxu0 0
        %1784 = vmatprep.subr.bf16.mxu0 0
        %1785 = vmatpush1.bf16.msra.mxu0 0
        %1786 = vmatprep.subr.bf16.mxu0 0
        %1787 = vmatpush1.bf16.msra.mxu0 0
        %1788 = vmatprep.subr.bf16.mxu0 0
        %1789 = vmatpush1.bf16.msra.mxu0 0
        %1790 = vmatprep.mubr.bf16.mxu0 0
        %1791 = vmatmul.mubr.bf16.gmra.mrb[0].mxu0 %v1753
        %v1792 = vpop.f32.mrb[0].mxu0
        %v1793 = vadd.f32 0.0, %v1792
        %v1794 = vpop.f32.mrb[0].mxu0
        %v1795 = vpop.f32.mrb[0].mxu0
        %v1796 = vpop.f32.mrb[0].mxu0
        %1797 = vdwg.mxu0
        %v1798 = vpack.c.bf16 %v1793, %v1793
        %v1803 = vunpack.c.l.b16 %v1182
        %v1804 = vunpack.c.l.b16 %v1183
        %v1805 = vunpack.c.l.b16 %v1184
        %v1806 = vunpack.c.l.b16 %v1185
        %v1807 = vpack.c.b16 %v1804, %v1803
        %v1808 = vpack.c.b16 %v1806, %v1805
        %v1812 = vsel %vm1189, %v1798, 0
        %1814 = vmatprep.subr.bf16.mxu0 0
        %1815 = vmatpush1.bf16.msra.mxu0 %v1807
        %1816 = vmatprep.subr.bf16.mxu0 0
        %1817 = vmatpush1.bf16.msra.mxu0 %v1808
        %1818 = vmatprep.subr.bf16.mxu0 0
        %1819 = vmatpush1.bf16.msra.mxu0 0
        %1820 = vmatprep.subr.bf16.mxu0 0
        %1821 = vmatpush1.bf16.msra.mxu0 0
        %1822 = vmatprep.subr.bf16.mxu0 0
        %1823 = vmatpush1.bf16.msra.mxu0 0
        %1824 = vmatprep.subr.bf16.mxu0 0
        %1825 = vmatpush1.bf16.msra.mxu0 0
        %1826 = vmatprep.subr.bf16.mxu0 0
        %1827 = vmatpush1.bf16.msra.mxu0 0
        %1828 = vmatprep.subr.bf16.mxu0 0
        %1829 = vmatpush1.bf16.msra.mxu0 0
        %1830 = vmatprep.subr.bf16.mxu0 0
        %1831 = vmatpush1.bf16.msra.mxu0 0
        %1832 = vmatprep.subr.bf16.mxu0 0
        %1833 = vmatpush1.bf16.msra.mxu0 0
        %1834 = vmatprep.subr.bf16.mxu0 0
        %1835 = vmatpush1.bf16.msra.mxu0 0
        %1836 = vmatprep.subr.bf16.mxu0 0
        %1837 = vmatpush1.bf16.msra.mxu0 0
        %1838 = vmatprep.subr.bf16.mxu0 0
        %1839 = vmatpush1.bf16.msra.mxu0 0
        %1840 = vmatprep.subr.bf16.mxu0 0
        %1841 = vmatpush1.bf16.msra.mxu0 0
        %1842 = vmatprep.subr.bf16.mxu0 0
        %1843 = vmatpush1.bf16.msra.mxu0 0
        %1844 = vmatprep.subr.bf16.mxu0 0
        %1845 = vmatpush1.bf16.msra.mxu0 0
        %1846 = vmatprep.mubr.bf16.mxu0 0
        %1847 = vmatmul.mubr.bf16.gmra.mrb[0].mxu0 %v1812
        %v1848 = vpop.f32.mrb[0].mxu0
        %v1849 = vadd.f32 0.0, %v1848
        %v1850 = vpop.f32.mrb[0].mxu0
        %v1851 = vpop.f32.mrb[0].mxu0
        %v1852 = vpop.f32.mrb[0].mxu0
        %1853 = vdwg.mxu0
        %v1854 = vadd.f32 %v1687, %v1849
        %v1855 = vpack.c.bf16 %v1125, %v1125
        %v1856 = vpack.c.bf16 %v1127, %v1127
        %v1857 = vpack.c.bf16 %v1167, %v1167
        %v1859 = vsel %vm1189, %v1855, 0
        %v1862 = vsel %vm1189, %v1856, 0
        %1864 = vmatprep.subr.bf16.mxu0 0
        %1865 = vmatpush1.bf16.xpose.msra.mxu0 %v1862
        %1866 = vmatprep.subr.bf16.mxu0 0
        %1867 = vmatpush1.bf16.xpose.msra.mxu0 0
        %1868 = vmatprep.subr.bf16.mxu0 0
        %1869 = vmatpush1.bf16.xpose.msra.mxu0 0
        %1870 = vmatprep.subr.bf16.mxu0 0
        %1871 = vmatpush1.bf16.xpose.msra.mxu0 0
        %1872 = vmatprep.subr.bf16.mxu0 0
        %1873 = vmatpush1.bf16.xpose.msra.mxu0 0
        %1874 = vmatprep.subr.bf16.mxu0 0
        %1875 = vmatpush1.bf16.xpose.msra.mxu0 0
        %1876 = vmatprep.subr.bf16.mxu0 0
        %1877 = vmatpush1.bf16.xpose.msra.mxu0 0
        %1878 = vmatprep.subr.bf16.mxu0 0
        %1879 = vmatpush1.bf16.xpose.msra.mxu0 0
        %1880 = vmatprep.subr.bf16.mxu0 0
        %1881 = vmatpush1.bf16.xpose.msra.mxu0 0
        %1882 = vmatprep.subr.bf16.mxu0 0
        %1883 = vmatpush1.bf16.xpose.msra.mxu0 0
        %1884 = vmatprep.subr.bf16.mxu0 0
        %1885 = vmatpush1.bf16.xpose.msra.mxu0 0
        %1886 = vmatprep.subr.bf16.mxu0 0
        %1887 = vmatpush1.bf16.xpose.msra.mxu0 0
        %1888 = vmatprep.subr.bf16.mxu0 0
        %1889 = vmatpush1.bf16.xpose.msra.mxu0 0
        %1890 = vmatprep.subr.bf16.mxu0 0
        %1891 = vmatpush1.bf16.xpose.msra.mxu0 0
        %1892 = vmatprep.subr.bf16.mxu0 0
        %1893 = vmatpush1.bf16.xpose.msra.mxu0 0
        %1894 = vmatprep.subr.bf16.mxu0 0
        %1895 = vmatpush1.bf16.xpose.msra.mxu0 0
        %1896 = vmatprep.mubr.bf16.mxu0 0
        %1897 = vmatmul.mubr.bf16.gmra.mrb[0].mxu0 %v1859
        %v1898 = vpop.f32.mrb[0].mxu0
        %v1899 = vadd.f32 0.0, %v1898
        %v1900 = vpop.f32.mrb[0].mxu0
        %v1901 = vpop.f32.mrb[0].mxu0
        %v1902 = vpop.f32.mrb[0].mxu0
        %1903 = vdwg.mxu0
        %v1904 = vsel %vm1236, %v1899, -inf
        %1905 = vmax.xlane.f32.xlu0 %v1904
        %v1906 = vpop.xlane.xlu0 %1905
        %v1907 = vsub.f32 %v1899, %v1906
        %v1908 = vmul.f32 %v1907, 1.442695
        %v1909 = vpow.pop %v1908
        %v1910 = vsel %vm1236, %v1909, 0.0
        %1911 = vadd.xlane.f32.xlu0 %v1910
        %v1912 = vpop.xlane.xlu0 %1911
        %v1913 = vrcp.pop %v1912
        %v1914 = vmul.f32 %v1909, %v1913
        %v1915 = vpack.c.bf16 %v1914, %v1914
        %v1917 = vsel %vm1236, %v1915, 0
        %v1920 = vsel %vm1252, %v1857, 0
        %1922 = vmatprep.subr.bf16.mxu0 0
        %1923 = vmatpush1.bf16.msra.mxu0 %v1920
        %1924 = vmatprep.subr.bf16.mxu0 0
        %1925 = vmatpush1.bf16.msra.mxu0 0
        %1926 = vmatprep.subr.bf16.mxu0 0
        %1927 = vmatpush1.bf16.msra.mxu0 0
        %1928 = vmatprep.subr.bf16.mxu0 0
        %1929 = vmatpush1.bf16.msra.mxu0 0
        %1930 = vmatprep.subr.bf16.mxu0 0
        %1931 = vmatpush1.bf16.msra.mxu0 0
        %1932 = vmatprep.subr.bf16.mxu0 0
        %1933 = vmatpush1.bf16.msra.mxu0 0
        %1934 = vmatprep.subr.bf16.mxu0 0
        %1935 = vmatpush1.bf16.msra.mxu0 0
        %1936 = vmatprep.subr.bf16.mxu0 0
        %1937 = vmatpush1.bf16.msra.mxu0 0
        %1938 = vmatprep.subr.bf16.mxu0 0
        %1939 = vmatpush1.bf16.msra.mxu0 0
        %1940 = vmatprep.subr.bf16.mxu0 0
        %1941 = vmatpush1.bf16.msra.mxu0 0
        %1942 = vmatprep.subr.bf16.mxu0 0
        %1943 = vmatpush1.bf16.msra.mxu0 0
        %1944 = vmatprep.subr.bf16.mxu0 0
        %1945 = vmatpush1.bf16.msra.mxu0 0
        %1946 = vmatprep.subr.bf16.mxu0 0
        %1947 = vmatpush1.bf16.msra.mxu0 0
        %1948 = vmatprep.subr.bf16.mxu0 0
        %1949 = vmatpush1.bf16.msra.mxu0 0
        %1950 = vmatprep.subr.bf16.mxu0 0
        %1951 = vmatpush1.bf16.msra.mxu0 0
        %1952 = vmatprep.subr.bf16.mxu0 0
        %1953 = vmatpush1.bf16.msra.mxu0 0
        %1954 = vmatprep.mubr.bf16.mxu0 0
        %1955 = vmatmul.mubr.bf16.gmra.mrb[0].mxu0 %v1917
        %v1956 = vpop.f32.mrb[0].mxu0
        %v1957 = vadd.f32 0.0, %v1956
        %v1958 = vpop.f32.mrb[0].mxu0
        %v1959 = vpop.f32.mrb[0].mxu0
        %v1960 = vpop.f32.mrb[0].mxu0
        %1961 = vdwg.mxu0
        %v1962 = vpack.c.bf16 %v1957, %v1957
        %1964 = vrot.lane.b32.xlu0 %v1855, 96
        %v1965 = vpop.permute.xlu0 %1964
        %1967 = vrot.lane.b32.xlu0 %v1856, 96
        %v1968 = vpop.permute.xlu0 %1967
        %v1970 = vsel %vm1189, %v1965, 0
        %v1973 = vsel %vm1189, %v1968, 0
        %1975 = vmatprep.subr.bf16.mxu0 0
        %1976 = vmatpush1.bf16.xpose.msra.mxu0 %v1973
        %1977 = vmatprep.subr.bf16.mxu0 0
        %1978 = vmatpush1.bf16.xpose.msra.mxu0 0
        %1979 = vmatprep.subr.bf16.mxu0 0
        %1980 = vmatpush1.bf16.xpose.msra.mxu0 0
        %1981 = vmatprep.subr.bf16.mxu0 0
        %1982 = vmatpush1.bf16.xpose.msra.mxu0 0
        %1983 = vmatprep.subr.bf16.mxu0 0
        %1984 = vmatpush1.bf16.xpose.msra.mxu0 0
        %1985 = vmatprep.subr.bf16.mxu0 0
        %1986 = vmatpush1.bf16.xpose.msra.mxu0 0
        %1987 = vmatprep.subr.bf16.mxu0 0
        %1988 = vmatpush1.bf16.xpose.msra.mxu0 0
        %1989 = vmatprep.subr.bf16.mxu0 0
        %1990 = vmatpush1.bf16.xpose.msra.mxu0 0
        %1991 = vmatprep.subr.bf16.mxu0 0
        %1992 = vmatpush1.bf16.xpose.msra.mxu0 0
        %1993 = vmatprep.subr.bf16.mxu0 0
        %1994 = vmatpush1.bf16.xpose.msra.mxu0 0
        %1995 = vmatprep.subr.bf16.mxu0 0
        %1996 = vmatpush1.bf16.xpose.msra.mxu0 0
        %1997 = vmatprep.subr.bf16.mxu0 0
        %1998 = vmatpush1.bf16.xpose.msra.mxu0 0
        %1999 = vmatprep.subr.bf16.mxu0 0
        %2000 = vmatpush1.bf16.xpose.msra.mxu0 0
        %2001 = vmatprep.subr.bf16.mxu0 0
        %2002 = vmatpush1.bf16.xpose.msra.mxu0 0
        %2003 = vmatprep.subr.bf16.mxu0 0
        %2004 = vmatpush1.bf16.xpose.msra.mxu0 0
        %2005 = vmatprep.subr.bf16.mxu0 0
        %2006 = vmatpush1.bf16.xpose.msra.mxu0 0
        %2007 = vmatprep.mubr.bf16.mxu0 0
        %2008 = vmatmul.mubr.bf16.gmra.mrb[0].mxu0 %v1970
        %v2009 = vpop.f32.mrb[0].mxu0
        %v2010 = vadd.f32 0.0, %v2009
        %v2011 = vpop.f32.mrb[0].mxu0
        %v2012 = vpop.f32.mrb[0].mxu0
        %v2013 = vpop.f32.mrb[0].mxu0
        %2014 = vdwg.mxu0
        %v2015 = vsel %vm1236, %v2010, -inf
        %2016 = vmax.xlane.f32.xlu0 %v2015
        %v2017 = vpop.xlane.xlu0 %2016
        %v2018 = vsub.f32 %v2010, %v2017
        %v2019 = vmul.f32 %v2018, 1.442695
        %v2020 = vpow.pop %v2019
        %v2021 = vsel %vm1236, %v2020, 0.0
        %2022 = vadd.xlane.f32.xlu0 %v2021
        %v2023 = vpop.xlane.xlu0 %2022
        %v2024 = vrcp.pop %v2023
        %v2025 = vmul.f32 %v2020, %v2024
        %v2026 = vpack.c.bf16 %v2025, %v2025
        %2028 = vrot.lane.b32.xlu0 %v1857, 96
        %v2029 = vpop.permute.xlu0 %2028
        %v2031 = vsel %vm1236, %v2026, 0
        %v2034 = vsel %vm1252, %v2029, 0
        %2036 = vmatprep.subr.bf16.mxu0 0
        %2037 = vmatpush1.bf16.msra.mxu0 %v2034
        %2038 = vmatprep.subr.bf16.mxu0 0
        %2039 = vmatpush1.bf16.msra.mxu0 0
        %2040 = vmatprep.subr.bf16.mxu0 0
        %2041 = vmatpush1.bf16.msra.mxu0 0
        %2042 = vmatprep.subr.bf16.mxu0 0
        %2043 = vmatpush1.bf16.msra.mxu0 0
        %2044 = vmatprep.subr.bf16.mxu0 0
        %2045 = vmatpush1.bf16.msra.mxu0 0
        %2046 = vmatprep.subr.bf16.mxu0 0
        %2047 = vmatpush1.bf16.msra.mxu0 0
        %2048 = vmatprep.subr.bf16.mxu0 0
        %2049 = vmatpush1.bf16.msra.mxu0 0
        %2050 = vmatprep.subr.bf16.mxu0 0
        %2051 = vmatpush1.bf16.msra.mxu0 0
        %2052 = vmatprep.subr.bf16.mxu0 0
        %2053 = vmatpush1.bf16.msra.mxu0 0
        %2054 = vmatprep.subr.bf16.mxu0 0
        %2055 = vmatpush1.bf16.msra.mxu0 0
        %2056 = vmatprep.subr.bf16.mxu0 0
        %2057 = vmatpush1.bf16.msra.mxu0 0
        %2058 = vmatprep.subr.bf16.mxu0 0
        %2059 = vmatpush1.bf16.msra.mxu0 0
        %2060 = vmatprep.subr.bf16.mxu0 0
        %2061 = vmatpush1.bf16.msra.mxu0 0
        %2062 = vmatprep.subr.bf16.mxu0 0
        %2063 = vmatpush1.bf16.msra.mxu0 0
        %2064 = vmatprep.subr.bf16.mxu0 0
        %2065 = vmatpush1.bf16.msra.mxu0 0
        %2066 = vmatprep.subr.bf16.mxu0 0
        %2067 = vmatpush1.bf16.msra.mxu0 0
        %2068 = vmatprep.mubr.bf16.mxu0 0
        %2069 = vmatmul.mubr.bf16.gmra.mrb[0].mxu0 %v2031
        %v2070 = vpop.f32.mrb[0].mxu0
        %v2071 = vadd.f32 0.0, %v2070
        %v2072 = vpop.f32.mrb[0].mxu0
        %v2073 = vpop.f32.mrb[0].mxu0
        %v2074 = vpop.f32.mrb[0].mxu0
        %2075 = vdwg.mxu0
        %v2076 = vpack.c.bf16 %v2071, %v2071
        %v2078 = vsel %vm1189, %v2076, 0
        %2080 = vmatprep.subr.bf16.mxu0 0
        %2081 = vmatpush1.bf16.msra.mxu0 %v1419
        %2082 = vmatprep.subr.bf16.mxu0 0
        %2083 = vmatpush1.bf16.msra.mxu0 %v1420
        %2084 = vmatprep.subr.bf16.mxu0 0
        %2085 = vmatpush1.bf16.msra.mxu0 0
        %2086 = vmatprep.subr.bf16.mxu0 0
        %2087 = vmatpush1.bf16.msra.mxu0 0
        %2088 = vmatprep.subr.bf16.mxu0 0
        %2089 = vmatpush1.bf16.msra.mxu0 0
        %2090 = vmatprep.subr.bf16.mxu0 0
        %2091 = vmatpush1.bf16.msra.mxu0 0
        %2092 = vmatprep.subr.bf16.mxu0 0
        %2093 = vmatpush1.bf16.msra.mxu0 0
        %2094 = vmatprep.subr.bf16.mxu0 0
        %2095 = vmatpush1.bf16.msra.mxu0 0
        %2096 = vmatprep.subr.bf16.mxu0 0
        %2097 = vmatpush1.bf16.msra.mxu0 0
        %2098 = vmatprep.subr.bf16.mxu0 0
        %2099 = vmatpush1.bf16.msra.mxu0 0
        %2100 = vmatprep.subr.bf16.mxu0 0
        %2101 = vmatpush1.bf16.msra.mxu0 0
        %2102 = vmatprep.subr.bf16.mxu0 0
        %2103 = vmatpush1.bf16.msra.mxu0 0
        %2104 = vmatprep.subr.bf16.mxu0 0
        %2105 = vmatpush1.bf16.msra.mxu0 0
        %2106 = vmatprep.subr.bf16.mxu0 0
        %2107 = vmatpush1.bf16.msra.mxu0 0
        %2108 = vmatprep.subr.bf16.mxu0 0
        %2109 = vmatpush1.bf16.msra.mxu0 0
        %2110 = vmatprep.subr.bf16.mxu0 0
        %2111 = vmatpush1.bf16.msra.mxu0 0
        %2112 = vmatprep.mubr.bf16.mxu0 0
        %2113 = vmatmul.mubr.bf16.gmra.mrb[0].mxu0 %v2078
        %v2114 = vpop.f32.mrb[0].mxu0
        %v2115 = vadd.f32 0.0, %v2114
        %v2116 = vpop.f32.mrb[0].mxu0
        %v2117 = vpop.f32.mrb[0].mxu0
        %v2118 = vpop.f32.mrb[0].mxu0
        %2119 = vdwg.mxu0
        %v2121 = vsel %vm1189, %v1962, 0
        %2123 = vmatprep.subr.bf16.mxu0 0
        %2124 = vmatpush1.bf16.msra.mxu0 %v1474
        %2125 = vmatprep.subr.bf16.mxu0 0
        %2126 = vmatpush1.bf16.msra.mxu0 %v1475
        %2127 = vmatprep.subr.bf16.mxu0 0
        %2128 = vmatpush1.bf16.msra.mxu0 0
        %2129 = vmatprep.subr.bf16.mxu0 0
        %2130 = vmatpush1.bf16.msra.mxu0 0
        %2131 = vmatprep.subr.bf16.mxu0 0
        %2132 = vmatpush1.bf16.msra.mxu0 0
        %2133 = vmatprep.subr.bf16.mxu0 0
        %2134 = vmatpush1.bf16.msra.mxu0 0
        %2135 = vmatprep.subr.bf16.mxu0 0
        %2136 = vmatpush1.bf16.msra.mxu0 0
        %2137 = vmatprep.subr.bf16.mxu0 0
        %2138 = vmatpush1.bf16.msra.mxu0 0
        %2139 = vmatprep.subr.bf16.mxu0 0
        %2140 = vmatpush1.bf16.msra.mxu0 0
        %2141 = vmatprep.subr.bf16.mxu0 0
        %2142 = vmatpush1.bf16.msra.mxu0 0
        %2143 = vmatprep.subr.bf16.mxu0 0
        %2144 = vmatpush1.bf16.msra.mxu0 0
        %2145 = vmatprep.subr.bf16.mxu0 0
        %2146 = vmatpush1.bf16.msra.mxu0 0
        %2147 = vmatprep.subr.bf16.mxu0 0
        %2148 = vmatpush1.bf16.msra.mxu0 0
        %2149 = vmatprep.subr.bf16.mxu0 0
        %2150 = vmatpush1.bf16.msra.mxu0 0
        %2151 = vmatprep.subr.bf16.mxu0 0
        %2152 = vmatpush1.bf16.msra.mxu0 0
        %2153 = vmatprep.subr.bf16.mxu0 0
        %2154 = vmatpush1.bf16.msra.mxu0 0
        %2155 = vmatprep.mubr.bf16.mxu0 0
        %2156 = vmatmul.mubr.bf16.gmra.mrb[0].mxu0 %v2121
        %v2157 = vpop.f32.mrb[0].mxu0
        %v2158 = vadd.f32 %v2115, %v2157
        %v2159 = vpop.f32.mrb[0].mxu0
        %v2160 = vpop.f32.mrb[0].mxu0
        %v2161 = vpop.f32.mrb[0].mxu0
        %2162 = vdwg.mxu0
        %2163 = vrot.lane.b32.xlu0 %v1855, 64
        %v2164 = vpop.permute.xlu0 %2163
        %2165 = vrot.lane.b32.xlu0 %v1856, 64
        %v2166 = vpop.permute.xlu0 %2165
        %v2168 = vsel %vm1189, %v2164, 0
        %v2171 = vsel %vm1189, %v2166, 0
        %2173 = vmatprep.subr.bf16.mxu0 0
        %2174 = vmatpush1.bf16.xpose.msra.mxu0 %v2171
        %2175 = vmatprep.subr.bf16.mxu0 0
        %2176 = vmatpush1.bf16.xpose.msra.mxu0 0
        %2177 = vmatprep.subr.bf16.mxu0 0
        %2178 = vmatpush1.bf16.xpose.msra.mxu0 0
        %2179 = vmatprep.subr.bf16.mxu0 0
        %2180 = vmatpush1.bf16.xpose.msra.mxu0 0
        %2181 = vmatprep.subr.bf16.mxu0 0
        %2182 = vmatpush1.bf16.xpose.msra.mxu0 0
        %2183 = vmatprep.subr.bf16.mxu0 0
        %2184 = vmatpush1.bf16.xpose.msra.mxu0 0
        %2185 = vmatprep.subr.bf16.mxu0 0
        %2186 = vmatpush1.bf16.xpose.msra.mxu0 0
        %2187 = vmatprep.subr.bf16.mxu0 0
        %2188 = vmatpush1.bf16.xpose.msra.mxu0 0
        %2189 = vmatprep.subr.bf16.mxu0 0
        %2190 = vmatpush1.bf16.xpose.msra.mxu0 0
        %2191 = vmatprep.subr.bf16.mxu0 0
        %2192 = vmatpush1.bf16.xpose.msra.mxu0 0
        %2193 = vmatprep.subr.bf16.mxu0 0
        %2194 = vmatpush1.bf16.xpose.msra.mxu0 0
        %2195 = vmatprep.subr.bf16.mxu0 0
        %2196 = vmatpush1.bf16.xpose.msra.mxu0 0
        %2197 = vmatprep.subr.bf16.mxu0 0
        %2198 = vmatpush1.bf16.xpose.msra.mxu0 0
        %2199 = vmatprep.subr.bf16.mxu0 0
        %2200 = vmatpush1.bf16.xpose.msra.mxu0 0
        %2201 = vmatprep.subr.bf16.mxu0 0
        %2202 = vmatpush1.bf16.xpose.msra.mxu0 0
        %2203 = vmatprep.subr.bf16.mxu0 0
        %2204 = vmatpush1.bf16.xpose.msra.mxu0 0
        %2205 = vmatprep.mubr.bf16.mxu0 0
        %2206 = vmatmul.mubr.bf16.gmra.mrb[0].mxu0 %v2168
        %v2207 = vpop.f32.mrb[0].mxu0
        %v2208 = vadd.f32 0.0, %v2207
        %v2209 = vpop.f32.mrb[0].mxu0
        %v2210 = vpop.f32.mrb[0].mxu0
        %v2211 = vpop.f32.mrb[0].mxu0
        %2212 = vdwg.mxu0
        %v2213 = vsel %vm1236, %v2208, -inf
        %2214 = vmax.xlane.f32.xlu0 %v2213
        %v2215 = vpop.xlane.xlu0 %2214
        %v2216 = vsub.f32 %v2208, %v2215
        %v2217 = vmul.f32 %v2216, 1.442695
        %v2218 = vpow.pop %v2217
        %v2219 = vsel %vm1236, %v2218, 0.0
        %2220 = vadd.xlane.f32.xlu0 %v2219
        %v2221 = vpop.xlane.xlu0 %2220
        %v2222 = vrcp.pop %v2221
        %v2223 = vmul.f32 %v2218, %v2222
        %v2224 = vpack.c.bf16 %v2223, %v2223
        %2225 = vrot.lane.b32.xlu0 %v1857, 64
        %v2226 = vpop.permute.xlu0 %2225
        %v2228 = vsel %vm1236, %v2224, 0
        %v2231 = vsel %vm1252, %v2226, 0
        %2233 = vmatprep.subr.bf16.mxu0 0
        %2234 = vmatpush1.bf16.msra.mxu0 %v2231
        %2235 = vmatprep.subr.bf16.mxu0 0
        %2236 = vmatpush1.bf16.msra.mxu0 0
        %2237 = vmatprep.subr.bf16.mxu0 0
        %2238 = vmatpush1.bf16.msra.mxu0 0
        %2239 = vmatprep.subr.bf16.mxu0 0
        %2240 = vmatpush1.bf16.msra.mxu0 0
        %2241 = vmatprep.subr.bf16.mxu0 0
        %2242 = vmatpush1.bf16.msra.mxu0 0
        %2243 = vmatprep.subr.bf16.mxu0 0
        %2244 = vmatpush1.bf16.msra.mxu0 0
        %2245 = vmatprep.subr.bf16.mxu0 0
        %2246 = vmatpush1.bf16.msra.mxu0 0
        %2247 = vmatprep.subr.bf16.mxu0 0
        %2248 = vmatpush1.bf16.msra.mxu0 0
        %2249 = vmatprep.subr.bf16.mxu0 0
        %2250 = vmatpush1.bf16.msra.mxu0 0
        %2251 = vmatprep.subr.bf16.mxu0 0
        %2252 = vmatpush1.bf16.msra.mxu0 0
        %2253 = vmatprep.subr.bf16.mxu0 0
        %2254 = vmatpush1.bf16.msra.mxu0 0
        %2255 = vmatprep.subr.bf16.mxu0 0
        %2256 = vmatpush1.bf16.msra.mxu0 0
        %2257 = vmatprep.subr.bf16.mxu0 0
        %2258 = vmatpush1.bf16.msra.mxu0 0
        %2259 = vmatprep.subr.bf16.mxu0 0
        %2260 = vmatpush1.bf16.msra.mxu0 0
        %2261 = vmatprep.subr.bf16.mxu0 0
        %2262 = vmatpush1.bf16.msra.mxu0 0
        %2263 = vmatprep.subr.bf16.mxu0 0
        %2264 = vmatpush1.bf16.msra.mxu0 0
        %2265 = vmatprep.mubr.bf16.mxu0 0
        %2266 = vmatmul.mubr.bf16.gmra.mrb[0].mxu0 %v2228
        %v2267 = vpop.f32.mrb[0].mxu0
        %v2268 = vadd.f32 0.0, %v2267
        %v2269 = vpop.f32.mrb[0].mxu0
        %v2270 = vpop.f32.mrb[0].mxu0
        %v2271 = vpop.f32.mrb[0].mxu0
        %2272 = vdwg.mxu0
        %v2273 = vpack.c.bf16 %v2268, %v2268
        %v2275 = vsel %vm1189, %v2273, 0
        %2277 = vmatprep.subr.bf16.mxu0 0
        %2278 = vmatpush1.bf16.msra.mxu0 %v1640
        %2279 = vmatprep.subr.bf16.mxu0 0
        %2280 = vmatpush1.bf16.msra.mxu0 %v1641
        %2281 = vmatprep.subr.bf16.mxu0 0
        %2282 = vmatpush1.bf16.msra.mxu0 0
        %2283 = vmatprep.subr.bf16.mxu0 0
        %2284 = vmatpush1.bf16.msra.mxu0 0
        %2285 = vmatprep.subr.bf16.mxu0 0
        %2286 = vmatpush1.bf16.msra.mxu0 0
        %2287 = vmatprep.subr.bf16.mxu0 0
        %2288 = vmatpush1.bf16.msra.mxu0 0
        %2289 = vmatprep.subr.bf16.mxu0 0
        %2290 = vmatpush1.bf16.msra.mxu0 0
        %2291 = vmatprep.subr.bf16.mxu0 0
        %2292 = vmatpush1.bf16.msra.mxu0 0
        %2293 = vmatprep.subr.bf16.mxu0 0
        %2294 = vmatpush1.bf16.msra.mxu0 0
        %2295 = vmatprep.subr.bf16.mxu0 0
        %2296 = vmatpush1.bf16.msra.mxu0 0
        %2297 = vmatprep.subr.bf16.mxu0 0
        %2298 = vmatpush1.bf16.msra.mxu0 0
        %2299 = vmatprep.subr.bf16.mxu0 0
        %2300 = vmatpush1.bf16.msra.mxu0 0
        %2301 = vmatprep.subr.bf16.mxu0 0
        %2302 = vmatpush1.bf16.msra.mxu0 0
        %2303 = vmatprep.subr.bf16.mxu0 0
        %2304 = vmatpush1.bf16.msra.mxu0 0
        %2305 = vmatprep.subr.bf16.mxu0 0
        %2306 = vmatpush1.bf16.msra.mxu0 0
        %2307 = vmatprep.subr.bf16.mxu0 0
        %2308 = vmatpush1.bf16.msra.mxu0 0
        %2309 = vmatprep.mubr.bf16.mxu0 0
        %2310 = vmatmul.mubr.bf16.gmra.mrb[0].mxu0 %v2275
        %v2311 = vpop.f32.mrb[0].mxu0
        %v2312 = vadd.f32 0.0, %v2311
        %v2313 = vpop.f32.mrb[0].mxu0
        %v2314 = vpop.f32.mrb[0].mxu0
        %v2315 = vpop.f32.mrb[0].mxu0
        %2316 = vdwg.mxu0
        %v2317 = vadd.f32 %v2158, %v2312
        %2318 = vrot.lane.b32.xlu0 %v1855, 32
        %v2319 = vpop.permute.xlu0 %2318
        %2320 = vrot.lane.b32.xlu0 %v1856, 32
        %v2321 = vpop.permute.xlu0 %2320
        %v2323 = vsel %vm1189, %v2319, 0
        %v2326 = vsel %vm1189, %v2321, 0
        %2328 = vmatprep.subr.bf16.mxu0 0
        %2329 = vmatpush1.bf16.xpose.msra.mxu0 %v2326
        %2330 = vmatprep.subr.bf16.mxu0 0
        %2331 = vmatpush1.bf16.xpose.msra.mxu0 0
        %2332 = vmatprep.subr.bf16.mxu0 0
        %2333 = vmatpush1.bf16.xpose.msra.mxu0 0
        %2334 = vmatprep.subr.bf16.mxu0 0
        %2335 = vmatpush1.bf16.xpose.msra.mxu0 0
        %2336 = vmatprep.subr.bf16.mxu0 0
        %2337 = vmatpush1.bf16.xpose.msra.mxu0 0
        %2338 = vmatprep.subr.bf16.mxu0 0
        %2339 = vmatpush1.bf16.xpose.msra.mxu0 0
        %2340 = vmatprep.subr.bf16.mxu0 0
        %2341 = vmatpush1.bf16.xpose.msra.mxu0 0
        %2342 = vmatprep.subr.bf16.mxu0 0
        %2343 = vmatpush1.bf16.xpose.msra.mxu0 0
        %2344 = vmatprep.subr.bf16.mxu0 0
        %2345 = vmatpush1.bf16.xpose.msra.mxu0 0
        %2346 = vmatprep.subr.bf16.mxu0 0
        %2347 = vmatpush1.bf16.xpose.msra.mxu0 0
        %2348 = vmatprep.subr.bf16.mxu0 0
        %2349 = vmatpush1.bf16.xpose.msra.mxu0 0
        %2350 = vmatprep.subr.bf16.mxu0 0
        %2351 = vmatpush1.bf16.xpose.msra.mxu0 0
        %2352 = vmatprep.subr.bf16.mxu0 0
        %2353 = vmatpush1.bf16.xpose.msra.mxu0 0
        %2354 = vmatprep.subr.bf16.mxu0 0
        %2355 = vmatpush1.bf16.xpose.msra.mxu0 0
        %2356 = vmatprep.subr.bf16.mxu0 0
        %2357 = vmatpush1.bf16.xpose.msra.mxu0 0
        %2358 = vmatprep.subr.bf16.mxu0 0
        %2359 = vmatpush1.bf16.xpose.msra.mxu0 0
        %2360 = vmatprep.mubr.bf16.mxu0 0
        %2361 = vmatmul.mubr.bf16.gmra.mrb[0].mxu0 %v2323
        %v2362 = vpop.f32.mrb[0].mxu0
        %v2363 = vadd.f32 0.0, %v2362
        %v2364 = vpop.f32.mrb[0].mxu0
        %v2365 = vpop.f32.mrb[0].mxu0
        %v2366 = vpop.f32.mrb[0].mxu0
        %2367 = vdwg.mxu0
        %v2368 = vsel %vm1236, %v2363, -inf
        %2369 = vmax.xlane.f32.xlu0 %v2368
        %v2370 = vpop.xlane.xlu0 %2369
        %v2371 = vsub.f32 %v2363, %v2370
        %v2372 = vmul.f32 %v2371, 1.442695
        %v2373 = vpow.pop %v2372
        %v2374 = vsel %vm1236, %v2373, 0.0
        %2375 = vadd.xlane.f32.xlu0 %v2374
        %v2376 = vpop.xlane.xlu0 %2375
        %v2377 = vrcp.pop %v2376
        %v2378 = vmul.f32 %v2373, %v2377
        %v2379 = vpack.c.bf16 %v2378, %v2378
        %2380 = vrot.lane.b32.xlu0 %v1857, 32
        %v2381 = vpop.permute.xlu0 %2380
        %v2383 = vsel %vm1236, %v2379, 0
        %v2386 = vsel %vm1252, %v2381, 0
        %2388 = vmatprep.subr.bf16.mxu0 0
        %2389 = vmatpush1.bf16.msra.mxu0 %v2386
        %2390 = vmatprep.subr.bf16.mxu0 0
        %2391 = vmatpush1.bf16.msra.mxu0 0
        %2392 = vmatprep.subr.bf16.mxu0 0
        %2393 = vmatpush1.bf16.msra.mxu0 0
        %2394 = vmatprep.subr.bf16.mxu0 0
        %2395 = vmatpush1.bf16.msra.mxu0 0
        %2396 = vmatprep.subr.bf16.mxu0 0
        %2397 = vmatpush1.bf16.msra.mxu0 0
        %2398 = vmatprep.subr.bf16.mxu0 0
        %2399 = vmatpush1.bf16.msra.mxu0 0
        %2400 = vmatprep.subr.bf16.mxu0 0
        %2401 = vmatpush1.bf16.msra.mxu0 0
        %2402 = vmatprep.subr.bf16.mxu0 0
        %2403 = vmatpush1.bf16.msra.mxu0 0
        %2404 = vmatprep.subr.bf16.mxu0 0
        %2405 = vmatpush1.bf16.msra.mxu0 0
        %2406 = vmatprep.subr.bf16.mxu0 0
        %2407 = vmatpush1.bf16.msra.mxu0 0
        %2408 = vmatprep.subr.bf16.mxu0 0
        %2409 = vmatpush1.bf16.msra.mxu0 0
        %2410 = vmatprep.subr.bf16.mxu0 0
        %2411 = vmatpush1.bf16.msra.mxu0 0
        %2412 = vmatprep.subr.bf16.mxu0 0
        %2413 = vmatpush1.bf16.msra.mxu0 0
        %2414 = vmatprep.subr.bf16.mxu0 0
        %2415 = vmatpush1.bf16.msra.mxu0 0
        %2416 = vmatprep.subr.bf16.mxu0 0
        %2417 = vmatpush1.bf16.msra.mxu0 0
        %2418 = vmatprep.subr.bf16.mxu0 0
        %2419 = vmatpush1.bf16.msra.mxu0 0
        %2420 = vmatprep.mubr.bf16.mxu0 0
        %2421 = vmatmul.mubr.bf16.gmra.mrb[0].mxu0 %v2383
        %v2422 = vpop.f32.mrb[0].mxu0
        %v2423 = vadd.f32 0.0, %v2422
        %v2424 = vpop.f32.mrb[0].mxu0
        %v2425 = vpop.f32.mrb[0].mxu0
        %v2426 = vpop.f32.mrb[0].mxu0
        %2427 = vdwg.mxu0
        %v2428 = vpack.c.bf16 %v2423, %v2423
        %v2430 = vsel %vm1189, %v2428, 0
        %2432 = vmatprep.subr.bf16.mxu0 0
        %2433 = vmatpush1.bf16.msra.mxu0 %v1807
        %2434 = vmatprep.subr.bf16.mxu0 0
        %2435 = vmatpush1.bf16.msra.mxu0 %v1808
        %2436 = vmatprep.subr.bf16.mxu0 0
        %2437 = vmatpush1.bf16.msra.mxu0 0
        %2438 = vmatprep.subr.bf16.mxu0 0
        %2439 = vmatpush1.bf16.msra.mxu0 0
        %2440 = vmatprep.subr.bf16.mxu0 0
        %2441 = vmatpush1.bf16.msra.mxu0 0
        %2442 = vmatprep.subr.bf16.mxu0 0
        %2443 = vmatpush1.bf16.msra.mxu0 0
        %2444 = vmatprep.subr.bf16.mxu0 0
        %2445 = vmatpush1.bf16.msra.mxu0 0
        %2446 = vmatprep.subr.bf16.mxu0 0
        %2447 = vmatpush1.bf16.msra.mxu0 0
        %2448 = vmatprep.subr.bf16.mxu0 0
        %2449 = vmatpush1.bf16.msra.mxu0 0
        %2450 = vmatprep.subr.bf16.mxu0 0
        %2451 = vmatpush1.bf16.msra.mxu0 0
        %2452 = vmatprep.subr.bf16.mxu0 0
        %2453 = vmatpush1.bf16.msra.mxu0 0
        %2454 = vmatprep.subr.bf16.mxu0 0
        %2455 = vmatpush1.bf16.msra.mxu0 0
        %2456 = vmatprep.subr.bf16.mxu0 0
        %2457 = vmatpush1.bf16.msra.mxu0 0
        %2458 = vmatprep.subr.bf16.mxu0 0
        %2459 = vmatpush1.bf16.msra.mxu0 0
        %2460 = vmatprep.subr.bf16.mxu0 0
        %2461 = vmatpush1.bf16.msra.mxu0 0
        %2462 = vmatprep.subr.bf16.mxu0 0
        %2463 = vmatpush1.bf16.msra.mxu0 0
        %2464 = vmatprep.mubr.bf16.mxu0 0
        %2465 = vmatmul.mubr.bf16.gmra.mrb[0].mxu0 %v2430
        %v2466 = vpop.f32.mrb[0].mxu0
        %v2467 = vadd.f32 0.0, %v2466
        %v2468 = vpop.f32.mrb[0].mxu0
        %v2469 = vpop.f32.mrb[0].mxu0
        %v2470 = vpop.f32.mrb[0].mxu0
        %2471 = vdwg.mxu0
        %v2472 = vadd.f32 %v2317, %v2467
        %v2473 = vld [vmem:[%s783] sm:$0x1]
        %v2475 = vlaneseq
        %v2476 = vshrl.u32 %v2475, 7
        %v2477 = vsub.s32 0, %v2476
        %v2478 = vrot.slane %v2473, %v2477
        %v2480 = vadd.f32 %v1854, %v2478
        %v2481 = vadd.f32 %v2472, %v2478
        %v2482 = vadd.f32 %v906, %v2480
        %v2483 = vadd.f32 %v907, %v2481
        %v2484 = vld [vmem:[%s793] sm:$0x1]
        %v2485 = vld [vmem:[%s796] sm:$0x1]
        %2486 = vadd.xlane.f32.xlu0 %v2482
        %v2487 = vpop.xlane.xlu0 %2486
        %2488 = vadd.xlane.f32.xlu0 %v2483
        %v2489 = vpop.xlane.xlu0 %2488
        %v2490 = vrcp.pop 128.0
        %v2491 = vmul.f32 %v2487, %v2490
        %v2492 = vmul.f32 %v2489, %v2490
        %v2493 = vsub.f32 %v2482, %v2491
        %v2494 = vsub.f32 %v2483, %v2492
        %v2495 = vmul.f32 %v2493, %v2493
        %v2496 = vmul.f32 %v2494, %v2494
        %2497 = vadd.xlane.f32.xlu0 %v2495
        %v2498 = vpop.xlane.xlu0 %2497
        %2499 = vadd.xlane.f32.xlu0 %v2496
        %v2500 = vpop.xlane.xlu0 %2499
        %v2501 = vmul.f32 %v2498, %v2490
        %v2502 = vmul.f32 %v2500, %v2490
        %v2503 = vadd.f32 %v2501, 1e-05
        %v2504 = vadd.f32 %v2502, 1e-05
        %v2505 = vrsqrt.pop %v2503
        %v2506 = vrsqrt.pop %v2504
        %v2507 = vmul.f32 %v2493, %v2505
        %v2508 = vmul.f32 %v2494, %v2506
        %v2510 = vlaneseq
        %v2511 = vshrl.u32 %v2510, 7
        %v2512 = vsub.s32 0, %v2511
        %v2513 = vrot.slane %v2484, %v2512
        %v2515 = vmul.f32 %v2507, %v2513
        %v2516 = vmul.f32 %v2508, %v2513
        %v2518 = vlaneseq
        %v2519 = vshrl.u32 %v2518, 7
        %v2520 = vsub.s32 0, %v2519
        %v2521 = vrot.slane %v2485, %v2520
        %v2523 = vadd.f32 %v2515, %v2521
        %v2524 = vadd.f32 %v2516, %v2521
        %v2525 = vpack.c.bf16 %v2524, %v2523
        %v2526 = vld [vmem:[%s677] sm:$0xff]
        %v2527 = vld [vmem:[%s677 + $0x8] sm:$0xff]
        %v2528 = vld [vmem:[%s677 + $0x10] sm:$0xff]
        %v2529 = vld [vmem:[%s677 + $0x18] sm:$0xff]
        %v2530 = vld [vmem:[%s677 + $0x20] sm:$0xff]
        %v2531 = vld [vmem:[%s677 + $0x28] sm:$0xff]
        %v2532 = vld [vmem:[%s677 + $0x30] sm:$0xff]
        %v2533 = vld [vmem:[%s677 + $0x38] sm:$0xff]
        %v2534 = vld [vmem:[%s677 + $0x40] sm:$0xff]
        %v2535 = vld [vmem:[%s677 + $0x48] sm:$0xff]
        %v2536 = vld [vmem:[%s677 + $0x50] sm:$0xff]
        %v2537 = vld [vmem:[%s677 + $0x58] sm:$0xff]
        %v2538 = vld [vmem:[%s677 + $0x60] sm:$0xff]
        %v2539 = vld [vmem:[%s677 + $0x68] sm:$0xff]
        %v2540 = vld [vmem:[%s677 + $0x70] sm:$0xff]
        %v2541 = vld [vmem:[%s677 + $0x78] sm:$0xff]
        %v2542 = vld [vmem:[%s677 + $0x80] sm:$0xff]
        %v2543 = vld [vmem:[%s677 + $0x88] sm:$0xff]
        %v2544 = vld [vmem:[%s677 + $0x90] sm:$0xff]
        %v2545 = vld [vmem:[%s677 + $0x98] sm:$0xff]
        %v2546 = vld [vmem:[%s677 + $0xa0] sm:$0xff]
        %v2547 = vld [vmem:[%s677 + $0xa8] sm:$0xff]
        %v2548 = vld [vmem:[%s677 + $0xb0] sm:$0xff]
        %v2549 = vld [vmem:[%s677 + $0xb8] sm:$0xff]
        %v2550 = vld [vmem:[%s677 + $0xc0] sm:$0xff]
        %v2551 = vld [vmem:[%s677 + $0xc8] sm:$0xff]
        %v2552 = vld [vmem:[%s677 + $0xd0] sm:$0xff]
        %v2553 = vld [vmem:[%s677 + $0xd8] sm:$0xff]
        %v2554 = vld [vmem:[%s677 + $0xe0] sm:$0xff]
        %v2555 = vld [vmem:[%s677 + $0xe8] sm:$0xff]
        %v2556 = vld [vmem:[%s677 + $0xf0] sm:$0xff]
        %v2557 = vld [vmem:[%s677 + $0xf8] sm:$0xff]
        %v2558 = vld [vmem:[%s677 + $0x100] sm:$0xff]
        %v2559 = vld [vmem:[%s677 + $0x108] sm:$0xff]
        %v2560 = vld [vmem:[%s677 + $0x110] sm:$0xff]
        %v2561 = vld [vmem:[%s677 + $0x118] sm:$0xff]
        %v2562 = vld [vmem:[%s677 + $0x120] sm:$0xff]
        %v2563 = vld [vmem:[%s677 + $0x128] sm:$0xff]
        %v2564 = vld [vmem:[%s677 + $0x130] sm:$0xff]
        %v2565 = vld [vmem:[%s677 + $0x138] sm:$0xff]
        %v2566 = vld [vmem:[%s677 + $0x140] sm:$0xff]
        %v2567 = vld [vmem:[%s677 + $0x148] sm:$0xff]
        %v2568 = vld [vmem:[%s677 + $0x150] sm:$0xff]
        %v2569 = vld [vmem:[%s677 + $0x158] sm:$0xff]
        %v2570 = vld [vmem:[%s677 + $0x160] sm:$0xff]
        %v2571 = vld [vmem:[%s677 + $0x168] sm:$0xff]
        %v2572 = vld [vmem:[%s677 + $0x170] sm:$0xff]
        %v2573 = vld [vmem:[%s677 + $0x178] sm:$0xff]
        %v2574 = vld [vmem:[%s677 + $0x180] sm:$0xff]
        %v2575 = vld [vmem:[%s677 + $0x188] sm:$0xff]
        %v2576 = vld [vmem:[%s677 + $0x190] sm:$0xff]
        %v2577 = vld [vmem:[%s677 + $0x198] sm:$0xff]
        %v2578 = vld [vmem:[%s677 + $0x1a0] sm:$0xff]
        %v2579 = vld [vmem:[%s677 + $0x1a8] sm:$0xff]
        %v2580 = vld [vmem:[%s677 + $0x1b0] sm:$0xff]
        %v2581 = vld [vmem:[%s677 + $0x1b8] sm:$0xff]
        %v2582 = vld [vmem:[%s677 + $0x1c0] sm:$0xff]
        %v2583 = vld [vmem:[%s677 + $0x1c8] sm:$0xff]
        %v2584 = vld [vmem:[%s677 + $0x1d0] sm:$0xff]
        %v2585 = vld [vmem:[%s677 + $0x1d8] sm:$0xff]
        %v2586 = vld [vmem:[%s677 + $0x1e0] sm:$0xff]
        %v2587 = vld [vmem:[%s677 + $0x1e8] sm:$0xff]
        %v2588 = vld [vmem:[%s677 + $0x1f0] sm:$0xff]
        %v2589 = vld [vmem:[%s677 + $0x1f8] sm:$0xff]
        %v2590 = vld [vmem:[%s677 + $0x200] sm:$0xff]
        %v2591 = vld [vmem:[%s677 + $0x208] sm:$0xff]
        %v2592 = vld [vmem:[%s677 + $0x210] sm:$0xff]
        %v2593 = vld [vmem:[%s677 + $0x218] sm:$0xff]
        %v2594 = vld [vmem:[%s677 + $0x220] sm:$0xff]
        %v2595 = vld [vmem:[%s677 + $0x228] sm:$0xff]
        %v2596 = vld [vmem:[%s677 + $0x230] sm:$0xff]
        %v2597 = vld [vmem:[%s677 + $0x238] sm:$0xff]
        %v2598 = vld [vmem:[%s677 + $0x240] sm:$0xff]
        %v2599 = vld [vmem:[%s677 + $0x248] sm:$0xff]
        %v2600 = vld [vmem:[%s677 + $0x250] sm:$0xff]
        %v2601 = vld [vmem:[%s677 + $0x258] sm:$0xff]
        %v2602 = vld [vmem:[%s677 + $0x260] sm:$0xff]
        %v2603 = vld [vmem:[%s677 + $0x268] sm:$0xff]
        %v2604 = vld [vmem:[%s677 + $0x270] sm:$0xff]
        %v2605 = vld [vmem:[%s677 + $0x278] sm:$0xff]
        %v2606 = vld [vmem:[%s677 + $0x280] sm:$0xff]
        %v2607 = vld [vmem:[%s677 + $0x288] sm:$0xff]
        %v2608 = vld [vmem:[%s677 + $0x290] sm:$0xff]
        %v2609 = vld [vmem:[%s677 + $0x298] sm:$0xff]
        %v2610 = vld [vmem:[%s677 + $0x2a0] sm:$0xff]
        %v2611 = vld [vmem:[%s677 + $0x2a8] sm:$0xff]
        %v2612 = vld [vmem:[%s677 + $0x2b0] sm:$0xff]
        %v2613 = vld [vmem:[%s677 + $0x2b8] sm:$0xff]
        %v2614 = vld [vmem:[%s677 + $0x2c0] sm:$0xff]
        %v2615 = vld [vmem:[%s677 + $0x2c8] sm:$0xff]
        %v2616 = vld [vmem:[%s677 + $0x2d0] sm:$0xff]
        %v2617 = vld [vmem:[%s677 + $0x2d8] sm:$0xff]
        %v2618 = vld [vmem:[%s677 + $0x2e0] sm:$0xff]
        %v2619 = vld [vmem:[%s677 + $0x2e8] sm:$0xff]
        %v2620 = vld [vmem:[%s677 + $0x2f0] sm:$0xff]
        %v2621 = vld [vmem:[%s677 + $0x2f8] sm:$0xff]
        %v2622 = vld [vmem:[%s677 + $0x300] sm:$0xff]
        %v2623 = vld [vmem:[%s677 + $0x308] sm:$0xff]
        %v2624 = vld [vmem:[%s677 + $0x310] sm:$0xff]
        %v2625 = vld [vmem:[%s677 + $0x318] sm:$0xff]
        %v2626 = vld [vmem:[%s677 + $0x320] sm:$0xff]
        %v2627 = vld [vmem:[%s677 + $0x328] sm:$0xff]
        %v2628 = vld [vmem:[%s677 + $0x330] sm:$0xff]
        %v2629 = vld [vmem:[%s677 + $0x338] sm:$0xff]
        %v2630 = vld [vmem:[%s677 + $0x340] sm:$0xff]
        %v2631 = vld [vmem:[%s677 + $0x348] sm:$0xff]
        %v2632 = vld [vmem:[%s677 + $0x350] sm:$0xff]
        %v2633 = vld [vmem:[%s677 + $0x358] sm:$0xff]
        %v2634 = vld [vmem:[%s677 + $0x360] sm:$0xff]
        %v2635 = vld [vmem:[%s677 + $0x368] sm:$0xff]
        %v2636 = vld [vmem:[%s677 + $0x370] sm:$0xff]
        %v2637 = vld [vmem:[%s677 + $0x378] sm:$0xff]
        %v2638 = vld [vmem:[%s677 + $0x380] sm:$0xff]
        %v2639 = vld [vmem:[%s677 + $0x388] sm:$0xff]
        %v2640 = vld [vmem:[%s677 + $0x390] sm:$0xff]
        %v2641 = vld [vmem:[%s677 + $0x398] sm:$0xff]
        %v2642 = vld [vmem:[%s677 + $0x3a0] sm:$0xff]
        %v2643 = vld [vmem:[%s677 + $0x3a8] sm:$0xff]
        %v2644 = vld [vmem:[%s677 + $0x3b0] sm:$0xff]
        %v2645 = vld [vmem:[%s677 + $0x3b8] sm:$0xff]
        %v2646 = vld [vmem:[%s677 + $0x3c0] sm:$0xff]
        %v2647 = vld [vmem:[%s677 + $0x3c8] sm:$0xff]
        %v2648 = vld [vmem:[%s677 + $0x3d0] sm:$0xff]
        %v2649 = vld [vmem:[%s677 + $0x3d8] sm:$0xff]
        %v2650 = vld [vmem:[%s677 + $0x3e0] sm:$0xff]
        %v2651 = vld [vmem:[%s677 + $0x3e8] sm:$0xff]
        %v2652 = vld [vmem:[%s677 + $0x3f0] sm:$0xff]
        %v2653 = vld [vmem:[%s677 + $0x3f8] sm:$0xff]
        %v2654 = vld [vmem:[%s787] sm:$0xff]
        %v2655 = vld [vmem:[%s787 + $0x8] sm:$0xff]
        %v2658 = vlaneseq
        %v2659 = vshrl.u32 %v2658, 7
        %v2660 = vsub.s32 0, %v2659
        %v2661 = vrot.slane %v2654, %v2660
        %v2662 = vlaneseq
        %v2663 = vshrl.u32 %v2662, 7
        %v2664 = vsub.s32 1, %v2663
        %v2665 = vrot.slane %v2654, %v2664
        %v2666 = vlaneseq
        %v2667 = vshrl.u32 %v2666, 7
        %v2668 = vsub.s32 2, %v2667
        %v2669 = vrot.slane %v2654, %v2668
        %v2670 = vlaneseq
        %v2671 = vshrl.u32 %v2670, 7
        %v2672 = vsub.s32 3, %v2671
        %v2673 = vrot.slane %v2654, %v2672
        %v2674 = vlaneseq
        %v2675 = vshrl.u32 %v2674, 7
        %v2676 = vsub.s32 4, %v2675
        %v2677 = vrot.slane %v2654, %v2676
        %v2678 = vlaneseq
        %v2679 = vshrl.u32 %v2678, 7
        %v2680 = vsub.s32 5, %v2679
        %v2681 = vrot.slane %v2654, %v2680
        %v2682 = vlaneseq
        %v2683 = vshrl.u32 %v2682, 7
        %v2684 = vsub.s32 6, %v2683
        %v2685 = vrot.slane %v2654, %v2684
        %v2686 = vlaneseq
        %v2687 = vshrl.u32 %v2686, 7
        %v2688 = vsub.s32 7, %v2687
        %v2689 = vrot.slane %v2654, %v2688
        %v2690 = vlaneseq
        %v2691 = vshrl.u32 %v2690, 7
        %v2692 = vsub.s32 0, %v2691
        %v2693 = vrot.slane %v2655, %v2692
        %v2694 = vlaneseq
        %v2695 = vshrl.u32 %v2694, 7
        %v2696 = vsub.s32 1, %v2695
        %v2697 = vrot.slane %v2655, %v2696
        %v2698 = vlaneseq
        %v2699 = vshrl.u32 %v2698, 7
        %v2700 = vsub.s32 2, %v2699
        %v2701 = vrot.slane %v2655, %v2700
        %v2702 = vlaneseq
        %v2703 = vshrl.u32 %v2702, 7
        %v2704 = vsub.s32 3, %v2703
        %v2705 = vrot.slane %v2655, %v2704
        %v2706 = vlaneseq
        %v2707 = vshrl.u32 %v2706, 7
        %v2708 = vsub.s32 4, %v2707
        %v2709 = vrot.slane %v2655, %v2708
        %v2710 = vlaneseq
        %v2711 = vshrl.u32 %v2710, 7
        %v2712 = vsub.s32 5, %v2711
        %v2713 = vrot.slane %v2655, %v2712
        %v2714 = vlaneseq
        %v2715 = vshrl.u32 %v2714, 7
        %v2716 = vsub.s32 6, %v2715
        %v2717 = vrot.slane %v2655, %v2716
        %v2718 = vlaneseq
        %v2719 = vshrl.u32 %v2718, 7
        %v2720 = vsub.s32 7, %v2719
        %v2721 = vrot.slane %v2655, %v2720
        %v2866 = vunpack.c.l.b16 %v2526
        %v2867 = vunpack.c.h.b16 %v2526
        %v2868 = vunpack.c.l.b16 %v2527
        %v2869 = vunpack.c.h.b16 %v2527
        %v2870 = vunpack.c.l.b16 %v2528
        %v2871 = vunpack.c.h.b16 %v2528
        %v2872 = vunpack.c.l.b16 %v2529
        %v2873 = vunpack.c.h.b16 %v2529
        %v2874 = vunpack.c.l.b16 %v2530
        %v2875 = vunpack.c.h.b16 %v2530
        %v2876 = vunpack.c.l.b16 %v2531
        %v2877 = vunpack.c.h.b16 %v2531
        %v2878 = vunpack.c.l.b16 %v2532
        %v2879 = vunpack.c.h.b16 %v2532
        %v2880 = vunpack.c.l.b16 %v2533
        %v2881 = vunpack.c.h.b16 %v2533
        %v2882 = vunpack.c.l.b16 %v2534
        %v2883 = vunpack.c.h.b16 %v2534
        %v2884 = vunpack.c.l.b16 %v2535
        %v2885 = vunpack.c.h.b16 %v2535
        %v2886 = vunpack.c.l.b16 %v2536
        %v2887 = vunpack.c.h.b16 %v2536
        %v2888 = vunpack.c.l.b16 %v2537
        %v2889 = vunpack.c.h.b16 %v2537
        %v2890 = vunpack.c.l.b16 %v2538
        %v2891 = vunpack.c.h.b16 %v2538
        %v2892 = vunpack.c.l.b16 %v2539
        %v2893 = vunpack.c.h.b16 %v2539
        %v2894 = vunpack.c.l.b16 %v2540
        %v2895 = vunpack.c.h.b16 %v2540
        %v2896 = vunpack.c.l.b16 %v2541
        %v2897 = vunpack.c.h.b16 %v2541
        %v2898 = vunpack.c.l.b16 %v2542
        %v2899 = vunpack.c.h.b16 %v2542
        %v2900 = vunpack.c.l.b16 %v2543
        %v2901 = vunpack.c.h.b16 %v2543
        %v2902 = vunpack.c.l.b16 %v2544
        %v2903 = vunpack.c.h.b16 %v2544
        %v2904 = vunpack.c.l.b16 %v2545
        %v2905 = vunpack.c.h.b16 %v2545
        %v2906 = vunpack.c.l.b16 %v2546
        %v2907 = vunpack.c.h.b16 %v2546
        %v2908 = vunpack.c.l.b16 %v2547
        %v2909 = vunpack.c.h.b16 %v2547
        %v2910 = vunpack.c.l.b16 %v2548
        %v2911 = vunpack.c.h.b16 %v2548
        %v2912 = vunpack.c.l.b16 %v2549
        %v2913 = vunpack.c.h.b16 %v2549
        %v2914 = vunpack.c.l.b16 %v2550
        %v2915 = vunpack.c.h.b16 %v2550
        %v2916 = vunpack.c.l.b16 %v2551
        %v2917 = vunpack.c.h.b16 %v2551
        %v2918 = vunpack.c.l.b16 %v2552
        %v2919 = vunpack.c.h.b16 %v2552
        %v2920 = vunpack.c.l.b16 %v2553
        %v2921 = vunpack.c.h.b16 %v2553
        %v2922 = vunpack.c.l.b16 %v2554
        %v2923 = vunpack.c.h.b16 %v2554
        %v2924 = vunpack.c.l.b16 %v2555
        %v2925 = vunpack.c.h.b16 %v2555
        %v2926 = vunpack.c.l.b16 %v2556
        %v2927 = vunpack.c.h.b16 %v2556
        %v2928 = vunpack.c.l.b16 %v2557
        %v2929 = vunpack.c.h.b16 %v2557
        %v2930 = vunpack.c.l.b16 %v2558
        %v2931 = vunpack.c.h.b16 %v2558
        %v2932 = vunpack.c.l.b16 %v2559
        %v2933 = vunpack.c.h.b16 %v2559
        %v2934 = vunpack.c.l.b16 %v2560
        %v2935 = vunpack.c.h.b16 %v2560
        %v2936 = vunpack.c.l.b16 %v2561
        %v2937 = vunpack.c.h.b16 %v2561
        %v2938 = vunpack.c.l.b16 %v2562
        %v2939 = vunpack.c.h.b16 %v2562
        %v2940 = vunpack.c.l.b16 %v2563
        %v2941 = vunpack.c.h.b16 %v2563
        %v2942 = vunpack.c.l.b16 %v2564
        %v2943 = vunpack.c.h.b16 %v2564
        %v2944 = vunpack.c.l.b16 %v2565
        %v2945 = vunpack.c.h.b16 %v2565
        %v2946 = vunpack.c.l.b16 %v2566
        %v2947 = vunpack.c.h.b16 %v2566
        %v2948 = vunpack.c.l.b16 %v2567
        %v2949 = vunpack.c.h.b16 %v2567
        %v2950 = vunpack.c.l.b16 %v2568
        %v2951 = vunpack.c.h.b16 %v2568
        %v2952 = vunpack.c.l.b16 %v2569
        %v2953 = vunpack.c.h.b16 %v2569
        %v2954 = vunpack.c.l.b16 %v2570
        %v2955 = vunpack.c.h.b16 %v2570
        %v2956 = vunpack.c.l.b16 %v2571
        %v2957 = vunpack.c.h.b16 %v2571
        %v2958 = vunpack.c.l.b16 %v2572
        %v2959 = vunpack.c.h.b16 %v2572
        %v2960 = vunpack.c.l.b16 %v2573
        %v2961 = vunpack.c.h.b16 %v2573
        %v2962 = vunpack.c.l.b16 %v2574
        %v2963 = vunpack.c.h.b16 %v2574
        %v2964 = vunpack.c.l.b16 %v2575
        %v2965 = vunpack.c.h.b16 %v2575
        %v2966 = vunpack.c.l.b16 %v2576
        %v2967 = vunpack.c.h.b16 %v2576
        %v2968 = vunpack.c.l.b16 %v2577
        %v2969 = vunpack.c.h.b16 %v2577
        %v2970 = vunpack.c.l.b16 %v2578
        %v2971 = vunpack.c.h.b16 %v2578
        %v2972 = vunpack.c.l.b16 %v2579
        %v2973 = vunpack.c.h.b16 %v2579
        %v2974 = vunpack.c.l.b16 %v2580
        %v2975 = vunpack.c.h.b16 %v2580
        %v2976 = vunpack.c.l.b16 %v2581
        %v2977 = vunpack.c.h.b16 %v2581
        %v2978 = vunpack.c.l.b16 %v2582
        %v2979 = vunpack.c.h.b16 %v2582
        %v2980 = vunpack.c.l.b16 %v2583
        %v2981 = vunpack.c.h.b16 %v2583
        %v2982 = vunpack.c.l.b16 %v2584
        %v2983 = vunpack.c.h.b16 %v2584
        %v2984 = vunpack.c.l.b16 %v2585
        %v2985 = vunpack.c.h.b16 %v2585
        %v2986 = vunpack.c.l.b16 %v2586
        %v2987 = vunpack.c.h.b16 %v2586
        %v2988 = vunpack.c.l.b16 %v2587
        %v2989 = vunpack.c.h.b16 %v2587
        %v2990 = vunpack.c.l.b16 %v2588
        %v2991 = vunpack.c.h.b16 %v2588
        %v2992 = vunpack.c.l.b16 %v2589
        %v2993 = vunpack.c.h.b16 %v2589
        %v2994 = vunpack.c.l.b16 %v2590
        %v2995 = vunpack.c.h.b16 %v2590
        %v2996 = vunpack.c.l.b16 %v2591
        %v2997 = vunpack.c.h.b16 %v2591
        %v2998 = vunpack.c.l.b16 %v2592
        %v2999 = vunpack.c.h.b16 %v2592
        %v3000 = vunpack.c.l.b16 %v2593
        %v3001 = vunpack.c.h.b16 %v2593
        %v3002 = vunpack.c.l.b16 %v2594
        %v3003 = vunpack.c.h.b16 %v2594
        %v3004 = vunpack.c.l.b16 %v2595
        %v3005 = vunpack.c.h.b16 %v2595
        %v3006 = vunpack.c.l.b16 %v2596
        %v3007 = vunpack.c.h.b16 %v2596
        %v3008 = vunpack.c.l.b16 %v2597
        %v3009 = vunpack.c.h.b16 %v2597
        %v3010 = vunpack.c.l.b16 %v2598
        %v3011 = vunpack.c.h.b16 %v2598
        %v3012 = vunpack.c.l.b16 %v2599
        %v3013 = vunpack.c.h.b16 %v2599
        %v3014 = vunpack.c.l.b16 %v2600
        %v3015 = vunpack.c.h.b16 %v2600
        %v3016 = vunpack.c.l.b16 %v2601
        %v3017 = vunpack.c.h.b16 %v2601
        %v3018 = vunpack.c.l.b16 %v2602
        %v3019 = vunpack.c.h.b16 %v2602
        %v3020 = vunpack.c.l.b16 %v2603
        %v3021 = vunpack.c.h.b16 %v2603
        %v3022 = vunpack.c.l.b16 %v2604
        %v3023 = vunpack.c.h.b16 %v2604
        %v3024 = vunpack.c.l.b16 %v2605
        %v3025 = vunpack.c.h.b16 %v2605
        %v3026 = vunpack.c.l.b16 %v2606
        %v3027 = vunpack.c.h.b16 %v2606
        %v3028 = vunpack.c.l.b16 %v2607
        %v3029 = vunpack.c.h.b16 %v2607
        %v3030 = vunpack.c.l.b16 %v2608
        %v3031 = vunpack.c.h.b16 %v2608
        %v3032 = vunpack.c.l.b16 %v2609
        %v3033 = vunpack.c.h.b16 %v2609
        %v3034 = vunpack.c.l.b16 %v2610
        %v3035 = vunpack.c.h.b16 %v2610
        %v3036 = vunpack.c.l.b16 %v2611
        %v3037 = vunpack.c.h.b16 %v2611
        %v3038 = vunpack.c.l.b16 %v2612
        %v3039 = vunpack.c.h.b16 %v2612
        %v3040 = vunpack.c.l.b16 %v2613
        %v3041 = vunpack.c.h.b16 %v2613
        %v3042 = vunpack.c.l.b16 %v2614
        %v3043 = vunpack.c.h.b16 %v2614
        %v3044 = vunpack.c.l.b16 %v2615
        %v3045 = vunpack.c.h.b16 %v2615
        %v3046 = vunpack.c.l.b16 %v2616
        %v3047 = vunpack.c.h.b16 %v2616
        %v3048 = vunpack.c.l.b16 %v2617
        %v3049 = vunpack.c.h.b16 %v2617
        %v3050 = vunpack.c.l.b16 %v2618
        %v3051 = vunpack.c.h.b16 %v2618
        %v3052 = vunpack.c.l.b16 %v2619
        %v3053 = vunpack.c.h.b16 %v2619
        %v3054 = vunpack.c.l.b16 %v2620
        %v3055 = vunpack.c.h.b16 %v2620
        %v3056 = vunpack.c.l.b16 %v2621
        %v3057 = vunpack.c.h.b16 %v2621
        %v3058 = vunpack.c.l.b16 %v2622
        %v3059 = vunpack.c.h.b16 %v2622
        %v3060 = vunpack.c.l.b16 %v2623
        %v3061 = vunpack.c.h.b16 %v2623
        %v3062 = vunpack.c.l.b16 %v2624
        %v3063 = vunpack.c.h.b16 %v2624
        %v3064 = vunpack.c.l.b16 %v2625
        %v3065 = vunpack.c.h.b16 %v2625
        %v3066 = vunpack.c.l.b16 %v2626
        %v3067 = vunpack.c.h.b16 %v2626
        %v3068 = vunpack.c.l.b16 %v2627
        %v3069 = vunpack.c.h.b16 %v2627
        %v3070 = vunpack.c.l.b16 %v2628
        %v3071 = vunpack.c.h.b16 %v2628
        %v3072 = vunpack.c.l.b16 %v2629
        %v3073 = vunpack.c.h.b16 %v2629
        %v3074 = vunpack.c.l.b16 %v2630
        %v3075 = vunpack.c.h.b16 %v2630
        %v3076 = vunpack.c.l.b16 %v2631
        %v3077 = vunpack.c.h.b16 %v2631
        %v3078 = vunpack.c.l.b16 %v2632
        %v3079 = vunpack.c.h.b16 %v2632
        %v3080 = vunpack.c.l.b16 %v2633
        %v3081 = vunpack.c.h.b16 %v2633
        %v3082 = vunpack.c.l.b16 %v2634
        %v3083 = vunpack.c.h.b16 %v2634
        %v3084 = vunpack.c.l.b16 %v2635
        %v3085 = vunpack.c.h.b16 %v2635
        %v3086 = vunpack.c.l.b16 %v2636
        %v3087 = vunpack.c.h.b16 %v2636
        %v3088 = vunpack.c.l.b16 %v2637
        %v3089 = vunpack.c.h.b16 %v2637
        %v3090 = vunpack.c.l.b16 %v2638
        %v3091 = vunpack.c.h.b16 %v2638
        %v3092 = vunpack.c.l.b16 %v2639
        %v3093 = vunpack.c.h.b16 %v2639
        %v3094 = vunpack.c.l.b16 %v2640
        %v3095 = vunpack.c.h.b16 %v2640
        %v3096 = vunpack.c.l.b16 %v2641
        %v3097 = vunpack.c.h.b16 %v2641
        %v3098 = vunpack.c.l.b16 %v2642
        %v3099 = vunpack.c.h.b16 %v2642
        %v3100 = vunpack.c.l.b16 %v2643
        %v3101 = vunpack.c.h.b16 %v2643
        %v3102 = vunpack.c.l.b16 %v2644
        %v3103 = vunpack.c.h.b16 %v2644
        %v3104 = vunpack.c.l.b16 %v2645
        %v3105 = vunpack.c.h.b16 %v2645
        %v3106 = vunpack.c.l.b16 %v2646
        %v3107 = vunpack.c.h.b16 %v2646
        %v3108 = vunpack.c.l.b16 %v2647
        %v3109 = vunpack.c.h.b16 %v2647
        %v3110 = vunpack.c.l.b16 %v2648
        %v3111 = vunpack.c.h.b16 %v2648
        %v3112 = vunpack.c.l.b16 %v2649
        %v3113 = vunpack.c.h.b16 %v2649
        %v3114 = vunpack.c.l.b16 %v2650
        %v3115 = vunpack.c.h.b16 %v2650
        %v3116 = vunpack.c.l.b16 %v2651
        %v3117 = vunpack.c.h.b16 %v2651
        %v3118 = vunpack.c.l.b16 %v2652
        %v3119 = vunpack.c.h.b16 %v2652
        %v3120 = vunpack.c.l.b16 %v2653
        %v3121 = vunpack.c.h.b16 %v2653
        %v3122 = vpack.c.b16 %v2882, %v2866
        %v3123 = vpack.c.b16 %v2883, %v2867
        %v3124 = vpack.c.b16 %v2884, %v2868
        %v3125 = vpack.c.b16 %v2885, %v2869
        %v3126 = vpack.c.b16 %v2886, %v2870
        %v3127 = vpack.c.b16 %v2887, %v2871
        %v3128 = vpack.c.b16 %v2888, %v2872
        %v3129 = vpack.c.b16 %v2889, %v2873
        %v3130 = vpack.c.b16 %v2890, %v2874
        %v3131 = vpack.c.b16 %v2891, %v2875
        %v3132 = vpack.c.b16 %v2892, %v2876
        %v3133 = vpack.c.b16 %v2893, %v2877
        %v3134 = vpack.c.b16 %v2894, %v2878
        %v3135 = vpack.c.b16 %v2895, %v2879
        %v3136 = vpack.c.b16 %v2896, %v2880
        %v3137 = vpack.c.b16 %v2897, %v2881
        %v3138 = vpack.c.b16 %v2914, %v2898
        %v3139 = vpack.c.b16 %v2915, %v2899
        %v3140 = vpack.c.b16 %v2916, %v2900
        %v3141 = vpack.c.b16 %v2917, %v2901
        %v3142 = vpack.c.b16 %v2918, %v2902
        %v3143 = vpack.c.b16 %v2919, %v2903
        %v3144 = vpack.c.b16 %v2920, %v2904
        %v3145 = vpack.c.b16 %v2921, %v2905
        %v3146 = vpack.c.b16 %v2922, %v2906
        %v3147 = vpack.c.b16 %v2923, %v2907
        %v3148 = vpack.c.b16 %v2924, %v2908
        %v3149 = vpack.c.b16 %v2925, %v2909
        %v3150 = vpack.c.b16 %v2926, %v2910
        %v3151 = vpack.c.b16 %v2927, %v2911
        %v3152 = vpack.c.b16 %v2928, %v2912
        %v3153 = vpack.c.b16 %v2929, %v2913
        %v3154 = vpack.c.b16 %v2946, %v2930
        %v3155 = vpack.c.b16 %v2947, %v2931
        %v3156 = vpack.c.b16 %v2948, %v2932
        %v3157 = vpack.c.b16 %v2949, %v2933
        %v3158 = vpack.c.b16 %v2950, %v2934
        %v3159 = vpack.c.b16 %v2951, %v2935
        %v3160 = vpack.c.b16 %v2952, %v2936
        %v3161 = vpack.c.b16 %v2953, %v2937
        %v3162 = vpack.c.b16 %v2954, %v2938
        %v3163 = vpack.c.b16 %v2955, %v2939
        %v3164 = vpack.c.b16 %v2956, %v2940
        %v3165 = vpack.c.b16 %v2957, %v2941
        %v3166 = vpack.c.b16 %v2958, %v2942
        %v3167 = vpack.c.b16 %v2959, %v2943
        %v3168 = vpack.c.b16 %v2960, %v2944
        %v3169 = vpack.c.b16 %v2961, %v2945
        %v3170 = vpack.c.b16 %v2978, %v2962
        %v3171 = vpack.c.b16 %v2979, %v2963
        %v3172 = vpack.c.b16 %v2980, %v2964
        %v3173 = vpack.c.b16 %v2981, %v2965
        %v3174 = vpack.c.b16 %v2982, %v2966
        %v3175 = vpack.c.b16 %v2983, %v2967
        %v3176 = vpack.c.b16 %v2984, %v2968
        %v3177 = vpack.c.b16 %v2985, %v2969
        %v3178 = vpack.c.b16 %v2986, %v2970
        %v3179 = vpack.c.b16 %v2987, %v2971
        %v3180 = vpack.c.b16 %v2988, %v2972
        %v3181 = vpack.c.b16 %v2989, %v2973
        %v3182 = vpack.c.b16 %v2990, %v2974
        %v3183 = vpack.c.b16 %v2991, %v2975
        %v3184 = vpack.c.b16 %v2992, %v2976
        %v3185 = vpack.c.b16 %v2993, %v2977
        %v3186 = vpack.c.b16 %v3010, %v2994
        %v3187 = vpack.c.b16 %v3011, %v2995
        %v3188 = vpack.c.b16 %v3012, %v2996
        %v3189 = vpack.c.b16 %v3013, %v2997
        %v3190 = vpack.c.b16 %v3014, %v2998
        %v3191 = vpack.c.b16 %v3015, %v2999
        %v3192 = vpack.c.b16 %v3016, %v3000
        %v3193 = vpack.c.b16 %v3017, %v3001
        %v3194 = vpack.c.b16 %v3018, %v3002
        %v3195 = vpack.c.b16 %v3019, %v3003
        %v3196 = vpack.c.b16 %v3020, %v3004
        %v3197 = vpack.c.b16 %v3021, %v3005
        %v3198 = vpack.c.b16 %v3022, %v3006
        %v3199 = vpack.c.b16 %v3023, %v3007
        %v3200 = vpack.c.b16 %v3024, %v3008
        %v3201 = vpack.c.b16 %v3025, %v3009
        %v3202 = vpack.c.b16 %v3042, %v3026
        %v3203 = vpack.c.b16 %v3043, %v3027
        %v3204 = vpack.c.b16 %v3044, %v3028
        %v3205 = vpack.c.b16 %v3045, %v3029
        %v3206 = vpack.c.b16 %v3046, %v3030
        %v3207 = vpack.c.b16 %v3047, %v3031
        %v3208 = vpack.c.b16 %v3048, %v3032
        %v3209 = vpack.c.b16 %v3049, %v3033
        %v3210 = vpack.c.b16 %v3050, %v3034
        %v3211 = vpack.c.b16 %v3051, %v3035
        %v3212 = vpack.c.b16 %v3052, %v3036
        %v3213 = vpack.c.b16 %v3053, %v3037
        %v3214 = vpack.c.b16 %v3054, %v3038
        %v3215 = vpack.c.b16 %v3055, %v3039
        %v3216 = vpack.c.b16 %v3056, %v3040
        %v3217 = vpack.c.b16 %v3057, %v3041
        %v3218 = vpack.c.b16 %v3074, %v3058
        %v3219 = vpack.c.b16 %v3075, %v3059
        %v3220 = vpack.c.b16 %v3076, %v3060
        %v3221 = vpack.c.b16 %v3077, %v3061
        %v3222 = vpack.c.b16 %v3078, %v3062
        %v3223 = vpack.c.b16 %v3079, %v3063
        %v3224 = vpack.c.b16 %v3080, %v3064
        %v3225 = vpack.c.b16 %v3081, %v3065
        %v3226 = vpack.c.b16 %v3082, %v3066
        %v3227 = vpack.c.b16 %v3083, %v3067
        %v3228 = vpack.c.b16 %v3084, %v3068
        %v3229 = vpack.c.b16 %v3085, %v3069
        %v3230 = vpack.c.b16 %v3086, %v3070
        %v3231 = vpack.c.b16 %v3087, %v3071
        %v3232 = vpack.c.b16 %v3088, %v3072
        %v3233 = vpack.c.b16 %v3089, %v3073
        %v3234 = vpack.c.b16 %v3106, %v3090
        %v3235 = vpack.c.b16 %v3107, %v3091
        %v3236 = vpack.c.b16 %v3108, %v3092
        %v3237 = vpack.c.b16 %v3109, %v3093
        %v3238 = vpack.c.b16 %v3110, %v3094
        %v3239 = vpack.c.b16 %v3111, %v3095
        %v3240 = vpack.c.b16 %v3112, %v3096
        %v3241 = vpack.c.b16 %v3113, %v3097
        %v3242 = vpack.c.b16 %v3114, %v3098
        %v3243 = vpack.c.b16 %v3115, %v3099
        %v3244 = vpack.c.b16 %v3116, %v3100
        %v3245 = vpack.c.b16 %v3117, %v3101
        %v3246 = vpack.c.b16 %v3118, %v3102
        %v3247 = vpack.c.b16 %v3119, %v3103
        %v3248 = vpack.c.b16 %v3120, %v3104
        %v3249 = vpack.c.b16 %v3121, %v3105
        %3378 = vmatprep.subr.bf16.mxu0 %v3123
        %3379 = vmatpush1.bf16.msra.mxu0 %v3122
        %3380 = vmatprep.subr.bf16.mxu0 %v3139
        %3381 = vmatpush1.bf16.msra.mxu0 %v3138
        %3382 = vmatprep.subr.bf16.mxu0 %v3155
        %3383 = vmatpush1.bf16.msra.mxu0 %v3154
        %3384 = vmatprep.subr.bf16.mxu0 %v3171
        %3385 = vmatpush1.bf16.msra.mxu0 %v3170
        %3386 = vmatprep.subr.bf16.mxu0 %v3187
        %3387 = vmatpush1.bf16.msra.mxu0 %v3186
        %3388 = vmatprep.subr.bf16.mxu0 %v3203
        %3389 = vmatpush1.bf16.msra.mxu0 %v3202
        %3390 = vmatprep.subr.bf16.mxu0 %v3219
        %3391 = vmatpush1.bf16.msra.mxu0 %v3218
        %3392 = vmatprep.subr.bf16.mxu0 %v3235
        %3393 = vmatpush1.bf16.msra.mxu0 %v3234
        %3394 = vmatprep.subr.bf16.mxu0 0
        %3395 = vmatpush1.bf16.msra.mxu0 0
        %3396 = vmatprep.subr.bf16.mxu0 0
        %3397 = vmatpush1.bf16.msra.mxu0 0
        %3398 = vmatprep.subr.bf16.mxu0 0
        %3399 = vmatpush1.bf16.msra.mxu0 0
        %3400 = vmatprep.subr.bf16.mxu0 0
        %3401 = vmatpush1.bf16.msra.mxu0 0
        %3402 = vmatprep.subr.bf16.mxu0 0
        %3403 = vmatpush1.bf16.msra.mxu0 0
        %3404 = vmatprep.subr.bf16.mxu0 0
        %3405 = vmatpush1.bf16.msra.mxu0 0
        %3406 = vmatprep.subr.bf16.mxu0 0
        %3407 = vmatpush1.bf16.msra.mxu0 0
        %3408 = vmatprep.subr.bf16.mxu0 0
        %3409 = vmatpush1.bf16.msra.mxu0 0
        %3410 = vmatprep.mubr.bf16.mxu0 0
        %3411 = vmatmul.mubr.bf16.gmra.mrb[0].mxu0 %v2525
        %v3412 = vpop.f32.mrb[0].mxu0
        %v3413 = vadd.f32 %v2661, %v3412
        %v3414 = vpop.f32.mrb[0].mxu0
        %v3415 = vadd.f32 %v2665, %v3414
        %v3416 = vpop.f32.mrb[0].mxu0
        %v3417 = vadd.f32 %v2661, %v3416
        %v3418 = vpop.f32.mrb[0].mxu0
        %v3419 = vadd.f32 %v2665, %v3418
        %3420 = vdwg.mxu0
        %3421 = vmatprep.subr.bf16.mxu0 %v3125
        %3422 = vmatpush1.bf16.msra.mxu0 %v3124
        %3423 = vmatprep.subr.bf16.mxu0 %v3141
        %3424 = vmatpush1.bf16.msra.mxu0 %v3140
        %3425 = vmatprep.subr.bf16.mxu0 %v3157
        %3426 = vmatpush1.bf16.msra.mxu0 %v3156
        %3427 = vmatprep.subr.bf16.mxu0 %v3173
        %3428 = vmatpush1.bf16.msra.mxu0 %v3172
        %3429 = vmatprep.subr.bf16.mxu0 %v3189
        %3430 = vmatpush1.bf16.msra.mxu0 %v3188
        %3431 = vmatprep.subr.bf16.mxu0 %v3205
        %3432 = vmatpush1.bf16.msra.mxu0 %v3204
        %3433 = vmatprep.subr.bf16.mxu0 %v3221
        %3434 = vmatpush1.bf16.msra.mxu0 %v3220
        %3435 = vmatprep.subr.bf16.mxu0 %v3237
        %3436 = vmatpush1.bf16.msra.mxu0 %v3236
        %3437 = vmatprep.subr.bf16.mxu0 0
        %3438 = vmatpush1.bf16.msra.mxu0 0
        %3439 = vmatprep.subr.bf16.mxu0 0
        %3440 = vmatpush1.bf16.msra.mxu0 0
        %3441 = vmatprep.subr.bf16.mxu0 0
        %3442 = vmatpush1.bf16.msra.mxu0 0
        %3443 = vmatprep.subr.bf16.mxu0 0
        %3444 = vmatpush1.bf16.msra.mxu0 0
        %3445 = vmatprep.subr.bf16.mxu0 0
        %3446 = vmatpush1.bf16.msra.mxu0 0
        %3447 = vmatprep.subr.bf16.mxu0 0
        %3448 = vmatpush1.bf16.msra.mxu0 0
        %3449 = vmatprep.subr.bf16.mxu0 0
        %3450 = vmatpush1.bf16.msra.mxu0 0
        %3451 = vmatprep.subr.bf16.mxu0 0
        %3452 = vmatpush1.bf16.msra.mxu0 0
        %3453 = vmatprep.mubr.bf16.mxu0 0
        %3454 = vmatmul.mubr.bf16.gmra.mrb[0].mxu0 %v2525
        %v3455 = vpop.f32.mrb[0].mxu0
        %v3456 = vadd.f32 %v2669, %v3455
        %v3457 = vpop.f32.mrb[0].mxu0
        %v3458 = vadd.f32 %v2673, %v3457
        %v3459 = vpop.f32.mrb[0].mxu0
        %v3460 = vadd.f32 %v2669, %v3459
        %v3461 = vpop.f32.mrb[0].mxu0
        %v3462 = vadd.f32 %v2673, %v3461
        %3463 = vdwg.mxu0
        %3464 = vmatprep.subr.bf16.mxu0 %v3127
        %3465 = vmatpush1.bf16.msra.mxu0 %v3126
        %3466 = vmatprep.subr.bf16.mxu0 %v3143
        %3467 = vmatpush1.bf16.msra.mxu0 %v3142
        %3468 = vmatprep.subr.bf16.mxu0 %v3159
        %3469 = vmatpush1.bf16.msra.mxu0 %v3158
        %3470 = vmatprep.subr.bf16.mxu0 %v3175
        %3471 = vmatpush1.bf16.msra.mxu0 %v3174
        %3472 = vmatprep.subr.bf16.mxu0 %v3191
        %3473 = vmatpush1.bf16.msra.mxu0 %v3190
        %3474 = vmatprep.subr.bf16.mxu0 %v3207
        %3475 = vmatpush1.bf16.msra.mxu0 %v3206
        %3476 = vmatprep.subr.bf16.mxu0 %v3223
        %3477 = vmatpush1.bf16.msra.mxu0 %v3222
        %3478 = vmatprep.subr.bf16.mxu0 %v3239
        %3479 = vmatpush1.bf16.msra.mxu0 %v3238
        %3480 = vmatprep.subr.bf16.mxu0 0
        %3481 = vmatpush1.bf16.msra.mxu0 0
        %3482 = vmatprep.subr.bf16.mxu0 0
        %3483 = vmatpush1.bf16.msra.mxu0 0
        %3484 = vmatprep.subr.bf16.mxu0 0
        %3485 = vmatpush1.bf16.msra.mxu0 0
        %3486 = vmatprep.subr.bf16.mxu0 0
        %3487 = vmatpush1.bf16.msra.mxu0 0
        %3488 = vmatprep.subr.bf16.mxu0 0
        %3489 = vmatpush1.bf16.msra.mxu0 0
        %3490 = vmatprep.subr.bf16.mxu0 0
        %3491 = vmatpush1.bf16.msra.mxu0 0
        %3492 = vmatprep.subr.bf16.mxu0 0
        %3493 = vmatpush1.bf16.msra.mxu0 0
        %3494 = vmatprep.subr.bf16.mxu0 0
        %3495 = vmatpush1.bf16.msra.mxu0 0
        %3496 = vmatprep.mubr.bf16.mxu0 0
        %3497 = vmatmul.mubr.bf16.gmra.mrb[0].mxu0 %v2525
        %v3498 = vpop.f32.mrb[0].mxu0
        %v3499 = vadd.f32 %v2677, %v3498
        %v3500 = vpop.f32.mrb[0].mxu0
        %v3501 = vadd.f32 %v2681, %v3500
        %v3502 = vpop.f32.mrb[0].mxu0
        %v3503 = vadd.f32 %v2677, %v3502
        %v3504 = vpop.f32.mrb[0].mxu0
        %v3505 = vadd.f32 %v2681, %v3504
        %3506 = vdwg.mxu0
        %3507 = vmatprep.subr.bf16.mxu0 %v3129
        %3508 = vmatpush1.bf16.msra.mxu0 %v3128
        %3509 = vmatprep.subr.bf16.mxu0 %v3145
        %3510 = vmatpush1.bf16.msra.mxu0 %v3144
        %3511 = vmatprep.subr.bf16.mxu0 %v3161
        %3512 = vmatpush1.bf16.msra.mxu0 %v3160
        %3513 = vmatprep.subr.bf16.mxu0 %v3177
        %3514 = vmatpush1.bf16.msra.mxu0 %v3176
        %3515 = vmatprep.subr.bf16.mxu0 %v3193
        %3516 = vmatpush1.bf16.msra.mxu0 %v3192
        %3517 = vmatprep.subr.bf16.mxu0 %v3209
        %3518 = vmatpush1.bf16.msra.mxu0 %v3208
        %3519 = vmatprep.subr.bf16.mxu0 %v3225
        %3520 = vmatpush1.bf16.msra.mxu0 %v3224
        %3521 = vmatprep.subr.bf16.mxu0 %v3241
        %3522 = vmatpush1.bf16.msra.mxu0 %v3240
        %3523 = vmatprep.subr.bf16.mxu0 0
        %3524 = vmatpush1.bf16.msra.mxu0 0
        %3525 = vmatprep.subr.bf16.mxu0 0
        %3526 = vmatpush1.bf16.msra.mxu0 0
        %3527 = vmatprep.subr.bf16.mxu0 0
        %3528 = vmatpush1.bf16.msra.mxu0 0
        %3529 = vmatprep.subr.bf16.mxu0 0
        %3530 = vmatpush1.bf16.msra.mxu0 0
        %3531 = vmatprep.subr.bf16.mxu0 0
        %3532 = vmatpush1.bf16.msra.mxu0 0
        %3533 = vmatprep.subr.bf16.mxu0 0
        %3534 = vmatpush1.bf16.msra.mxu0 0
        %3535 = vmatprep.subr.bf16.mxu0 0
        %3536 = vmatpush1.bf16.msra.mxu0 0
        %3537 = vmatprep.subr.bf16.mxu0 0
        %3538 = vmatpush1.bf16.msra.mxu0 0
        %3539 = vmatprep.mubr.bf16.mxu0 0
        %3540 = vmatmul.mubr.bf16.gmra.mrb[0].mxu0 %v2525
        %v3541 = vpop.f32.mrb[0].mxu0
        %v3542 = vadd.f32 %v2685, %v3541
        %v3543 = vpop.f32.mrb[0].mxu0
        %v3544 = vadd.f32 %v2689, %v3543
        %v3545 = vpop.f32.mrb[0].mxu0
        %v3546 = vadd.f32 %v2685, %v3545
        %v3547 = vpop.f32.mrb[0].mxu0
        %v3548 = vadd.f32 %v2689, %v3547
        %3549 = vdwg.mxu0
        %3550 = vmatprep.subr.bf16.mxu0 %v3131
        %3551 = vmatpush1.bf16.msra.mxu0 %v3130
        %3552 = vmatprep.subr.bf16.mxu0 %v3147
        %3553 = vmatpush1.bf16.msra.mxu0 %v3146
        %3554 = vmatprep.subr.bf16.mxu0 %v3163
        %3555 = vmatpush1.bf16.msra.mxu0 %v3162
        %3556 = vmatprep.subr.bf16.mxu0 %v3179
        %3557 = vmatpush1.bf16.msra.mxu0 %v3178
        %3558 = vmatprep.subr.bf16.mxu0 %v3195
        %3559 = vmatpush1.bf16.msra.mxu0 %v3194
        %3560 = vmatprep.subr.bf16.mxu0 %v3211
        %3561 = vmatpush1.bf16.msra.mxu0 %v3210
        %3562 = vmatprep.subr.bf16.mxu0 %v3227
        %3563 = vmatpush1.bf16.msra.mxu0 %v3226
        %3564 = vmatprep.subr.bf16.mxu0 %v3243
        %3565 = vmatpush1.bf16.msra.mxu0 %v3242
        %3566 = vmatprep.subr.bf16.mxu0 0
        %3567 = vmatpush1.bf16.msra.mxu0 0
        %3568 = vmatprep.subr.bf16.mxu0 0
        %3569 = vmatpush1.bf16.msra.mxu0 0
        %3570 = vmatprep.subr.bf16.mxu0 0
        %3571 = vmatpush1.bf16.msra.mxu0 0
        %3572 = vmatprep.subr.bf16.mxu0 0
        %3573 = vmatpush1.bf16.msra.mxu0 0
        %3574 = vmatprep.subr.bf16.mxu0 0
        %3575 = vmatpush1.bf16.msra.mxu0 0
        %3576 = vmatprep.subr.bf16.mxu0 0
        %3577 = vmatpush1.bf16.msra.mxu0 0
        %3578 = vmatprep.subr.bf16.mxu0 0
        %3579 = vmatpush1.bf16.msra.mxu0 0
        %3580 = vmatprep.subr.bf16.mxu0 0
        %3581 = vmatpush1.bf16.msra.mxu0 0
        %3582 = vmatprep.mubr.bf16.mxu0 0
        %3583 = vmatmul.mubr.bf16.gmra.mrb[0].mxu0 %v2525
        %v3584 = vpop.f32.mrb[0].mxu0
        %v3585 = vadd.f32 %v2693, %v3584
        %v3586 = vpop.f32.mrb[0].mxu0
        %v3587 = vadd.f32 %v2697, %v3586
        %v3588 = vpop.f32.mrb[0].mxu0
        %v3589 = vadd.f32 %v2693, %v3588
        %v3590 = vpop.f32.mrb[0].mxu0
        %v3591 = vadd.f32 %v2697, %v3590
        %3592 = vdwg.mxu0
        %3593 = vmatprep.subr.bf16.mxu0 %v3133
        %3594 = vmatpush1.bf16.msra.mxu0 %v3132
        %3595 = vmatprep.subr.bf16.mxu0 %v3149
        %3596 = vmatpush1.bf16.msra.mxu0 %v3148
        %3597 = vmatprep.subr.bf16.mxu0 %v3165
        %3598 = vmatpush1.bf16.msra.mxu0 %v3164
        %3599 = vmatprep.subr.bf16.mxu0 %v3181
        %3600 = vmatpush1.bf16.msra.mxu0 %v3180
        %3601 = vmatprep.subr.bf16.mxu0 %v3197
        %3602 = vmatpush1.bf16.msra.mxu0 %v3196
        %3603 = vmatprep.subr.bf16.mxu0 %v3213
        %3604 = vmatpush1.bf16.msra.mxu0 %v3212
        %3605 = vmatprep.subr.bf16.mxu0 %v3229
        %3606 = vmatpush1.bf16.msra.mxu0 %v3228
        %3607 = vmatprep.subr.bf16.mxu0 %v3245
        %3608 = vmatpush1.bf16.msra.mxu0 %v3244
        %3609 = vmatprep.subr.bf16.mxu0 0
        %3610 = vmatpush1.bf16.msra.mxu0 0
        %3611 = vmatprep.subr.bf16.mxu0 0
        %3612 = vmatpush1.bf16.msra.mxu0 0
        %3613 = vmatprep.subr.bf16.mxu0 0
        %3614 = vmatpush1.bf16.msra.mxu0 0
        %3615 = vmatprep.subr.bf16.mxu0 0
        %3616 = vmatpush1.bf16.msra.mxu0 0
        %3617 = vmatprep.subr.bf16.mxu0 0
        %3618 = vmatpush1.bf16.msra.mxu0 0
        %3619 = vmatprep.subr.bf16.mxu0 0
        %3620 = vmatpush1.bf16.msra.mxu0 0
        %3621 = vmatprep.subr.bf16.mxu0 0
        %3622 = vmatpush1.bf16.msra.mxu0 0
        %3623 = vmatprep.subr.bf16.mxu0 0
        %3624 = vmatpush1.bf16.msra.mxu0 0
        %3625 = vmatprep.mubr.bf16.mxu0 0
        %3626 = vmatmul.mubr.bf16.gmra.mrb[0].mxu0 %v2525
        %v3627 = vpop.f32.mrb[0].mxu0
        %v3628 = vadd.f32 %v2701, %v3627
        %v3629 = vpop.f32.mrb[0].mxu0
        %v3630 = vadd.f32 %v2705, %v3629
        %v3631 = vpop.f32.mrb[0].mxu0
        %v3632 = vadd.f32 %v2701, %v3631
        %v3633 = vpop.f32.mrb[0].mxu0
        %v3634 = vadd.f32 %v2705, %v3633
        %3635 = vdwg.mxu0
        %3636 = vmatprep.subr.bf16.mxu0 %v3135
        %3637 = vmatpush1.bf16.msra.mxu0 %v3134
        %3638 = vmatprep.subr.bf16.mxu0 %v3151
        %3639 = vmatpush1.bf16.msra.mxu0 %v3150
        %3640 = vmatprep.subr.bf16.mxu0 %v3167
        %3641 = vmatpush1.bf16.msra.mxu0 %v3166
        %3642 = vmatprep.subr.bf16.mxu0 %v3183
        %3643 = vmatpush1.bf16.msra.mxu0 %v3182
        %3644 = vmatprep.subr.bf16.mxu0 %v3199
        %3645 = vmatpush1.bf16.msra.mxu0 %v3198
        %3646 = vmatprep.subr.bf16.mxu0 %v3215
        %3647 = vmatpush1.bf16.msra.mxu0 %v3214
        %3648 = vmatprep.subr.bf16.mxu0 %v3231
        %3649 = vmatpush1.bf16.msra.mxu0 %v3230
        %3650 = vmatprep.subr.bf16.mxu0 %v3247
        %3651 = vmatpush1.bf16.msra.mxu0 %v3246
        %3652 = vmatprep.subr.bf16.mxu0 0
        %3653 = vmatpush1.bf16.msra.mxu0 0
        %3654 = vmatprep.subr.bf16.mxu0 0
        %3655 = vmatpush1.bf16.msra.mxu0 0
        %3656 = vmatprep.subr.bf16.mxu0 0
        %3657 = vmatpush1.bf16.msra.mxu0 0
        %3658 = vmatprep.subr.bf16.mxu0 0
        %3659 = vmatpush1.bf16.msra.mxu0 0
        %3660 = vmatprep.subr.bf16.mxu0 0
        %3661 = vmatpush1.bf16.msra.mxu0 0
        %3662 = vmatprep.subr.bf16.mxu0 0
        %3663 = vmatpush1.bf16.msra.mxu0 0
        %3664 = vmatprep.subr.bf16.mxu0 0
        %3665 = vmatpush1.bf16.msra.mxu0 0
        %3666 = vmatprep.subr.bf16.mxu0 0
        %3667 = vmatpush1.bf16.msra.mxu0 0
        %3668 = vmatprep.mubr.bf16.mxu0 0
        %3669 = vmatmul.mubr.bf16.gmra.mrb[0].mxu0 %v2525
        %v3670 = vpop.f32.mrb[0].mxu0
        %v3671 = vadd.f32 %v2709, %v3670
        %v3672 = vpop.f32.mrb[0].mxu0
        %v3673 = vadd.f32 %v2713, %v3672
        %v3674 = vpop.f32.mrb[0].mxu0
        %v3675 = vadd.f32 %v2709, %v3674
        %v3676 = vpop.f32.mrb[0].mxu0
        %v3677 = vadd.f32 %v2713, %v3676
        %3678 = vdwg.mxu0
        %3679 = vmatprep.subr.bf16.mxu0 %v3137
        %3680 = vmatpush1.bf16.msra.mxu0 %v3136
        %3681 = vmatprep.subr.bf16.mxu0 %v3153
        %3682 = vmatpush1.bf16.msra.mxu0 %v3152
        %3683 = vmatprep.subr.bf16.mxu0 %v3169
        %3684 = vmatpush1.bf16.msra.mxu0 %v3168
        %3685 = vmatprep.subr.bf16.mxu0 %v3185
        %3686 = vmatpush1.bf16.msra.mxu0 %v3184
        %3687 = vmatprep.subr.bf16.mxu0 %v3201
        %3688 = vmatpush1.bf16.msra.mxu0 %v3200
        %3689 = vmatprep.subr.bf16.mxu0 %v3217
        %3690 = vmatpush1.bf16.msra.mxu0 %v3216
        %3691 = vmatprep.subr.bf16.mxu0 %v3233
        %3692 = vmatpush1.bf16.msra.mxu0 %v3232
        %3693 = vmatprep.subr.bf16.mxu0 %v3249
        %3694 = vmatpush1.bf16.msra.mxu0 %v3248
        %3695 = vmatprep.subr.bf16.mxu0 0
        %3696 = vmatpush1.bf16.msra.mxu0 0
        %3697 = vmatprep.subr.bf16.mxu0 0
        %3698 = vmatpush1.bf16.msra.mxu0 0
        %3699 = vmatprep.subr.bf16.mxu0 0
        %3700 = vmatpush1.bf16.msra.mxu0 0
        %3701 = vmatprep.subr.bf16.mxu0 0
        %3702 = vmatpush1.bf16.msra.mxu0 0
        %3703 = vmatprep.subr.bf16.mxu0 0
        %3704 = vmatpush1.bf16.msra.mxu0 0
        %3705 = vmatprep.subr.bf16.mxu0 0
        %3706 = vmatpush1.bf16.msra.mxu0 0
        %3707 = vmatprep.subr.bf16.mxu0 0
        %3708 = vmatpush1.bf16.msra.mxu0 0
        %3709 = vmatprep.subr.bf16.mxu0 0
        %3710 = vmatpush1.bf16.msra.mxu0 0
        %3711 = vmatprep.mubr.bf16.mxu0 0
        %3712 = vmatmul.mubr.bf16.gmra.mrb[0].mxu0 %v2525
        %v3713 = vpop.f32.mrb[0].mxu0
        %v3714 = vadd.f32 %v2717, %v3713
        %v3715 = vpop.f32.mrb[0].mxu0
        %v3716 = vadd.f32 %v2721, %v3715
        %v3717 = vpop.f32.mrb[0].mxu0
        %v3718 = vadd.f32 %v2717, %v3717
        %v3719 = vpop.f32.mrb[0].mxu0
        %v3720 = vadd.f32 %v2721, %v3719
        %3721 = vdwg.mxu0
        %v3722 = vmax.f32 %v3413, 0.0
        %v3723 = vmax.f32 %v3415, 0.0
        %v3724 = vmax.f32 %v3456, 0.0
        %v3725 = vmax.f32 %v3458, 0.0
        %v3726 = vmax.f32 %v3499, 0.0
        %v3727 = vmax.f32 %v3501, 0.0
        %v3728 = vmax.f32 %v3542, 0.0
        %v3729 = vmax.f32 %v3544, 0.0
        %v3730 = vmax.f32 %v3585, 0.0
        %v3731 = vmax.f32 %v3587, 0.0
        %v3732 = vmax.f32 %v3628, 0.0
        %v3733 = vmax.f32 %v3630, 0.0
        %v3734 = vmax.f32 %v3671, 0.0
        %v3735 = vmax.f32 %v3673, 0.0
        %v3736 = vmax.f32 %v3714, 0.0
        %v3737 = vmax.f32 %v3716, 0.0
        %v3738 = vmax.f32 %v3417, 0.0
        %v3739 = vmax.f32 %v3419, 0.0
        %v3740 = vmax.f32 %v3460, 0.0
        %v3741 = vmax.f32 %v3462, 0.0
        %v3742 = vmax.f32 %v3503, 0.0
        %v3743 = vmax.f32 %v3505, 0.0
        %v3744 = vmax.f32 %v3546, 0.0
        %v3745 = vmax.f32 %v3548, 0.0
        %v3746 = vmax.f32 %v3589, 0.0
        %v3747 = vmax.f32 %v3591, 0.0
        %v3748 = vmax.f32 %v3632, 0.0
        %v3749 = vmax.f32 %v3634, 0.0
        %v3750 = vmax.f32 %v3675, 0.0
        %v3751 = vmax.f32 %v3677, 0.0
        %v3752 = vmax.f32 %v3718, 0.0
        %v3753 = vmax.f32 %v3720, 0.0
        %v3754 = vpack.c.bf16 %v3738, %v3722
        %v3755 = vpack.c.bf16 %v3739, %v3723
        %v3756 = vpack.c.bf16 %v3740, %v3724
        %v3757 = vpack.c.bf16 %v3741, %v3725
        %v3758 = vpack.c.bf16 %v3742, %v3726
        %v3759 = vpack.c.bf16 %v3743, %v3727
        %v3760 = vpack.c.bf16 %v3744, %v3728
        %v3761 = vpack.c.bf16 %v3745, %v3729
        %v3762 = vpack.c.bf16 %v3746, %v3730
        %v3763 = vpack.c.bf16 %v3747, %v3731
        %v3764 = vpack.c.bf16 %v3748, %v3732
        %v3765 = vpack.c.bf16 %v3749, %v3733
        %v3766 = vpack.c.bf16 %v3750, %v3734
        %v3767 = vpack.c.bf16 %v3751, %v3735
        %v3768 = vpack.c.bf16 %v3752, %v3736
        %v3769 = vpack.c.bf16 %v3753, %v3737
        %v3770 = vld [vmem:[%s686] sm:$0xf]
        %v3771 = vld [vmem:[%s686 + $0x4] sm:$0xf]
        %v3772 = vld [vmem:[%s686 + $0x8] sm:$0xf]
        %v3773 = vld [vmem:[%s686 + $0xc] sm:$0xf]
        %v3774 = vld [vmem:[%s686 + $0x10] sm:$0xf]
        %v3775 = vld [vmem:[%s686 + $0x14] sm:$0xf]
        %v3776 = vld [vmem:[%s686 + $0x18] sm:$0xf]
        %v3777 = vld [vmem:[%s686 + $0x1c] sm:$0xf]
        %v3778 = vld [vmem:[%s686 + $0x20] sm:$0xf]
        %v3779 = vld [vmem:[%s686 + $0x24] sm:$0xf]
        %v3780 = vld [vmem:[%s686 + $0x28] sm:$0xf]
        %v3781 = vld [vmem:[%s686 + $0x2c] sm:$0xf]
        %v3782 = vld [vmem:[%s686 + $0x30] sm:$0xf]
        %v3783 = vld [vmem:[%s686 + $0x34] sm:$0xf]
        %v3784 = vld [vmem:[%s686 + $0x38] sm:$0xf]
        %v3785 = vld [vmem:[%s686 + $0x3c] sm:$0xf]
        %v3786 = vld [vmem:[%s686 + $0x40] sm:$0xf]
        %v3787 = vld [vmem:[%s686 + $0x44] sm:$0xf]
        %v3788 = vld [vmem:[%s686 + $0x48] sm:$0xf]
        %v3789 = vld [vmem:[%s686 + $0x4c] sm:$0xf]
        %v3790 = vld [vmem:[%s686 + $0x50] sm:$0xf]
        %v3791 = vld [vmem:[%s686 + $0x54] sm:$0xf]
        %v3792 = vld [vmem:[%s686 + $0x58] sm:$0xf]
        %v3793 = vld [vmem:[%s686 + $0x5c] sm:$0xf]
        %v3794 = vld [vmem:[%s686 + $0x60] sm:$0xf]
        %v3795 = vld [vmem:[%s686 + $0x64] sm:$0xf]
        %v3796 = vld [vmem:[%s686 + $0x68] sm:$0xf]
        %v3797 = vld [vmem:[%s686 + $0x6c] sm:$0xf]
        %v3798 = vld [vmem:[%s686 + $0x70] sm:$0xf]
        %v3799 = vld [vmem:[%s686 + $0x74] sm:$0xf]
        %v3800 = vld [vmem:[%s686 + $0x78] sm:$0xf]
        %v3801 = vld [vmem:[%s686 + $0x7c] sm:$0xf]
        %v3802 = vld [vmem:[%s686 + $0x80] sm:$0xf]
        %v3803 = vld [vmem:[%s686 + $0x84] sm:$0xf]
        %v3804 = vld [vmem:[%s686 + $0x88] sm:$0xf]
        %v3805 = vld [vmem:[%s686 + $0x8c] sm:$0xf]
        %v3806 = vld [vmem:[%s686 + $0x90] sm:$0xf]
        %v3807 = vld [vmem:[%s686 + $0x94] sm:$0xf]
        %v3808 = vld [vmem:[%s686 + $0x98] sm:$0xf]
        %v3809 = vld [vmem:[%s686 + $0x9c] sm:$0xf]
        %v3810 = vld [vmem:[%s686 + $0xa0] sm:$0xf]
        %v3811 = vld [vmem:[%s686 + $0xa4] sm:$0xf]
        %v3812 = vld [vmem:[%s686 + $0xa8] sm:$0xf]
        %v3813 = vld [vmem:[%s686 + $0xac] sm:$0xf]
        %v3814 = vld [vmem:[%s686 + $0xb0] sm:$0xf]
        %v3815 = vld [vmem:[%s686 + $0xb4] sm:$0xf]
        %v3816 = vld [vmem:[%s686 + $0xb8] sm:$0xf]
        %v3817 = vld [vmem:[%s686 + $0xbc] sm:$0xf]
        %v3818 = vld [vmem:[%s686 + $0xc0] sm:$0xf]
        %v3819 = vld [vmem:[%s686 + $0xc4] sm:$0xf]
        %v3820 = vld [vmem:[%s686 + $0xc8] sm:$0xf]
        %v3821 = vld [vmem:[%s686 + $0xcc] sm:$0xf]
        %v3822 = vld [vmem:[%s686 + $0xd0] sm:$0xf]
        %v3823 = vld [vmem:[%s686 + $0xd4] sm:$0xf]
        %v3824 = vld [vmem:[%s686 + $0xd8] sm:$0xf]
        %v3825 = vld [vmem:[%s686 + $0xdc] sm:$0xf]
        %v3826 = vld [vmem:[%s686 + $0xe0] sm:$0xf]
        %v3827 = vld [vmem:[%s686 + $0xe4] sm:$0xf]
        %v3828 = vld [vmem:[%s686 + $0xe8] sm:$0xf]
        %v3829 = vld [vmem:[%s686 + $0xec] sm:$0xf]
        %v3830 = vld [vmem:[%s686 + $0xf0] sm:$0xf]
        %v3831 = vld [vmem:[%s686 + $0xf4] sm:$0xf]
        %v3832 = vld [vmem:[%s686 + $0xf8] sm:$0xf]
        %v3833 = vld [vmem:[%s686 + $0xfc] sm:$0xf]
        %v3834 = vld [vmem:[%s686 + $0x100] sm:$0xf]
        %v3835 = vld [vmem:[%s686 + $0x104] sm:$0xf]
        %v3836 = vld [vmem:[%s686 + $0x108] sm:$0xf]
        %v3837 = vld [vmem:[%s686 + $0x10c] sm:$0xf]
        %v3838 = vld [vmem:[%s686 + $0x110] sm:$0xf]
        %v3839 = vld [vmem:[%s686 + $0x114] sm:$0xf]
        %v3840 = vld [vmem:[%s686 + $0x118] sm:$0xf]
        %v3841 = vld [vmem:[%s686 + $0x11c] sm:$0xf]
        %v3842 = vld [vmem:[%s686 + $0x120] sm:$0xf]
        %v3843 = vld [vmem:[%s686 + $0x124] sm:$0xf]
        %v3844 = vld [vmem:[%s686 + $0x128] sm:$0xf]
        %v3845 = vld [vmem:[%s686 + $0x12c] sm:$0xf]
        %v3846 = vld [vmem:[%s686 + $0x130] sm:$0xf]
        %v3847 = vld [vmem:[%s686 + $0x134] sm:$0xf]
        %v3848 = vld [vmem:[%s686 + $0x138] sm:$0xf]
        %v3849 = vld [vmem:[%s686 + $0x13c] sm:$0xf]
        %v3850 = vld [vmem:[%s686 + $0x140] sm:$0xf]
        %v3851 = vld [vmem:[%s686 + $0x144] sm:$0xf]
        %v3852 = vld [vmem:[%s686 + $0x148] sm:$0xf]
        %v3853 = vld [vmem:[%s686 + $0x14c] sm:$0xf]
        %v3854 = vld [vmem:[%s686 + $0x150] sm:$0xf]
        %v3855 = vld [vmem:[%s686 + $0x154] sm:$0xf]
        %v3856 = vld [vmem:[%s686 + $0x158] sm:$0xf]
        %v3857 = vld [vmem:[%s686 + $0x15c] sm:$0xf]
        %v3858 = vld [vmem:[%s686 + $0x160] sm:$0xf]
        %v3859 = vld [vmem:[%s686 + $0x164] sm:$0xf]
        %v3860 = vld [vmem:[%s686 + $0x168] sm:$0xf]
        %v3861 = vld [vmem:[%s686 + $0x16c] sm:$0xf]
        %v3862 = vld [vmem:[%s686 + $0x170] sm:$0xf]
        %v3863 = vld [vmem:[%s686 + $0x174] sm:$0xf]
        %v3864 = vld [vmem:[%s686 + $0x178] sm:$0xf]
        %v3865 = vld [vmem:[%s686 + $0x17c] sm:$0xf]
        %v3866 = vld [vmem:[%s686 + $0x180] sm:$0xf]
        %v3867 = vld [vmem:[%s686 + $0x184] sm:$0xf]
        %v3868 = vld [vmem:[%s686 + $0x188] sm:$0xf]
        %v3869 = vld [vmem:[%s686 + $0x18c] sm:$0xf]
        %v3870 = vld [vmem:[%s686 + $0x190] sm:$0xf]
        %v3871 = vld [vmem:[%s686 + $0x194] sm:$0xf]
        %v3872 = vld [vmem:[%s686 + $0x198] sm:$0xf]
        %v3873 = vld [vmem:[%s686 + $0x19c] sm:$0xf]
        %v3874 = vld [vmem:[%s686 + $0x1a0] sm:$0xf]
        %v3875 = vld [vmem:[%s686 + $0x1a4] sm:$0xf]
        %v3876 = vld [vmem:[%s686 + $0x1a8] sm:$0xf]
        %v3877 = vld [vmem:[%s686 + $0x1ac] sm:$0xf]
        %v3878 = vld [vmem:[%s686 + $0x1b0] sm:$0xf]
        %v3879 = vld [vmem:[%s686 + $0x1b4] sm:$0xf]
        %v3880 = vld [vmem:[%s686 + $0x1b8] sm:$0xf]
        %v3881 = vld [vmem:[%s686 + $0x1bc] sm:$0xf]
        %v3882 = vld [vmem:[%s686 + $0x1c0] sm:$0xf]
        %v3883 = vld [vmem:[%s686 + $0x1c4] sm:$0xf]
        %v3884 = vld [vmem:[%s686 + $0x1c8] sm:$0xf]
        %v3885 = vld [vmem:[%s686 + $0x1cc] sm:$0xf]
        %v3886 = vld [vmem:[%s686 + $0x1d0] sm:$0xf]
        %v3887 = vld [vmem:[%s686 + $0x1d4] sm:$0xf]
        %v3888 = vld [vmem:[%s686 + $0x1d8] sm:$0xf]
        %v3889 = vld [vmem:[%s686 + $0x1dc] sm:$0xf]
        %v3890 = vld [vmem:[%s686 + $0x1e0] sm:$0xf]
        %v3891 = vld [vmem:[%s686 + $0x1e4] sm:$0xf]
        %v3892 = vld [vmem:[%s686 + $0x1e8] sm:$0xf]
        %v3893 = vld [vmem:[%s686 + $0x1ec] sm:$0xf]
        %v3894 = vld [vmem:[%s686 + $0x1f0] sm:$0xf]
        %v3895 = vld [vmem:[%s686 + $0x1f4] sm:$0xf]
        %v3896 = vld [vmem:[%s686 + $0x1f8] sm:$0xf]
        %v3897 = vld [vmem:[%s686 + $0x1fc] sm:$0xf]
        %v3898 = vld [vmem:[%s686 + $0x200] sm:$0xf]
        %v3899 = vld [vmem:[%s686 + $0x204] sm:$0xf]
        %v3900 = vld [vmem:[%s686 + $0x208] sm:$0xf]
        %v3901 = vld [vmem:[%s686 + $0x20c] sm:$0xf]
        %v3902 = vld [vmem:[%s686 + $0x210] sm:$0xf]
        %v3903 = vld [vmem:[%s686 + $0x214] sm:$0xf]
        %v3904 = vld [vmem:[%s686 + $0x218] sm:$0xf]
        %v3905 = vld [vmem:[%s686 + $0x21c] sm:$0xf]
        %v3906 = vld [vmem:[%s686 + $0x220] sm:$0xf]
        %v3907 = vld [vmem:[%s686 + $0x224] sm:$0xf]
        %v3908 = vld [vmem:[%s686 + $0x228] sm:$0xf]
        %v3909 = vld [vmem:[%s686 + $0x22c] sm:$0xf]
        %v3910 = vld [vmem:[%s686 + $0x230] sm:$0xf]
        %v3911 = vld [vmem:[%s686 + $0x234] sm:$0xf]
        %v3912 = vld [vmem:[%s686 + $0x238] sm:$0xf]
        %v3913 = vld [vmem:[%s686 + $0x23c] sm:$0xf]
        %v3914 = vld [vmem:[%s686 + $0x240] sm:$0xf]
        %v3915 = vld [vmem:[%s686 + $0x244] sm:$0xf]
        %v3916 = vld [vmem:[%s686 + $0x248] sm:$0xf]
        %v3917 = vld [vmem:[%s686 + $0x24c] sm:$0xf]
        %v3918 = vld [vmem:[%s686 + $0x250] sm:$0xf]
        %v3919 = vld [vmem:[%s686 + $0x254] sm:$0xf]
        %v3920 = vld [vmem:[%s686 + $0x258] sm:$0xf]
        %v3921 = vld [vmem:[%s686 + $0x25c] sm:$0xf]
        %v3922 = vld [vmem:[%s686 + $0x260] sm:$0xf]
        %v3923 = vld [vmem:[%s686 + $0x264] sm:$0xf]
        %v3924 = vld [vmem:[%s686 + $0x268] sm:$0xf]
        %v3925 = vld [vmem:[%s686 + $0x26c] sm:$0xf]
        %v3926 = vld [vmem:[%s686 + $0x270] sm:$0xf]
        %v3927 = vld [vmem:[%s686 + $0x274] sm:$0xf]
        %v3928 = vld [vmem:[%s686 + $0x278] sm:$0xf]
        %v3929 = vld [vmem:[%s686 + $0x27c] sm:$0xf]
        %v3930 = vld [vmem:[%s686 + $0x280] sm:$0xf]
        %v3931 = vld [vmem:[%s686 + $0x284] sm:$0xf]
        %v3932 = vld [vmem:[%s686 + $0x288] sm:$0xf]
        %v3933 = vld [vmem:[%s686 + $0x28c] sm:$0xf]
        %v3934 = vld [vmem:[%s686 + $0x290] sm:$0xf]
        %v3935 = vld [vmem:[%s686 + $0x294] sm:$0xf]
        %v3936 = vld [vmem:[%s686 + $0x298] sm:$0xf]
        %v3937 = vld [vmem:[%s686 + $0x29c] sm:$0xf]
        %v3938 = vld [vmem:[%s686 + $0x2a0] sm:$0xf]
        %v3939 = vld [vmem:[%s686 + $0x2a4] sm:$0xf]
        %v3940 = vld [vmem:[%s686 + $0x2a8] sm:$0xf]
        %v3941 = vld [vmem:[%s686 + $0x2ac] sm:$0xf]
        %v3942 = vld [vmem:[%s686 + $0x2b0] sm:$0xf]
        %v3943 = vld [vmem:[%s686 + $0x2b4] sm:$0xf]
        %v3944 = vld [vmem:[%s686 + $0x2b8] sm:$0xf]
        %v3945 = vld [vmem:[%s686 + $0x2bc] sm:$0xf]
        %v3946 = vld [vmem:[%s686 + $0x2c0] sm:$0xf]
        %v3947 = vld [vmem:[%s686 + $0x2c4] sm:$0xf]
        %v3948 = vld [vmem:[%s686 + $0x2c8] sm:$0xf]
        %v3949 = vld [vmem:[%s686 + $0x2cc] sm:$0xf]
        %v3950 = vld [vmem:[%s686 + $0x2d0] sm:$0xf]
        %v3951 = vld [vmem:[%s686 + $0x2d4] sm:$0xf]
        %v3952 = vld [vmem:[%s686 + $0x2d8] sm:$0xf]
        %v3953 = vld [vmem:[%s686 + $0x2dc] sm:$0xf]
        %v3954 = vld [vmem:[%s686 + $0x2e0] sm:$0xf]
        %v3955 = vld [vmem:[%s686 + $0x2e4] sm:$0xf]
        %v3956 = vld [vmem:[%s686 + $0x2e8] sm:$0xf]
        %v3957 = vld [vmem:[%s686 + $0x2ec] sm:$0xf]
        %v3958 = vld [vmem:[%s686 + $0x2f0] sm:$0xf]
        %v3959 = vld [vmem:[%s686 + $0x2f4] sm:$0xf]
        %v3960 = vld [vmem:[%s686 + $0x2f8] sm:$0xf]
        %v3961 = vld [vmem:[%s686 + $0x2fc] sm:$0xf]
        %v3962 = vld [vmem:[%s686 + $0x300] sm:$0xf]
        %v3963 = vld [vmem:[%s686 + $0x304] sm:$0xf]
        %v3964 = vld [vmem:[%s686 + $0x308] sm:$0xf]
        %v3965 = vld [vmem:[%s686 + $0x30c] sm:$0xf]
        %v3966 = vld [vmem:[%s686 + $0x310] sm:$0xf]
        %v3967 = vld [vmem:[%s686 + $0x314] sm:$0xf]
        %v3968 = vld [vmem:[%s686 + $0x318] sm:$0xf]
        %v3969 = vld [vmem:[%s686 + $0x31c] sm:$0xf]
        %v3970 = vld [vmem:[%s686 + $0x320] sm:$0xf]
        %v3971 = vld [vmem:[%s686 + $0x324] sm:$0xf]
        %v3972 = vld [vmem:[%s686 + $0x328] sm:$0xf]
        %v3973 = vld [vmem:[%s686 + $0x32c] sm:$0xf]
        %v3974 = vld [vmem:[%s686 + $0x330] sm:$0xf]
        %v3975 = vld [vmem:[%s686 + $0x334] sm:$0xf]
        %v3976 = vld [vmem:[%s686 + $0x338] sm:$0xf]
        %v3977 = vld [vmem:[%s686 + $0x33c] sm:$0xf]
        %v3978 = vld [vmem:[%s686 + $0x340] sm:$0xf]
        %v3979 = vld [vmem:[%s686 + $0x344] sm:$0xf]
        %v3980 = vld [vmem:[%s686 + $0x348] sm:$0xf]
        %v3981 = vld [vmem:[%s686 + $0x34c] sm:$0xf]
        %v3982 = vld [vmem:[%s686 + $0x350] sm:$0xf]
        %v3983 = vld [vmem:[%s686 + $0x354] sm:$0xf]
        %v3984 = vld [vmem:[%s686 + $0x358] sm:$0xf]
        %v3985 = vld [vmem:[%s686 + $0x35c] sm:$0xf]
        %v3986 = vld [vmem:[%s686 + $0x360] sm:$0xf]
        %v3987 = vld [vmem:[%s686 + $0x364] sm:$0xf]
        %v3988 = vld [vmem:[%s686 + $0x368] sm:$0xf]
        %v3989 = vld [vmem:[%s686 + $0x36c] sm:$0xf]
        %v3990 = vld [vmem:[%s686 + $0x370] sm:$0xf]
        %v3991 = vld [vmem:[%s686 + $0x374] sm:$0xf]
        %v3992 = vld [vmem:[%s686 + $0x378] sm:$0xf]
        %v3993 = vld [vmem:[%s686 + $0x37c] sm:$0xf]
        %v3994 = vld [vmem:[%s686 + $0x380] sm:$0xf]
        %v3995 = vld [vmem:[%s686 + $0x384] sm:$0xf]
        %v3996 = vld [vmem:[%s686 + $0x388] sm:$0xf]
        %v3997 = vld [vmem:[%s686 + $0x38c] sm:$0xf]
        %v3998 = vld [vmem:[%s686 + $0x390] sm:$0xf]
        %v3999 = vld [vmem:[%s686 + $0x394] sm:$0xf]
        %v4000 = vld [vmem:[%s686 + $0x398] sm:$0xf]
        %v4001 = vld [vmem:[%s686 + $0x39c] sm:$0xf]
        %v4002 = vld [vmem:[%s686 + $0x3a0] sm:$0xf]
        %v4003 = vld [vmem:[%s686 + $0x3a4] sm:$0xf]
        %v4004 = vld [vmem:[%s686 + $0x3a8] sm:$0xf]
        %v4005 = vld [vmem:[%s686 + $0x3ac] sm:$0xf]
        %v4006 = vld [vmem:[%s686 + $0x3b0] sm:$0xf]
        %v4007 = vld [vmem:[%s686 + $0x3b4] sm:$0xf]
        %v4008 = vld [vmem:[%s686 + $0x3b8] sm:$0xf]
        %v4009 = vld [vmem:[%s686 + $0x3bc] sm:$0xf]
        %v4010 = vld [vmem:[%s686 + $0x3c0] sm:$0xf]
        %v4011 = vld [vmem:[%s686 + $0x3c4] sm:$0xf]
        %v4012 = vld [vmem:[%s686 + $0x3c8] sm:$0xf]
        %v4013 = vld [vmem:[%s686 + $0x3cc] sm:$0xf]
        %v4014 = vld [vmem:[%s686 + $0x3d0] sm:$0xf]
        %v4015 = vld [vmem:[%s686 + $0x3d4] sm:$0xf]
        %v4016 = vld [vmem:[%s686 + $0x3d8] sm:$0xf]
        %v4017 = vld [vmem:[%s686 + $0x3dc] sm:$0xf]
        %v4018 = vld [vmem:[%s686 + $0x3e0] sm:$0xf]
        %v4019 = vld [vmem:[%s686 + $0x3e4] sm:$0xf]
        %v4020 = vld [vmem:[%s686 + $0x3e8] sm:$0xf]
        %v4021 = vld [vmem:[%s686 + $0x3ec] sm:$0xf]
        %v4022 = vld [vmem:[%s686 + $0x3f0] sm:$0xf]
        %v4023 = vld [vmem:[%s686 + $0x3f4] sm:$0xf]
        %v4024 = vld [vmem:[%s686 + $0x3f8] sm:$0xf]
        %v4025 = vld [vmem:[%s686 + $0x3fc] sm:$0xf]
        %v4026 = vld [vmem:[%s790] sm:$0x1]
        %v4028 = vlaneseq
        %v4029 = vshrl.u32 %v4028, 7
        %v4030 = vsub.s32 0, %v4029
        %v4031 = vrot.slane %v4026, %v4030
        %v4289 = vunpack.c.l.b16 %v3770
        %v4290 = vunpack.c.l.b16 %v3771
        %v4291 = vunpack.c.l.b16 %v3772
        %v4292 = vunpack.c.l.b16 %v3773
        %v4293 = vunpack.c.l.b16 %v3774
        %v4294 = vunpack.c.l.b16 %v3775
        %v4295 = vunpack.c.l.b16 %v3776
        %v4296 = vunpack.c.l.b16 %v3777
        %v4297 = vunpack.c.l.b16 %v3778
        %v4298 = vunpack.c.l.b16 %v3779
        %v4299 = vunpack.c.l.b16 %v3780
        %v4300 = vunpack.c.l.b16 %v3781
        %v4301 = vunpack.c.l.b16 %v3782
        %v4302 = vunpack.c.l.b16 %v3783
        %v4303 = vunpack.c.l.b16 %v3784
        %v4304 = vunpack.c.l.b16 %v3785
        %v4305 = vunpack.c.l.b16 %v3786
        %v4306 = vunpack.c.l.b16 %v3787
        %v4307 = vunpack.c.l.b16 %v3788
        %v4308 = vunpack.c.l.b16 %v3789
        %v4309 = vunpack.c.l.b16 %v3790
        %v4310 = vunpack.c.l.b16 %v3791
        %v4311 = vunpack.c.l.b16 %v3792
        %v4312 = vunpack.c.l.b16 %v3793
        %v4313 = vunpack.c.l.b16 %v3794
        %v4314 = vunpack.c.l.b16 %v3795
        %v4315 = vunpack.c.l.b16 %v3796
        %v4316 = vunpack.c.l.b16 %v3797
        %v4317 = vunpack.c.l.b16 %v3798
        %v4318 = vunpack.c.l.b16 %v3799
        %v4319 = vunpack.c.l.b16 %v3800
        %v4320 = vunpack.c.l.b16 %v3801
        %v4321 = vunpack.c.l.b16 %v3802
        %v4322 = vunpack.c.l.b16 %v3803
        %v4323 = vunpack.c.l.b16 %v3804
        %v4324 = vunpack.c.l.b16 %v3805
        %v4325 = vunpack.c.l.b16 %v3806
        %v4326 = vunpack.c.l.b16 %v3807
        %v4327 = vunpack.c.l.b16 %v3808
        %v4328 = vunpack.c.l.b16 %v3809
        %v4329 = vunpack.c.l.b16 %v3810
        %v4330 = vunpack.c.l.b16 %v3811
        %v4331 = vunpack.c.l.b16 %v3812
        %v4332 = vunpack.c.l.b16 %v3813
        %v4333 = vunpack.c.l.b16 %v3814
        %v4334 = vunpack.c.l.b16 %v3815
        %v4335 = vunpack.c.l.b16 %v3816
        %v4336 = vunpack.c.l.b16 %v3817
        %v4337 = vunpack.c.l.b16 %v3818
        %v4338 = vunpack.c.l.b16 %v3819
        %v4339 = vunpack.c.l.b16 %v3820
        %v4340 = vunpack.c.l.b16 %v3821
        %v4341 = vunpack.c.l.b16 %v3822
        %v4342 = vunpack.c.l.b16 %v3823
        %v4343 = vunpack.c.l.b16 %v3824
        %v4344 = vunpack.c.l.b16 %v3825
        %v4345 = vunpack.c.l.b16 %v3826
        %v4346 = vunpack.c.l.b16 %v3827
        %v4347 = vunpack.c.l.b16 %v3828
        %v4348 = vunpack.c.l.b16 %v3829
        %v4349 = vunpack.c.l.b16 %v3830
        %v4350 = vunpack.c.l.b16 %v3831
        %v4351 = vunpack.c.l.b16 %v3832
        %v4352 = vunpack.c.l.b16 %v3833
        %v4353 = vunpack.c.l.b16 %v3834
        %v4354 = vunpack.c.l.b16 %v3835
        %v4355 = vunpack.c.l.b16 %v3836
        %v4356 = vunpack.c.l.b16 %v3837
        %v4357 = vunpack.c.l.b16 %v3838
        %v4358 = vunpack.c.l.b16 %v3839
        %v4359 = vunpack.c.l.b16 %v3840
        %v4360 = vunpack.c.l.b16 %v3841
        %v4361 = vunpack.c.l.b16 %v3842
        %v4362 = vunpack.c.l.b16 %v3843
        %v4363 = vunpack.c.l.b16 %v3844
        %v4364 = vunpack.c.l.b16 %v3845
        %v4365 = vunpack.c.l.b16 %v3846
        %v4366 = vunpack.c.l.b16 %v3847
        %v4367 = vunpack.c.l.b16 %v3848
        %v4368 = vunpack.c.l.b16 %v3849
        %v4369 = vunpack.c.l.b16 %v3850
        %v4370 = vunpack.c.l.b16 %v3851
        %v4371 = vunpack.c.l.b16 %v3852
        %v4372 = vunpack.c.l.b16 %v3853
        %v4373 = vunpack.c.l.b16 %v3854
        %v4374 = vunpack.c.l.b16 %v3855
        %v4375 = vunpack.c.l.b16 %v3856
        %v4376 = vunpack.c.l.b16 %v3857
        %v4377 = vunpack.c.l.b16 %v3858
        %v4378 = vunpack.c.l.b16 %v3859
        %v4379 = vunpack.c.l.b16 %v3860
        %v4380 = vunpack.c.l.b16 %v3861
        %v4381 = vunpack.c.l.b16 %v3862
        %v4382 = vunpack.c.l.b16 %v3863
        %v4383 = vunpack.c.l.b16 %v3864
        %v4384 = vunpack.c.l.b16 %v3865
        %v4385 = vunpack.c.l.b16 %v3866
        %v4386 = vunpack.c.l.b16 %v3867
        %v4387 = vunpack.c.l.b16 %v3868
        %v4388 = vunpack.c.l.b16 %v3869
        %v4389 = vunpack.c.l.b16 %v3870
        %v4390 = vunpack.c.l.b16 %v3871
        %v4391 = vunpack.c.l.b16 %v3872
        %v4392 = vunpack.c.l.b16 %v3873
        %v4393 = vunpack.c.l.b16 %v3874
        %v4394 = vunpack.c.l.b16 %v3875
        %v4395 = vunpack.c.l.b16 %v3876
        %v4396 = vunpack.c.l.b16 %v3877
        %v4397 = vunpack.c.l.b16 %v3878
        %v4398 = vunpack.c.l.b16 %v3879
        %v4399 = vunpack.c.l.b16 %v3880
        %v4400 = vunpack.c.l.b16 %v3881
        %v4401 = vunpack.c.l.b16 %v3882
        %v4402 = vunpack.c.l.b16 %v3883
        %v4403 = vunpack.c.l.b16 %v3884
        %v4404 = vunpack.c.l.b16 %v3885
        %v4405 = vunpack.c.l.b16 %v3886
        %v4406 = vunpack.c.l.b16 %v3887
        %v4407 = vunpack.c.l.b16 %v3888
        %v4408 = vunpack.c.l.b16 %v3889
        %v4409 = vunpack.c.l.b16 %v3890
        %v4410 = vunpack.c.l.b16 %v3891
        %v4411 = vunpack.c.l.b16 %v3892
        %v4412 = vunpack.c.l.b16 %v3893
        %v4413 = vunpack.c.l.b16 %v3894
        %v4414 = vunpack.c.l.b16 %v3895
        %v4415 = vunpack.c.l.b16 %v3896
        %v4416 = vunpack.c.l.b16 %v3897
        %v4417 = vunpack.c.l.b16 %v3898
        %v4418 = vunpack.c.l.b16 %v3899
        %v4419 = vunpack.c.l.b16 %v3900
        %v4420 = vunpack.c.l.b16 %v3901
        %v4421 = vunpack.c.l.b16 %v3902
        %v4422 = vunpack.c.l.b16 %v3903
        %v4423 = vunpack.c.l.b16 %v3904
        %v4424 = vunpack.c.l.b16 %v3905
        %v4425 = vunpack.c.l.b16 %v3906
        %v4426 = vunpack.c.l.b16 %v3907
        %v4427 = vunpack.c.l.b16 %v3908
        %v4428 = vunpack.c.l.b16 %v3909
        %v4429 = vunpack.c.l.b16 %v3910
        %v4430 = vunpack.c.l.b16 %v3911
        %v4431 = vunpack.c.l.b16 %v3912
        %v4432 = vunpack.c.l.b16 %v3913
        %v4433 = vunpack.c.l.b16 %v3914
        %v4434 = vunpack.c.l.b16 %v3915
        %v4435 = vunpack.c.l.b16 %v3916
        %v4436 = vunpack.c.l.b16 %v3917
        %v4437 = vunpack.c.l.b16 %v3918
        %v4438 = vunpack.c.l.b16 %v3919
        %v4439 = vunpack.c.l.b16 %v3920
        %v4440 = vunpack.c.l.b16 %v3921
        %v4441 = vunpack.c.l.b16 %v3922
        %v4442 = vunpack.c.l.b16 %v3923
        %v4443 = vunpack.c.l.b16 %v3924
        %v4444 = vunpack.c.l.b16 %v3925
        %v4445 = vunpack.c.l.b16 %v3926
        %v4446 = vunpack.c.l.b16 %v3927
        %v4447 = vunpack.c.l.b16 %v3928
        %v4448 = vunpack.c.l.b16 %v3929
        %v4449 = vunpack.c.l.b16 %v3930
        %v4450 = vunpack.c.l.b16 %v3931
        %v4451 = vunpack.c.l.b16 %v3932
        %v4452 = vunpack.c.l.b16 %v3933
        %v4453 = vunpack.c.l.b16 %v3934
        %v4454 = vunpack.c.l.b16 %v3935
        %v4455 = vunpack.c.l.b16 %v3936
        %v4456 = vunpack.c.l.b16 %v3937
        %v4457 = vunpack.c.l.b16 %v3938
        %v4458 = vunpack.c.l.b16 %v3939
        %v4459 = vunpack.c.l.b16 %v3940
        %v4460 = vunpack.c.l.b16 %v3941
        %v4461 = vunpack.c.l.b16 %v3942
        %v4462 = vunpack.c.l.b16 %v3943
        %v4463 = vunpack.c.l.b16 %v3944
        %v4464 = vunpack.c.l.b16 %v3945
        %v4465 = vunpack.c.l.b16 %v3946
        %v4466 = vunpack.c.l.b16 %v3947
        %v4467 = vunpack.c.l.b16 %v3948
        %v4468 = vunpack.c.l.b16 %v3949
        %v4469 = vunpack.c.l.b16 %v3950
        %v4470 = vunpack.c.l.b16 %v3951
        %v4471 = vunpack.c.l.b16 %v3952
        %v4472 = vunpack.c.l.b16 %v3953
        %v4473 = vunpack.c.l.b16 %v3954
        %v4474 = vunpack.c.l.b16 %v3955
        %v4475 = vunpack.c.l.b16 %v3956
        %v4476 = vunpack.c.l.b16 %v3957
        %v4477 = vunpack.c.l.b16 %v3958
        %v4478 = vunpack.c.l.b16 %v3959
        %v4479 = vunpack.c.l.b16 %v3960
        %v4480 = vunpack.c.l.b16 %v3961
        %v4481 = vunpack.c.l.b16 %v3962
        %v4482 = vunpack.c.l.b16 %v3963
        %v4483 = vunpack.c.l.b16 %v3964
        %v4484 = vunpack.c.l.b16 %v3965
        %v4485 = vunpack.c.l.b16 %v3966
        %v4486 = vunpack.c.l.b16 %v3967
        %v4487 = vunpack.c.l.b16 %v3968
        %v4488 = vunpack.c.l.b16 %v3969
        %v4489 = vunpack.c.l.b16 %v3970
        %v4490 = vunpack.c.l.b16 %v3971
        %v4491 = vunpack.c.l.b16 %v3972
        %v4492 = vunpack.c.l.b16 %v3973
        %v4493 = vunpack.c.l.b16 %v3974
        %v4494 = vunpack.c.l.b16 %v3975
        %v4495 = vunpack.c.l.b16 %v3976
        %v4496 = vunpack.c.l.b16 %v3977
        %v4497 = vunpack.c.l.b16 %v3978
        %v4498 = vunpack.c.l.b16 %v3979
        %v4499 = vunpack.c.l.b16 %v3980
        %v4500 = vunpack.c.l.b16 %v3981
        %v4501 = vunpack.c.l.b16 %v3982
        %v4502 = vunpack.c.l.b16 %v3983
        %v4503 = vunpack.c.l.b16 %v3984
        %v4504 = vunpack.c.l.b16 %v3985
        %v4505 = vunpack.c.l.b16 %v3986
        %v4506 = vunpack.c.l.b16 %v3987
        %v4507 = vunpack.c.l.b16 %v3988
        %v4508 = vunpack.c.l.b16 %v3989
        %v4509 = vunpack.c.l.b16 %v3990
        %v4510 = vunpack.c.l.b16 %v3991
        %v4511 = vunpack.c.l.b16 %v3992
        %v4512 = vunpack.c.l.b16 %v3993
        %v4513 = vunpack.c.l.b16 %v3994
        %v4514 = vunpack.c.l.b16 %v3995
        %v4515 = vunpack.c.l.b16 %v3996
        %v4516 = vunpack.c.l.b16 %v3997
        %v4517 = vunpack.c.l.b16 %v3998
        %v4518 = vunpack.c.l.b16 %v3999
        %v4519 = vunpack.c.l.b16 %v4000
        %v4520 = vunpack.c.l.b16 %v4001
        %v4521 = vunpack.c.l.b16 %v4002
        %v4522 = vunpack.c.l.b16 %v4003
        %v4523 = vunpack.c.l.b16 %v4004
        %v4524 = vunpack.c.l.b16 %v4005
        %v4525 = vunpack.c.l.b16 %v4006
        %v4526 = vunpack.c.l.b16 %v4007
        %v4527 = vunpack.c.l.b16 %v4008
        %v4528 = vunpack.c.l.b16 %v4009
        %v4529 = vunpack.c.l.b16 %v4010
        %v4530 = vunpack.c.l.b16 %v4011
        %v4531 = vunpack.c.l.b16 %v4012
        %v4532 = vunpack.c.l.b16 %v4013
        %v4533 = vunpack.c.l.b16 %v4014
        %v4534 = vunpack.c.l.b16 %v4015
        %v4535 = vunpack.c.l.b16 %v4016
        %v4536 = vunpack.c.l.b16 %v4017
        %v4537 = vunpack.c.l.b16 %v4018
        %v4538 = vunpack.c.l.b16 %v4019
        %v4539 = vunpack.c.l.b16 %v4020
        %v4540 = vunpack.c.l.b16 %v4021
        %v4541 = vunpack.c.l.b16 %v4022
        %v4542 = vunpack.c.l.b16 %v4023
        %v4543 = vunpack.c.l.b16 %v4024
        %v4544 = vunpack.c.l.b16 %v4025
        %v4545 = vpack.c.b16 %v4290, %v4289
        %v4546 = vpack.c.b16 %v4292, %v4291
        %v4547 = vpack.c.b16 %v4294, %v4293
        %v4548 = vpack.c.b16 %v4296, %v4295
        %v4549 = vpack.c.b16 %v4298, %v4297
        %v4550 = vpack.c.b16 %v4300, %v4299
        %v4551 = vpack.c.b16 %v4302, %v4301
        %v4552 = vpack.c.b16 %v4304, %v4303
        %v4553 = vpack.c.b16 %v4306, %v4305
        %v4554 = vpack.c.b16 %v4308, %v4307
        %v4555 = vpack.c.b16 %v4310, %v4309
        %v4556 = vpack.c.b16 %v4312, %v4311
        %v4557 = vpack.c.b16 %v4314, %v4313
        %v4558 = vpack.c.b16 %v4316, %v4315
        %v4559 = vpack.c.b16 %v4318, %v4317
        %v4560 = vpack.c.b16 %v4320, %v4319
        %v4561 = vpack.c.b16 %v4322, %v4321
        %v4562 = vpack.c.b16 %v4324, %v4323
        %v4563 = vpack.c.b16 %v4326, %v4325
        %v4564 = vpack.c.b16 %v4328, %v4327
        %v4565 = vpack.c.b16 %v4330, %v4329
        %v4566 = vpack.c.b16 %v4332, %v4331
        %v4567 = vpack.c.b16 %v4334, %v4333
        %v4568 = vpack.c.b16 %v4336, %v4335
        %v4569 = vpack.c.b16 %v4338, %v4337
        %v4570 = vpack.c.b16 %v4340, %v4339
        %v4571 = vpack.c.b16 %v4342, %v4341
        %v4572 = vpack.c.b16 %v4344, %v4343
        %v4573 = vpack.c.b16 %v4346, %v4345
        %v4574 = vpack.c.b16 %v4348, %v4347
        %v4575 = vpack.c.b16 %v4350, %v4349
        %v4576 = vpack.c.b16 %v4352, %v4351
        %v4577 = vpack.c.b16 %v4354, %v4353
        %v4578 = vpack.c.b16 %v4356, %v4355
        %v4579 = vpack.c.b16 %v4358, %v4357
        %v4580 = vpack.c.b16 %v4360, %v4359
        %v4581 = vpack.c.b16 %v4362, %v4361
        %v4582 = vpack.c.b16 %v4364, %v4363
        %v4583 = vpack.c.b16 %v4366, %v4365
        %v4584 = vpack.c.b16 %v4368, %v4367
        %v4585 = vpack.c.b16 %v4370, %v4369
        %v4586 = vpack.c.b16 %v4372, %v4371
        %v4587 = vpack.c.b16 %v4374, %v4373
        %v4588 = vpack.c.b16 %v4376, %v4375
        %v4589 = vpack.c.b16 %v4378, %v4377
        %v4590 = vpack.c.b16 %v4380, %v4379
        %v4591 = vpack.c.b16 %v4382, %v4381
        %v4592 = vpack.c.b16 %v4384, %v4383
        %v4593 = vpack.c.b16 %v4386, %v4385
        %v4594 = vpack.c.b16 %v4388, %v4387
        %v4595 = vpack.c.b16 %v4390, %v4389
        %v4596 = vpack.c.b16 %v4392, %v4391
        %v4597 = vpack.c.b16 %v4394, %v4393
        %v4598 = vpack.c.b16 %v4396, %v4395
        %v4599 = vpack.c.b16 %v4398, %v4397
        %v4600 = vpack.c.b16 %v4400, %v4399
        %v4601 = vpack.c.b16 %v4402, %v4401
        %v4602 = vpack.c.b16 %v4404, %v4403
        %v4603 = vpack.c.b16 %v4406, %v4405
        %v4604 = vpack.c.b16 %v4408, %v4407
        %v4605 = vpack.c.b16 %v4410, %v4409
        %v4606 = vpack.c.b16 %v4412, %v4411
        %v4607 = vpack.c.b16 %v4414, %v4413
        %v4608 = vpack.c.b16 %v4416, %v4415
        %v4609 = vpack.c.b16 %v4418, %v4417
        %v4610 = vpack.c.b16 %v4420, %v4419
        %v4611 = vpack.c.b16 %v4422, %v4421
        %v4612 = vpack.c.b16 %v4424, %v4423
        %v4613 = vpack.c.b16 %v4426, %v4425
        %v4614 = vpack.c.b16 %v4428, %v4427
        %v4615 = vpack.c.b16 %v4430, %v4429
        %v4616 = vpack.c.b16 %v4432, %v4431
        %v4617 = vpack.c.b16 %v4434, %v4433
        %v4618 = vpack.c.b16 %v4436, %v4435
        %v4619 = vpack.c.b16 %v4438, %v4437
        %v4620 = vpack.c.b16 %v4440, %v4439
        %v4621 = vpack.c.b16 %v4442, %v4441
        %v4622 = vpack.c.b16 %v4444, %v4443
        %v4623 = vpack.c.b16 %v4446, %v4445
        %v4624 = vpack.c.b16 %v4448, %v4447
        %v4625 = vpack.c.b16 %v4450, %v4449
        %v4626 = vpack.c.b16 %v4452, %v4451
        %v4627 = vpack.c.b16 %v4454, %v4453
        %v4628 = vpack.c.b16 %v4456, %v4455
        %v4629 = vpack.c.b16 %v4458, %v4457
        %v4630 = vpack.c.b16 %v4460, %v4459
        %v4631 = vpack.c.b16 %v4462, %v4461
        %v4632 = vpack.c.b16 %v4464, %v4463
        %v4633 = vpack.c.b16 %v4466, %v4465
        %v4634 = vpack.c.b16 %v4468, %v4467
        %v4635 = vpack.c.b16 %v4470, %v4469
        %v4636 = vpack.c.b16 %v4472, %v4471
        %v4637 = vpack.c.b16 %v4474, %v4473
        %v4638 = vpack.c.b16 %v4476, %v4475
        %v4639 = vpack.c.b16 %v4478, %v4477
        %v4640 = vpack.c.b16 %v4480, %v4479
        %v4641 = vpack.c.b16 %v4482, %v4481
        %v4642 = vpack.c.b16 %v4484, %v4483
        %v4643 = vpack.c.b16 %v4486, %v4485
        %v4644 = vpack.c.b16 %v4488, %v4487
        %v4645 = vpack.c.b16 %v4490, %v4489
        %v4646 = vpack.c.b16 %v4492, %v4491
        %v4647 = vpack.c.b16 %v4494, %v4493
        %v4648 = vpack.c.b16 %v4496, %v4495
        %v4649 = vpack.c.b16 %v4498, %v4497
        %v4650 = vpack.c.b16 %v4500, %v4499
        %v4651 = vpack.c.b16 %v4502, %v4501
        %v4652 = vpack.c.b16 %v4504, %v4503
        %v4653 = vpack.c.b16 %v4506, %v4505
        %v4654 = vpack.c.b16 %v4508, %v4507
        %v4655 = vpack.c.b16 %v4510, %v4509
        %v4656 = vpack.c.b16 %v4512, %v4511
        %v4657 = vpack.c.b16 %v4514, %v4513
        %v4658 = vpack.c.b16 %v4516, %v4515
        %v4659 = vpack.c.b16 %v4518, %v4517
        %v4660 = vpack.c.b16 %v4520, %v4519
        %v4661 = vpack.c.b16 %v4522, %v4521
        %v4662 = vpack.c.b16 %v4524, %v4523
        %v4663 = vpack.c.b16 %v4526, %v4525
        %v4664 = vpack.c.b16 %v4528, %v4527
        %v4665 = vpack.c.b16 %v4530, %v4529
        %v4666 = vpack.c.b16 %v4532, %v4531
        %v4667 = vpack.c.b16 %v4534, %v4533
        %v4668 = vpack.c.b16 %v4536, %v4535
        %v4669 = vpack.c.b16 %v4538, %v4537
        %v4670 = vpack.c.b16 %v4540, %v4539
        %v4671 = vpack.c.b16 %v4542, %v4541
        %v4672 = vpack.c.b16 %v4544, %v4543
        %4801 = vmatprep.subr.bf16.mxu0 0
        %4802 = vmatpush1.bf16.msra.mxu0 %v4545
        %4803 = vmatprep.subr.bf16.mxu0 0
        %4804 = vmatpush1.bf16.msra.mxu0 %v4546
        %4805 = vmatprep.subr.bf16.mxu0 0
        %4806 = vmatpush1.bf16.msra.mxu0 %v4547
        %4807 = vmatprep.subr.bf16.mxu0 0
        %4808 = vmatpush1.bf16.msra.mxu0 %v4548
        %4809 = vmatprep.subr.bf16.mxu0 0
        %4810 = vmatpush1.bf16.msra.mxu0 %v4549
        %4811 = vmatprep.subr.bf16.mxu0 0
        %4812 = vmatpush1.bf16.msra.mxu0 %v4550
        %4813 = vmatprep.subr.bf16.mxu0 0
        %4814 = vmatpush1.bf16.msra.mxu0 %v4551
        %4815 = vmatprep.subr.bf16.mxu0 0
        %4816 = vmatpush1.bf16.msra.mxu0 %v4552
        %4817 = vmatprep.subr.bf16.mxu0 0
        %4818 = vmatpush1.bf16.msra.mxu0 %v4553
        %4819 = vmatprep.subr.bf16.mxu0 0
        %4820 = vmatpush1.bf16.msra.mxu0 %v4554
        %4821 = vmatprep.subr.bf16.mxu0 0
        %4822 = vmatpush1.bf16.msra.mxu0 %v4555
        %4823 = vmatprep.subr.bf16.mxu0 0
        %4824 = vmatpush1.bf16.msra.mxu0 %v4556
        %4825 = vmatprep.subr.bf16.mxu0 0
        %4826 = vmatpush1.bf16.msra.mxu0 %v4557
        %4827 = vmatprep.subr.bf16.mxu0 0
        %4828 = vmatpush1.bf16.msra.mxu0 %v4558
        %4829 = vmatprep.subr.bf16.mxu0 0
        %4830 = vmatpush1.bf16.msra.mxu0 %v4559
        %4831 = vmatprep.subr.bf16.mxu0 0
        %4832 = vmatpush1.bf16.msra.mxu0 %v4560
        %4833 = vmatprep.mubr.bf16.mxu0 %v3755
        %4834 = vmatmul.mubr.bf16.gmra.mrb[0].mxu0 %v3754
        %v4835 = vpop.f32.mrb[0].mxu0
        %v4836 = vadd.f32 %v4031, %v4835
        %v4837 = vpop.f32.mrb[0].mxu0
        %v4838 = vpop.f32.mrb[0].mxu0
        %v4839 = vadd.f32 %v4031, %v4838
        %v4840 = vpop.f32.mrb[0].mxu0
        %4841 = vdwg.mxu0
        %4842 = vmatprep.subr.bf16.mxu0 0
        %4843 = vmatpush1.bf16.msra.mxu0 %v4561
        %4844 = vmatprep.subr.bf16.mxu0 0
        %4845 = vmatpush1.bf16.msra.mxu0 %v4562
        %4846 = vmatprep.subr.bf16.mxu0 0
        %4847 = vmatpush1.bf16.msra.mxu0 %v4563
        %4848 = vmatprep.subr.bf16.mxu0 0
        %4849 = vmatpush1.bf16.msra.mxu0 %v4564
        %4850 = vmatprep.subr.bf16.mxu0 0
        %4851 = vmatpush1.bf16.msra.mxu0 %v4565
        %4852 = vmatprep.subr.bf16.mxu0 0
        %4853 = vmatpush1.bf16.msra.mxu0 %v4566
        %4854 = vmatprep.subr.bf16.mxu0 0
        %4855 = vmatpush1.bf16.msra.mxu0 %v4567
        %4856 = vmatprep.subr.bf16.mxu0 0
        %4857 = vmatpush1.bf16.msra.mxu0 %v4568
        %4858 = vmatprep.subr.bf16.mxu0 0
        %4859 = vmatpush1.bf16.msra.mxu0 %v4569
        %4860 = vmatprep.subr.bf16.mxu0 0
        %4861 = vmatpush1.bf16.msra.mxu0 %v4570
        %4862 = vmatprep.subr.bf16.mxu0 0
        %4863 = vmatpush1.bf16.msra.mxu0 %v4571
        %4864 = vmatprep.subr.bf16.mxu0 0
        %4865 = vmatpush1.bf16.msra.mxu0 %v4572
        %4866 = vmatprep.subr.bf16.mxu0 0
        %4867 = vmatpush1.bf16.msra.mxu0 %v4573
        %4868 = vmatprep.subr.bf16.mxu0 0
        %4869 = vmatpush1.bf16.msra.mxu0 %v4574
        %4870 = vmatprep.subr.bf16.mxu0 0
        %4871 = vmatpush1.bf16.msra.mxu0 %v4575
        %4872 = vmatprep.subr.bf16.mxu0 0
        %4873 = vmatpush1.bf16.msra.mxu0 %v4576
        %4874 = vmatprep.mubr.bf16.mxu0 %v3757
        %4875 = vmatmul.mubr.bf16.gmra.mrb[0].mxu0 %v3756
        %v4876 = vpop.f32.mrb[0].mxu0
        %v4877 = vadd.f32 %v4836, %v4876
        %v4878 = vpop.f32.mrb[0].mxu0
        %v4879 = vpop.f32.mrb[0].mxu0
        %v4880 = vadd.f32 %v4839, %v4879
        %v4881 = vpop.f32.mrb[0].mxu0
        %4882 = vdwg.mxu0
        %4883 = vmatprep.subr.bf16.mxu0 0
        %4884 = vmatpush1.bf16.msra.mxu0 %v4577
        %4885 = vmatprep.subr.bf16.mxu0 0
        %4886 = vmatpush1.bf16.msra.mxu0 %v4578
        %4887 = vmatprep.subr.bf16.mxu0 0
        %4888 = vmatpush1.bf16.msra.mxu0 %v4579
        %4889 = vmatprep.subr.bf16.mxu0 0
        %4890 = vmatpush1.bf16.msra.mxu0 %v4580
        %4891 = vmatprep.subr.bf16.mxu0 0
        %4892 = vmatpush1.bf16.msra.mxu0 %v4581
        %4893 = vmatprep.subr.bf16.mxu0 0
        %4894 = vmatpush1.bf16.msra.mxu0 %v4582
        %4895 = vmatprep.subr.bf16.mxu0 0
        %4896 = vmatpush1.bf16.msra.mxu0 %v4583
        %4897 = vmatprep.subr.bf16.mxu0 0
        %4898 = vmatpush1.bf16.msra.mxu0 %v4584
        %4899 = vmatprep.subr.bf16.mxu0 0
        %4900 = vmatpush1.bf16.msra.mxu0 %v4585
        %4901 = vmatprep.subr.bf16.mxu0 0
        %4902 = vmatpush1.bf16.msra.mxu0 %v4586
        %4903 = vmatprep.subr.bf16.mxu0 0
        %4904 = vmatpush1.bf16.msra.mxu0 %v4587
        %4905 = vmatprep.subr.bf16.mxu0 0
        %4906 = vmatpush1.bf16.msra.mxu0 %v4588
        %4907 = vmatprep.subr.bf16.mxu0 0
        %4908 = vmatpush1.bf16.msra.mxu0 %v4589
        %4909 = vmatprep.subr.bf16.mxu0 0
        %4910 = vmatpush1.bf16.msra.mxu0 %v4590
        %4911 = vmatprep.subr.bf16.mxu0 0
        %4912 = vmatpush1.bf16.msra.mxu0 %v4591
        %4913 = vmatprep.subr.bf16.mxu0 0
        %4914 = vmatpush1.bf16.msra.mxu0 %v4592
        %4915 = vmatprep.mubr.bf16.mxu0 %v3759
        %4916 = vmatmul.mubr.bf16.gmra.mrb[0].mxu0 %v3758
        %v4917 = vpop.f32.mrb[0].mxu0
        %v4918 = vadd.f32 %v4877, %v4917
        %v4919 = vpop.f32.mrb[0].mxu0
        %v4920 = vpop.f32.mrb[0].mxu0
        %v4921 = vadd.f32 %v4880, %v4920
        %v4922 = vpop.f32.mrb[0].mxu0
        %4923 = vdwg.mxu0
        %4924 = vmatprep.subr.bf16.mxu0 0
        %4925 = vmatpush1.bf16.msra.mxu0 %v4593
        %4926 = vmatprep.subr.bf16.mxu0 0
        %4927 = vmatpush1.bf16.msra.mxu0 %v4594
        %4928 = vmatprep.subr.bf16.mxu0 0
        %4929 = vmatpush1.bf16.msra.mxu0 %v4595
        %4930 = vmatprep.subr.bf16.mxu0 0
        %4931 = vmatpush1.bf16.msra.mxu0 %v4596
        %4932 = vmatprep.subr.bf16.mxu0 0
        %4933 = vmatpush1.bf16.msra.mxu0 %v4597
        %4934 = vmatprep.subr.bf16.mxu0 0
        %4935 = vmatpush1.bf16.msra.mxu0 %v4598
        %4936 = vmatprep.subr.bf16.mxu0 0
        %4937 = vmatpush1.bf16.msra.mxu0 %v4599
        %4938 = vmatprep.subr.bf16.mxu0 0
        %4939 = vmatpush1.bf16.msra.mxu0 %v4600
        %4940 = vmatprep.subr.bf16.mxu0 0
        %4941 = vmatpush1.bf16.msra.mxu0 %v4601
        %4942 = vmatprep.subr.bf16.mxu0 0
        %4943 = vmatpush1.bf16.msra.mxu0 %v4602
        %4944 = vmatprep.subr.bf16.mxu0 0
        %4945 = vmatpush1.bf16.msra.mxu0 %v4603
        %4946 = vmatprep.subr.bf16.mxu0 0
        %4947 = vmatpush1.bf16.msra.mxu0 %v4604
        %4948 = vmatprep.subr.bf16.mxu0 0
        %4949 = vmatpush1.bf16.msra.mxu0 %v4605
        %4950 = vmatprep.subr.bf16.mxu0 0
        %4951 = vmatpush1.bf16.msra.mxu0 %v4606
        %4952 = vmatprep.subr.bf16.mxu0 0
        %4953 = vmatpush1.bf16.msra.mxu0 %v4607
        %4954 = vmatprep.subr.bf16.mxu0 0
        %4955 = vmatpush1.bf16.msra.mxu0 %v4608
        %4956 = vmatprep.mubr.bf16.mxu0 %v3761
        %4957 = vmatmul.mubr.bf16.gmra.mrb[0].mxu0 %v3760
        %v4958 = vpop.f32.mrb[0].mxu0
        %v4959 = vadd.f32 %v4918, %v4958
        %v4960 = vpop.f32.mrb[0].mxu0
        %v4961 = vpop.f32.mrb[0].mxu0
        %v4962 = vadd.f32 %v4921, %v4961
        %v4963 = vpop.f32.mrb[0].mxu0
        %4964 = vdwg.mxu0
        %4965 = vmatprep.subr.bf16.mxu0 0
        %4966 = vmatpush1.bf16.msra.mxu0 %v4609
        %4967 = vmatprep.subr.bf16.mxu0 0
        %4968 = vmatpush1.bf16.msra.mxu0 %v4610
        %4969 = vmatprep.subr.bf16.mxu0 0
        %4970 = vmatpush1.bf16.msra.mxu0 %v4611
        %4971 = vmatprep.subr.bf16.mxu0 0
        %4972 = vmatpush1.bf16.msra.mxu0 %v4612
        %4973 = vmatprep.subr.bf16.mxu0 0
        %4974 = vmatpush1.bf16.msra.mxu0 %v4613
        %4975 = vmatprep.subr.bf16.mxu0 0
        %4976 = vmatpush1.bf16.msra.mxu0 %v4614
        %4977 = vmatprep.subr.bf16.mxu0 0
        %4978 = vmatpush1.bf16.msra.mxu0 %v4615
        %4979 = vmatprep.subr.bf16.mxu0 0
        %4980 = vmatpush1.bf16.msra.mxu0 %v4616
        %4981 = vmatprep.subr.bf16.mxu0 0
        %4982 = vmatpush1.bf16.msra.mxu0 %v4617
        %4983 = vmatprep.subr.bf16.mxu0 0
        %4984 = vmatpush1.bf16.msra.mxu0 %v4618
        %4985 = vmatprep.subr.bf16.mxu0 0
        %4986 = vmatpush1.bf16.msra.mxu0 %v4619
        %4987 = vmatprep.subr.bf16.mxu0 0
        %4988 = vmatpush1.bf16.msra.mxu0 %v4620
        %4989 = vmatprep.subr.bf16.mxu0 0
        %4990 = vmatpush1.bf16.msra.mxu0 %v4621
        %4991 = vmatprep.subr.bf16.mxu0 0
        %4992 = vmatpush1.bf16.msra.mxu0 %v4622
        %4993 = vmatprep.subr.bf16.mxu0 0
        %4994 = vmatpush1.bf16.msra.mxu0 %v4623
        %4995 = vmatprep.subr.bf16.mxu0 0
        %4996 = vmatpush1.bf16.msra.mxu0 %v4624
        %4997 = vmatprep.mubr.bf16.mxu0 %v3763
        %4998 = vmatmul.mubr.bf16.gmra.mrb[0].mxu0 %v3762
        %v4999 = vpop.f32.mrb[0].mxu0
        %v5000 = vadd.f32 %v4959, %v4999
        %v5001 = vpop.f32.mrb[0].mxu0
        %v5002 = vpop.f32.mrb[0].mxu0
        %v5003 = vadd.f32 %v4962, %v5002
        %v5004 = vpop.f32.mrb[0].mxu0
        %5005 = vdwg.mxu0
        %5006 = vmatprep.subr.bf16.mxu0 0
        %5007 = vmatpush1.bf16.msra.mxu0 %v4625
        %5008 = vmatprep.subr.bf16.mxu0 0
        %5009 = vmatpush1.bf16.msra.mxu0 %v4626
        %5010 = vmatprep.subr.bf16.mxu0 0
        %5011 = vmatpush1.bf16.msra.mxu0 %v4627
        %5012 = vmatprep.subr.bf16.mxu0 0
        %5013 = vmatpush1.bf16.msra.mxu0 %v4628
        %5014 = vmatprep.subr.bf16.mxu0 0
        %5015 = vmatpush1.bf16.msra.mxu0 %v4629
        %5016 = vmatprep.subr.bf16.mxu0 0
        %5017 = vmatpush1.bf16.msra.mxu0 %v4630
        %5018 = vmatprep.subr.bf16.mxu0 0
        %5019 = vmatpush1.bf16.msra.mxu0 %v4631
        %5020 = vmatprep.subr.bf16.mxu0 0
        %5021 = vmatpush1.bf16.msra.mxu0 %v4632
        %5022 = vmatprep.subr.bf16.mxu0 0
        %5023 = vmatpush1.bf16.msra.mxu0 %v4633
        %5024 = vmatprep.subr.bf16.mxu0 0
        %5025 = vmatpush1.bf16.msra.mxu0 %v4634
        %5026 = vmatprep.subr.bf16.mxu0 0
        %5027 = vmatpush1.bf16.msra.mxu0 %v4635
        %5028 = vmatprep.subr.bf16.mxu0 0
        %5029 = vmatpush1.bf16.msra.mxu0 %v4636
        %5030 = vmatprep.subr.bf16.mxu0 0
        %5031 = vmatpush1.bf16.msra.mxu0 %v4637
        %5032 = vmatprep.subr.bf16.mxu0 0
        %5033 = vmatpush1.bf16.msra.mxu0 %v4638
        %5034 = vmatprep.subr.bf16.mxu0 0
        %5035 = vmatpush1.bf16.msra.mxu0 %v4639
        %5036 = vmatprep.subr.bf16.mxu0 0
        %5037 = vmatpush1.bf16.msra.mxu0 %v4640
        %5038 = vmatprep.mubr.bf16.mxu0 %v3765
        %5039 = vmatmul.mubr.bf16.gmra.mrb[0].mxu0 %v3764
        %v5040 = vpop.f32.mrb[0].mxu0
        %v5041 = vadd.f32 %v5000, %v5040
        %v5042 = vpop.f32.mrb[0].mxu0
        %v5043 = vpop.f32.mrb[0].mxu0
        %v5044 = vadd.f32 %v5003, %v5043
        %v5045 = vpop.f32.mrb[0].mxu0
        %5046 = vdwg.mxu0
        %5047 = vmatprep.subr.bf16.mxu0 0
        %5048 = vmatpush1.bf16.msra.mxu0 %v4641
        %5049 = vmatprep.subr.bf16.mxu0 0
        %5050 = vmatpush1.bf16.msra.mxu0 %v4642
        %5051 = vmatprep.subr.bf16.mxu0 0
        %5052 = vmatpush1.bf16.msra.mxu0 %v4643
        %5053 = vmatprep.subr.bf16.mxu0 0
        %5054 = vmatpush1.bf16.msra.mxu0 %v4644
        %5055 = vmatprep.subr.bf16.mxu0 0
        %5056 = vmatpush1.bf16.msra.mxu0 %v4645
        %5057 = vmatprep.subr.bf16.mxu0 0
        %5058 = vmatpush1.bf16.msra.mxu0 %v4646
        %5059 = vmatprep.subr.bf16.mxu0 0
        %5060 = vmatpush1.bf16.msra.mxu0 %v4647
        %5061 = vmatprep.subr.bf16.mxu0 0
        %5062 = vmatpush1.bf16.msra.mxu0 %v4648
        %5063 = vmatprep.subr.bf16.mxu0 0
        %5064 = vmatpush1.bf16.msra.mxu0 %v4649
        %5065 = vmatprep.subr.bf16.mxu0 0
        %5066 = vmatpush1.bf16.msra.mxu0 %v4650
        %5067 = vmatprep.subr.bf16.mxu0 0
        %5068 = vmatpush1.bf16.msra.mxu0 %v4651
        %5069 = vmatprep.subr.bf16.mxu0 0
        %5070 = vmatpush1.bf16.msra.mxu0 %v4652
        %5071 = vmatprep.subr.bf16.mxu0 0
        %5072 = vmatpush1.bf16.msra.mxu0 %v4653
        %5073 = vmatprep.subr.bf16.mxu0 0
        %5074 = vmatpush1.bf16.msra.mxu0 %v4654
        %5075 = vmatprep.subr.bf16.mxu0 0
        %5076 = vmatpush1.bf16.msra.mxu0 %v4655
        %5077 = vmatprep.subr.bf16.mxu0 0
        %5078 = vmatpush1.bf16.msra.mxu0 %v4656
        %5079 = vmatprep.mubr.bf16.mxu0 %v3767
        %5080 = vmatmul.mubr.bf16.gmra.mrb[0].mxu0 %v3766
        %v5081 = vpop.f32.mrb[0].mxu0
        %v5082 = vadd.f32 %v5041, %v5081
        %v5083 = vpop.f32.mrb[0].mxu0
        %v5084 = vpop.f32.mrb[0].mxu0
        %v5085 = vadd.f32 %v5044, %v5084
        %v5086 = vpop.f32.mrb[0].mxu0
        %5087 = vdwg.mxu0
        %5088 = vmatprep.subr.bf16.mxu0 0
        %5089 = vmatpush1.bf16.msra.mxu0 %v4657
        %5090 = vmatprep.subr.bf16.mxu0 0
        %5091 = vmatpush1.bf16.msra.mxu0 %v4658
        %5092 = vmatprep.subr.bf16.mxu0 0
        %5093 = vmatpush1.bf16.msra.mxu0 %v4659
        %5094 = vmatprep.subr.bf16.mxu0 0
        %5095 = vmatpush1.bf16.msra.mxu0 %v4660
        %5096 = vmatprep.subr.bf16.mxu0 0
        %5097 = vmatpush1.bf16.msra.mxu0 %v4661
        %5098 = vmatprep.subr.bf16.mxu0 0
        %5099 = vmatpush1.bf16.msra.mxu0 %v4662
        %5100 = vmatprep.subr.bf16.mxu0 0
        %5101 = vmatpush1.bf16.msra.mxu0 %v4663
        %5102 = vmatprep.subr.bf16.mxu0 0
        %5103 = vmatpush1.bf16.msra.mxu0 %v4664
        %5104 = vmatprep.subr.bf16.mxu0 0
        %5105 = vmatpush1.bf16.msra.mxu0 %v4665
        %5106 = vmatprep.subr.bf16.mxu0 0
        %5107 = vmatpush1.bf16.msra.mxu0 %v4666
        %5108 = vmatprep.subr.bf16.mxu0 0
        %5109 = vmatpush1.bf16.msra.mxu0 %v4667
        %5110 = vmatprep.subr.bf16.mxu0 0
        %5111 = vmatpush1.bf16.msra.mxu0 %v4668
        %5112 = vmatprep.subr.bf16.mxu0 0
        %5113 = vmatpush1.bf16.msra.mxu0 %v4669
        %5114 = vmatprep.subr.bf16.mxu0 0
        %5115 = vmatpush1.bf16.msra.mxu0 %v4670
        %5116 = vmatprep.subr.bf16.mxu0 0
        %5117 = vmatpush1.bf16.msra.mxu0 %v4671
        %5118 = vmatprep.subr.bf16.mxu0 0
        %5119 = vmatpush1.bf16.msra.mxu0 %v4672
        %5120 = vmatprep.mubr.bf16.mxu0 %v3769
        %5121 = vmatmul.mubr.bf16.gmra.mrb[0].mxu0 %v3768
        %v5122 = vpop.f32.mrb[0].mxu0
        %v5123 = vadd.f32 %v5082, %v5122
        %v5124 = vpop.f32.mrb[0].mxu0
        %v5125 = vpop.f32.mrb[0].mxu0
        %v5126 = vadd.f32 %v5085, %v5125
        %v5127 = vpop.f32.mrb[0].mxu0
        %5128 = vdwg.mxu0
        %v5129 = vadd.f32 %v2523, %v5123
        %v5130 = vadd.f32 %v2524, %v5126
        %v5131 = vld [vmem:[%s799] sm:$0x1]
        %v5132 = vld [vmem:[%s802] sm:$0x1]
        %5133 = vadd.xlane.f32.xlu0 %v5129
        %v5134 = vpop.xlane.xlu0 %5133
        %5135 = vadd.xlane.f32.xlu0 %v5130
        %v5136 = vpop.xlane.xlu0 %5135
        %v5137 = vmul.f32 %v5134, %v2490
        %v5138 = vmul.f32 %v5136, %v2490
        %v5139 = vsub.f32 %v5129, %v5137
        %v5140 = vsub.f32 %v5130, %v5138
        %v5141 = vmul.f32 %v5139, %v5139
        %v5142 = vmul.f32 %v5140, %v5140
        %5143 = vadd.xlane.f32.xlu0 %v5141
        %v5144 = vpop.xlane.xlu0 %5143
        %5145 = vadd.xlane.f32.xlu0 %v5142
        %v5146 = vpop.xlane.xlu0 %5145
        %v5147 = vmul.f32 %v5144, %v2490
        %v5148 = vmul.f32 %v5146, %v2490
        %v5149 = vadd.f32 %v5147, 1e-05
        %v5150 = vadd.f32 %v5148, 1e-05
        %v5151 = vrsqrt.pop %v5149
        %v5152 = vrsqrt.pop %v5150
        %v5153 = vmul.f32 %v5139, %v5151
        %v5154 = vmul.f32 %v5140, %v5152
        %v5156 = vlaneseq
        %v5157 = vshrl.u32 %v5156, 7
        %v5158 = vsub.s32 0, %v5157
        %v5159 = vrot.slane %v5131, %v5158
        %v5161 = vmul.f32 %v5153, %v5159
        %v5162 = vmul.f32 %v5154, %v5159
        %v5164 = vlaneseq
        %v5165 = vshrl.u32 %v5164, 7
        %v5166 = vsub.s32 0, %v5165
        %v5167 = vrot.slane %v5132, %v5166
        %v5169 = vadd.f32 %v5161, %v5167
        %v5170 = vadd.f32 %v5162, %v5167
        %5171 = vst [vmem:[#allocation2] sm:$0xff] %v5169
        %5172 = vst [vmem:[#allocation2 + $0x8] sm:$0xff] %v5170
        %p5173 = scmp.eq.s32.totalorder %s37, 1
        // Predicated region
        $region113: #{transformer_classifier.1} parent=87 // pred_check
          %p5174 = pneg %p5173
        $region114: #{transformer_classifier.1} parent=87 // pred_check_branch
          %5176 = sbr.rel (%p5174) target = $region116
        $region115: #{transformer_classifier.1} parent=87 // pred_region
          %v5177 = vadd.f32 %v5169, %v5170
          %v5178 = vmul.f32 %v5177, 0.5
          %v5179 = vld [vmem:[#allocation10] sm:$0xff]
          %v5180 = vld [vmem:[#allocation10 + $0x8] sm:$0xff]
          %v5181 = vld [vmem:[#allocation10 + $0x10] sm:$0xff]
          %v5182 = vld [vmem:[#allocation10 + $0x18] sm:$0xff]
          %v5183 = vld [vmem:[#allocation10 + $0x20] sm:$0xff]
          %v5184 = vld [vmem:[#allocation10 + $0x28] sm:$0xff]
          %v5185 = vld [vmem:[#allocation10 + $0x30] sm:$0xff]
          %v5186 = vld [vmem:[#allocation10 + $0x38] sm:$0xff]
          %v5187 = vld [vmem:[#allocation10 + $0x40] sm:$0xff]
          %v5188 = vld [vmem:[#allocation10 + $0x48] sm:$0xff]
          %v5189 = vld [vmem:[#allocation10 + $0x50] sm:$0xff]
          %v5190 = vld [vmem:[#allocation10 + $0x58] sm:$0xff]
          %v5191 = vld [vmem:[#allocation10 + $0x60] sm:$0xff]
          %v5192 = vld [vmem:[#allocation10 + $0x68] sm:$0xff]
          %v5193 = vld [vmem:[#allocation10 + $0x70] sm:$0xff]
          %v5194 = vld [vmem:[#allocation10 + $0x78] sm:$0xff]
          %v5195 = vld [vmem:[%s16] sm:$0x1]
          %v5197 = vlaneseq
          %v5198 = vshrl.u32 %v5197, 7
          %v5199 = vsub.s32 0, %v5198
          %v5200 = vrot.slane %v5195, %v5199
          %5202 = vmatprep.subr.mxu0 0.0
          %5203 = vmatpush1.msra.mxu0 %v5179
          %5204 = vmatprep.subr.mxu0 0.0
          %5205 = vmatpush1.msra.mxu0 %v5180
          %5206 = vmatprep.subr.mxu0 0.0
          %5207 = vmatpush1.msra.mxu0 %v5181
          %5208 = vmatprep.subr.mxu0 0.0
          %5209 = vmatpush1.msra.mxu0 %v5182
          %5210 = vmatprep.subr.mxu0 0.0
          %5211 = vmatpush1.msra.mxu0 %v5183
          %5212 = vmatprep.subr.mxu0 0.0
          %5213 = vmatpush1.msra.mxu0 %v5184
          %5214 = vmatprep.subr.mxu0 0.0
          %5215 = vmatpush1.msra.mxu0 %v5185
          %5216 = vmatprep.subr.mxu0 0.0
          %5217 = vmatpush1.msra.mxu0 %v5186
          %5218 = vmatprep.subr.mxu0 0.0
          %5219 = vmatpush1.msra.mxu0 %v5187
          %5220 = vmatprep.subr.mxu0 0.0
          %5221 = vmatpush1.msra.mxu0 %v5188
          %5222 = vmatprep.subr.mxu0 0.0
          %5223 = vmatpush1.msra.mxu0 %v5189
          %5224 = vmatprep.subr.mxu0 0.0
          %5225 = vmatpush1.msra.mxu0 %v5190
          %5226 = vmatprep.subr.mxu0 0.0
          %5227 = vmatpush1.msra.mxu0 %v5191
          %5228 = vmatprep.subr.mxu0 0.0
          %5229 = vmatpush1.msra.mxu0 %v5192
          %5230 = vmatprep.subr.mxu0 0.0
          %5231 = vmatpush1.msra.mxu0 %v5193
          %5232 = vmatprep.subr.mxu0 0.0
          %5233 = vmatpush1.msra.mxu0 %v5194
          %5234 = vmatprep.subr.mxu0 0.0
          %5235 = vmatpush1.msra.mxu0 0.0
          %5236 = vmatprep.subr.mxu0 0.0
          %5237 = vmatpush1.msra.mxu0 0.0
          %5238 = vmatprep.subr.mxu0 0.0
          %5239 = vmatpush1.msra.mxu0 0.0
          %5240 = vmatprep.subr.mxu0 0.0
          %5241 = vmatpush1.msra.mxu0 0.0
          %5242 = vmatprep.subr.mxu0 0.0
          %5243 = vmatpush1.msra.mxu0 0.0
          %5244 = vmatprep.subr.mxu0 0.0
          %5245 = vmatpush1.msra.mxu0 0.0
          %5246 = vmatprep.subr.mxu0 0.0
          %5247 = vmatpush1.msra.mxu0 0.0
          %5248 = vmatprep.subr.mxu0 0.0
          %5249 = vmatpush1.msra.mxu0 0.0
          %5250 = vmatprep.subr.mxu0 0.0
          %5251 = vmatpush1.msra.mxu0 0.0
          %5252 = vmatprep.subr.mxu0 0.0
          %5253 = vmatpush1.msra.mxu0 0.0
          %5254 = vmatprep.subr.mxu0 0.0
          %5255 = vmatpush1.msra.mxu0 0.0
          %5256 = vmatprep.subr.mxu0 0.0
          %5257 = vmatpush1.msra.mxu0 0.0
          %5258 = vmatprep.subr.mxu0 0.0
          %5259 = vmatpush1.msra.mxu0 0.0
          %5260 = vmatprep.subr.mxu0 0.0
          %5261 = vmatpush1.msra.mxu0 0.0
          %5262 = vmatprep.subr.mxu0 0.0
          %5263 = vmatpush1.msra.mxu0 0.0
          %5264 = vmatprep.subr.mxu0 0.0
          %5265 = vmatpush1.msra.mxu0 0.0
          %5266 = vmatprep.mubr.f32.mxu0 0.0
          %5267 = vmatmul.mubr.f32.gmra.mrb[0].mxu0 %v5178
          %v5268 = vpop.f32.mrb[0].mxu0
          %v5269 = vadd.f32 %v5200, %v5268
          %v5270 = vpop.f32.mrb[0].mxu0
          %5271 = vdwg.mxu0
          %5272 = vst [vmem:[%s17] sm:$0xff] %v5269
        $region116: #{transformer_classifier.1} parent=87 // pred_fallthru
          _
        // Predicated region
        $region117: #{transformer_classifier.1} parent=87 // pred_check
          %p5273 = pneg %p467
        $region118: #{transformer_classifier.1} parent=87 // pred_check_branch
          %5275 = sbr.rel (%p5273) target = $region120
        $region119: #{transformer_classifier.1} parent=87 // pred_region
          _
        $region120: #{transformer_classifier.1} parent=87 // pred_fallthru
          _
        // Predicated region
        $region121: #{transformer_classifier.1} parent=87 // pred_check
          %p5276 = pneg %p467
        $region122: #{transformer_classifier.1} parent=87 // pred_check_branch
          %5278 = sbr.rel (%p5276) target = $region124
        $region123: #{transformer_classifier.1} parent=87 // pred_region
          _
        $region124: #{transformer_classifier.1} parent=87 // pred_fallthru
          _
      $region88: #{transformer_classifier.1} parent=5 // pred_fallthru
        _
      %p5279 = scmp.le.s32.totalorder 2, %s32
      // Predicated region
      $region125: #{transformer_classifier.1} parent=5 // pred_check
        %p5280 = pneg %p5279
      $region126: #{transformer_classifier.1} parent=5 // pred_check_branch
        %5282 = sbr.rel (%p5280) target = $region128
      $region127: #{transformer_classifier.1} parent=5 // pred_region
        %s5283 = ssub.s32 %s32, 2
      $region128: #{transformer_classifier.1} parent=5 // pred_fallthru
        _
    $region6: #{transformer_classifier.1} parent=1 // loop_footer
      %s36 = sadd.s32 1, %s32
    $region7: #{transformer_classifier.1} parent=1 // loop_footer_branch
      %31 = sbr.rel target = $region3
    $region8: #{transformer_classifier.1} parent=1 // loop_exit
      _
    %5284 = vsyncpa [#allocation4], 1
    %s5285 = scalar_lea.sflag [#allocation4], 1
    %5286 = vsyncpa %s5285, 1
    %5287 = vsyncpa [#allocation6], 1
    %s5288 = scalar_lea.sflag [#allocation6], 1
    %5289 = vsyncpa %s5288, 1
    %5290 = vsyncpa [#allocation9], 1
    %s5291 = scalar_lea.sflag [#allocation9], 1
    %5292 = vsyncpa %s5291, 1

</llo_original>
